<compile_context>
chip_gen: v6e
topology: v6e:2x2x1
jax: 0.10.0
libtpu: 0.0.40
codegen_flags: <defaults>
</compile_context>

<pallas_src>
import jax
import jax.numpy as jnp
from jax import lax
from jax.experimental import pallas as pl
from jax.experimental.pallas import tpu as pltpu


RS1 = 8   # conv1 output rows processed per strip
RS2 = 8   # conv2 output rows processed per strip


# ----------------------------- Fused Pallas kernel -----------------------------


def cnn_fused_kernel(p1_ref, w1_ref, b1_ref, w2_ref, b2_ref, o_ref, x2p_s):
    """Conv blocks for ONE image (grid runs over the batch).

    p1_ref : (1, H*W, 9*Cin)   bf16  im2col'd (3x3, pad=1) conv1 input
    w1_ref : (9*Cin, C1)       bf16  conv1 weight, rows ordered (ky, kx, cin)
    b1_ref : (1, C1)           f32
    w2_ref : (3, 3*C1, C2)     bf16  conv2 weight per ky; row = kx*C1 + cin
    b2_ref : (1, C2)           f32
    o_ref  : (1, H2*W2, C2)    bf16  pooled conv2 activation, NHWC flatten order
    x2p_s  : (H1+2, W1, 3*C1)  bf16  kx-packed, zero-padded pooled conv1 activation
    """
    f32 = jnp.float32
    bf16 = jnp.bfloat16

    H1 = x2p_s.shape[0] - 2
    W1 = x2p_s.shape[1]
    H, W = 2 * H1, 2 * W1
    W2 = W1 // 2
    C1 = w1_ref.shape[1]
    C2 = w2_ref.shape[2]

    # Only the two halo rows need zeroing; the interior (including the kx column
    # pads) is fully rewritten by stage 1 every grid step, so this stays correct
    # under megacore partitioning at minimal store cost.
    x2p_s[0, :, :] = jnp.zeros((W1, 3 * C1), bf16)
    x2p_s[H1 + 1, :, :] = jnp.zeros((W1, 3 * C1), bf16)

    nrow1 = RS1 // 2
    nrow2 = RS2 // 2

    # ---- Stage 1: conv1 as one K=9*Cin im2col matmul per row-strip, bias + ReLU
    #      + 2x2/2 maxpool.  The three kx shifts (with their zero pad columns) are
    #      packed into one (nrow1, W1, 3*C1) value and stored with a single
    #      full-width, sublane-aligned store per strip.
    @pl.loop(0, H // RS1)
    def _stage1(t):
        px0 = pl.multiple_of(t * (RS1 * W), RS1 * W)
        pat = p1_ref[0, pl.ds(px0, RS1 * W), :]                       # (RS1*W, 9*Cin)
        acc = jnp.dot(pat, w1_ref[...], preferred_element_type=f32)   # (RS1*W, C1)
        z = jnp.maximum(acc + b1_ref[...], 0.0)
        z = z.reshape(nrow1, 2, W1, 2, C1)
        ps = jnp.max(jnp.max(z, axis=3), axis=1)                      # (nrow1, W1, C1)
        zc = jnp.zeros((nrow1, 1, C1), f32)
        left = jnp.concatenate([zc, ps[:, :W1 - 1, :]], axis=1)       # kx = 0 view
        right = jnp.concatenate([ps[:, 1:, :], zc], axis=1)           # kx = 2 view
        packed = jnp.concatenate([left, ps, right], axis=-1).astype(bf16)
        x2p_s[pl.ds(t * nrow1 + 1, nrow1), :, :] = packed

    # ---- Stage 2: conv2 as 3 matmuls per row-strip with K = 3*C1 (kx, cin packed
    #      on lanes, no zero padding), bias + ReLU + 2x2/2 maxpool.  One aligned
    #      (nrow2*W2, C2) store per strip into the NHWC-flattened output block.
    @pl.loop(0, H1 // RS2)
    def _stage2(s):
        r0 = s * RS2
        acc = jnp.zeros((RS2 * W1, C2), f32)
        for ky in range(3):                                           # 3 taps, unrolled
            pat = x2p_s[pl.ds(r0 + ky, RS2), :, :].reshape(RS2 * W1, 3 * C1)
            acc = acc + jnp.dot(pat, w2_ref[ky], preferred_element_type=f32)
        z = jnp.maximum(acc + b2_ref[...], 0.0)                       # (RS2*W1, C2)
        z = z.reshape(nrow2, 2, W2, 2, C2)
        pooled = jnp.max(jnp.max(z, axis=3), axis=1)                  # (nrow2, W2, C2)
        pooled = pooled.reshape(nrow2 * W2, C2).astype(o_ref.dtype)
        base = pl.multiple_of(s * (nrow2 * W2), nrow2 * W2)
        o_ref[0, pl.ds(base, nrow2 * W2), :] = pooled


# ------------------------------ Host-side helpers -------------------------------


def _im2col3x3(x_nhwc):
    """(N, H, W, C) -> (N, H*W, 9*C); 3x3 window, pad=1; columns ordered (ky, kx, c)."""
    N, H, W, C = x_nhwc.shape
    xp = jnp.pad(x_nhwc, ((0, 0), (1, 1), (1, 1), (0, 0)))
    cols = [xp[:, ky:ky + H, kx:kx + W, :] for ky in range(3) for kx in range(3)]
    return jnp.concatenate(cols, axis=-1).reshape(N, H * W, 9 * C)


def prepare_params(params, input_hw):
    """One-time repack of the PyTorch-style parameters into kernel layout (bf16)."""
    bf16 = jnp.bfloat16
    H, W = input_hw
    w1, w2 = params["w1"], params["w2"]          # HWIO: (3,3,Cin,C1), (3,3,C1,C2)
    Cin, C1 = w1.shape[2], w1.shape[3]
    C2 = w2.shape[3]
    assert w2.shape[2] == C1 and C2 % 128 == 0

    w1r = w1.reshape(9 * Cin, C1).astype(bf16)
    w2p = w2.reshape(3, 3 * C1, C2).astype(bf16)           # rows = kx*C1 + cin, no padding
    b1 = params["b1"].reshape(1, C1).astype(jnp.float32)
    b2 = params["b2"].reshape(1, C2).astype(jnp.float32)

    # Linear weight rows permuted once from torch NCHW-flatten order to the
    # kernel's NHWC-flatten order (H2/W2 taken from the input size: non-square OK).
    H2, W2 = H // 4, W // 4
    wl = params["wl"]                                      # (F, ncls) == torch weight.T
    F, ncls = wl.shape
    assert F == H2 * W2 * C2
    wl_nhwc = wl.reshape(C2, H2, W2, ncls).transpose(1, 2, 0, 3).reshape(F, ncls)

    return dict(w1r=w1r, b1=b1, w2p=w2p, b2=b2,
                wl=wl_nhwc.astype(bf16), bl=params["bl"].astype(jnp.float32))


def cnn_forward(x_nchw, kp):
    """Forward pass matching the PyTorch CNN module.  Input is NCHW (torch layout)."""
    N, Cin, H, W = x_nchw.shape
    C1 = kp["w1r"].shape[1]
    C2 = kp["b2"].shape[1]
    assert H % RS1 == 0 and H % (2 * RS2) == 0 and W % 4 == 0
    H1, W1 = H // 2, W // 2
    H2, W2 = H1 // 2, W1 // 2

    x_nhwc = jnp.transpose(x_nchw, (0, 2, 3, 1)).astype(jnp.bfloat16)
    p1 = _im2col3x3(x_nhwc)                                           # (N, H*W, 9*Cin)

    # Explicit VMEM budget (lane/sublane padded, double-buffered) + cost estimate.
    def rup(v, m):
        return (v + m - 1) // m * m

    vmem_bytes = (
        2 * H * W * rup(9 * Cin, 128) * 2                 # p1 block (double-buffered)
        + 2 * rup(9 * Cin, 16) * rup(C1, 128) * 2         # w1
        + 2 * 8 * rup(C1, 128) * 4                        # b1
        + 2 * 3 * rup(3 * C1, 16) * rup(C2, 128) * 2      # w2
        + 2 * 8 * rup(C2, 128) * 4                        # b2
        + 2 * rup(H2 * W2, 16) * rup(C2, 128) * 2         # output block
        + (H1 + 2) * rup(W1, 16) * rup(3 * C1, 128) * 2   # x2p scratch
    )
    vmem_limit = int(min(vmem_bytes + (8 << 20), 96 << 20))
    flops = 2 * N * (H * W * 9 * Cin * C1 + H1 * W1 * 9 * C1 * C2)
    bytes_accessed = int(N * (H * W * 9 * Cin + H2 * W2 * C2) * 2
                         + (9 * Cin * C1 + 9 * C1 * C2) * 2 + (C1 + C2) * 4)

    # TODO(synk): for 224x224 on v7x, block the p1 pixel dimension (or build the
    # im2col in-kernel) so the lane-padded im2col block fits the 64 MiB/TC VMEM.
    a2f = pl.pallas_call(
        cnn_fused_kernel,
        out_shape=jax.ShapeDtypeStruct((N, H2 * W2, C2), jnp.bfloat16),
        grid=(N,),
        in_specs=[
            pl.BlockSpec((1, H * W, 9 * Cin), lambda n: (n, 0, 0)),
            pl.BlockSpec((9 * Cin, C1), lambda n: (0, 0)),
            pl.BlockSpec((1, C1), lambda n: (0, 0)),
            pl.BlockSpec((3, 3 * C1, C2), lambda n: (0, 0, 0)),
            pl.BlockSpec((1, C2), lambda n: (0, 0)),
        ],
        out_specs=pl.BlockSpec((1, H2 * W2, C2), lambda n: (n, 0, 0)),
        scratch_shapes=[pltpu.VMEM((H1 + 2, W1, 3 * C1), jnp.bfloat16)],
        compiler_params=pltpu.CompilerParams(
            dimension_semantics=("parallel",),
            vmem_limit_bytes=vmem_limit),
        cost_estimate=pl.CostEstimate(
            flops=flops, transcendentals=0, bytes_accessed=bytes_accessed),
    )(p1, kp["w1r"], kp["b1"], kp["w2p"], kp["b2"])

    # Classifier hoisted out of the kernel: one batched matmul over the whole batch
    # (wl rows already in NHWC flatten order), f32 accumulation.
    logits = jnp.dot(a2f.reshape(N, H2 * W2 * C2), kp["wl"],
                     preferred_element_type=jnp.float32) + kp["bl"]
    return logits


# ------------------------------ Pure-JAX reference -------------------------------


def ref_forward(x_nchw, params):
    # Kernel uses bf16 operands with f32 accumulation; reference rounds inputs and
    # weights to bf16 and computes in f32.
    rnd = lambda a: a.astype(jnp.bfloat16).astype(jnp.float32)

    def conv_block(x, w_hwio, b):
        w_oihw = jnp.transpose(rnd(w_hwio), (3, 2, 0, 1))
        y = lax.conv_general_dilated(
            x, w_oihw, window_strides=(1, 1), padding="SAME",
            dimension_numbers=("NCHW", "OIHW", "NCHW"))
        y = jnp.maximum(y + b.reshape(1, -1, 1, 1), 0.0)
        return lax.reduce_window(y, -jnp.inf, lax.max,
                                 (1, 1, 2, 2), (1, 1, 2, 2), "VALID")

    y = conv_block(rnd(x_nchw), params["w1"], params["b1"])
    y = conv_block(y, params["w2"], params["b2"])
    flat = y.reshape(y.shape[0], -1)
    return flat @ rnd(params["wl"]) + params["bl"]


# ------------------------------------ Main ---------------------------------------


if __name__ == "__main__":
    # Small shapes consistent with the module (scaled down from 3x224x224).
    N, Cin, Hin, Win = 2, 3, 32, 32
    num_classes = 10
    F = 128 * (Hin // 4) * (Win // 4)                                 # 128 * 8 * 8

    key = jax.random.PRNGKey(0)
    k0, k1, k2, k3, k4, k5, k6 = jax.random.split(key, 7)

    x = jax.random.normal(k0, (N, Cin, Hin, Win), jnp.float32)

    params = {
        # Conv2d(3, 64, 3, padding=1): weight stored HWIO.
        "w1": (1.0 / (3.0 * Cin) ** 0.5)
        * jax.random.normal(k1, (3, 3, Cin, 64), jnp.float32),
        "b1": 0.01 * jax.random.normal(k2, (64,), jnp.float32),
        # Conv2d(64, 128, 3, padding=1)
        "w2": (1.0 / (3.0 * 64.0) ** 0.5)
        * jax.random.normal(k3, (3, 3, 64, 128), jnp.float32),
        "b2": 0.01 * jax.random.normal(k4, (128,), jnp.float32),
        # Linear(128*8*8, num_classes): weight stored (F, C) == torch weight.T
        "wl": (1.0 / F ** 0.5)
        * jax.random.normal(k5, (F, num_classes), jnp.float32),
        "bl": 0.01 * jax.random.normal(k6, (num_classes,), jnp.float32),
    }

    kp = prepare_params(params, (Hin, Win))                           # one-time repack
    fwd = jax.jit(cnn_forward)
    out = jax.block_until_ready(fwd(x, kp))
    ref = jax.block_until_ready(ref_forward(x, params))

    assert out.shape == (N, num_classes), out.shape
    assert jnp.allclose(out, ref, rtol=5e-2, atol=5e-2), (
        "mismatch vs reference", float(jnp.max(jnp.abs(out - ref))))

    print("KERNEL_OK")
</pallas_src>

<mosaic_0001>
module attributes {stable_mosaic.version = 11 : i64} {
  func.func @cnn_fused_kernel(%arg0: i32, %arg1: memref<1x1024x27xbf16, #tpu.memory_space<vmem>>, %arg2: memref<27x64xbf16, #tpu.memory_space<vmem>>, %arg3: memref<1x64xf32, #tpu.memory_space<vmem>>, %arg4: memref<3x192x128xbf16, #tpu.memory_space<vmem>>, %arg5: memref<1x128xf32, #tpu.memory_space<vmem>>, %arg6: memref<1x64x128xbf16, #tpu.memory_space<vmem>>, %arg7: memref<18x16x192xbf16, #tpu.memory_space<vmem>>) attributes {dimension_semantics = [#tpu.dimension_semantics<parallel>], iteration_bounds = array<i64: 2>, scalar_prefetch = 0 : i64, scratch_operands = 1 : i64, tpu.core_type = #tpu.core_type<tc>, window_params = [{transform_indices = @transform_0, window_bounds = array<i64: 1, 1024, 27>}, {pipeline_mode = #tpu.pipeline_mode<synchronous>, transform_indices = @transform_1, window_bounds = array<i64: 27, 64>}, {pipeline_mode = #tpu.pipeline_mode<synchronous>, transform_indices = @transform_2, window_bounds = array<i64: 1, 64>}, {pipeline_mode = #tpu.pipeline_mode<synchronous>, transform_indices = @transform_3, window_bounds = array<i64: 3, 192, 128>}, {pipeline_mode = #tpu.pipeline_mode<synchronous>, transform_indices = @transform_4, window_bounds = array<i64: 1, 128>}, {transform_indices = @transform_5, window_bounds = array<i64: 1, 64, 128>}]} {
    %cst = arith.constant 0.000000e+00 : bf16
    %0 = vector.broadcast %cst : bf16 to vector<16x192xbf16>
    %c0 = arith.constant 0 : index
    %c0_0 = arith.constant 0 : index
    %c0_1 = arith.constant 0 : index
    %1 = vector.load %arg7[%c0, %c0_0, %c0_1] : memref<18x16x192xbf16, #tpu.memory_space<vmem>>, vector<1x16x192xbf16>
    %2 = vector.shape_cast %1 : vector<1x16x192xbf16> to vector<16x192xbf16>
    %3 = vector.shape_cast %0 : vector<16x192xbf16> to vector<1x16x192xbf16>
    tpu.vector_store %arg7[%c0, %c0_0, %c0_1], %3 {strides = array<i32>} : memref<18x16x192xbf16, #tpu.memory_space<vmem>>, vector<1x16x192xbf16>,
    %cst_2 = arith.constant 0.000000e+00 : bf16
    %4 = vector.broadcast %cst_2 : bf16 to vector<16x192xbf16>
    %c17 = arith.constant 17 : index
    %c0_3 = arith.constant 0 : index
    %c0_4 = arith.constant 0 : index
    %5 = vector.load %arg7[%c17, %c0_3, %c0_4] : memref<18x16x192xbf16, #tpu.memory_space<vmem>>, vector<1x16x192xbf16>
    %6 = vector.shape_cast %5 : vector<1x16x192xbf16> to vector<16x192xbf16>
    %7 = vector.shape_cast %4 : vector<16x192xbf16> to vector<1x16x192xbf16>
    tpu.vector_store %arg7[%c17, %c0_3, %c0_4], %7 {strides = array<i32>} : memref<18x16x192xbf16, #tpu.memory_space<vmem>>, vector<1x16x192xbf16>,
    %c0_i32 = arith.constant 0 : i32
    %c4_i32 = arith.constant 4 : i32
    %8 = arith.addi %c0_i32, %c4_i32 : i32
    %c1_i32 = arith.constant 1 : i32
    scf.for %arg8 = %c0_i32 to %8 step %c1_i32  : i32 {
      %c1_i32_9 = arith.constant 1 : i32
      %10 = arith.muli %arg8, %c1_i32_9 : i32
      %c0_i32_10 = arith.constant 0 : i32
      %11 = arith.addi %c0_i32_10, %10 : i32
      %c256_i32 = arith.constant 256 : i32
      %12 = arith.muli %11, %c256_i32 : i32
      %13 = tpu.assume_multiple %12, 256 : i32
      %c0_11 = arith.constant 0 : index
      %14 = arith.index_cast %13 : i32 to index
      %c0_12 = arith.constant 0 : index
      %15 = vector.load %arg1[%c0_11, %14, %c0_12] : memref<1x1024x27xbf16, #tpu.memory_space<vmem>>, vector<1x256x27xbf16>
      %16 = vector.shape_cast %15 : vector<1x256x27xbf16> to vector<256x27xbf16>
      %c0_13 = arith.constant 0 : index
      %c0_14 = arith.constant 0 : index
      %17 = vector.load %arg2[%c0_13, %c0_14] : memref<27x64xbf16, #tpu.memory_space<vmem>>, vector<27x64xbf16>
      %cst_15 = arith.constant dense<0.000000e+00> : vector<256x64xf32>
      %18 = tpu.matmul %16, %17, %cst_15 {dimension_numbers = #tpu.dot_dimension_numbers<[1], [0], [0], [1], [0, 0, 1, 1], [], []>} : vector<256x27xbf16>, vector<27x64xbf16>, vector<256x64xf32> -> vector<256x64xf32>
      %c0_16 = arith.constant 0 : index
      %c0_17 = arith.constant 0 : index
      %19 = vector.load %arg3[%c0_16, %c0_17] : memref<1x64xf32, #tpu.memory_space<vmem>>, vector<1x64xf32>
      %20 = vector.broadcast %19 : vector<1x64xf32> to vector<256x64xf32>
      %21 = arith.addf %18, %20 : vector<256x64xf32>
      %cst_18 = arith.constant 0.000000e+00 : f32
      %22 = vector.broadcast %cst_18 : f32 to vector<256x64xf32>
      %23 = arith.maximumf %21, %22 : vector<256x64xf32>
      %24 = vector.shape_cast %23 : vector<256x64xf32> to vector<4x2x16x2x64xf32>
      %cst_19 = arith.constant dense<0xFF800000> : vector<4x2x16x64xf32>
      %25 = vector.multi_reduction <maximumf>, %24, %cst_19 [3] : vector<4x2x16x2x64xf32> to vector<4x2x16x64xf32>
      %cst_20 = arith.constant dense<0xFF800000> : vector<4x16x64xf32>
      %26 = vector.multi_reduction <maximumf>, %25, %cst_20 [1] : vector<4x2x16x64xf32> to vector<4x16x64xf32>
      %cst_21 = arith.constant 0.000000e+00 : f32
      %27 = vector.broadcast %cst_21 : f32 to vector<4x1x64xf32>
      %28 = vector.extract_strided_slice %26 {offsets = [0, 0, 0], sizes = [4, 15, 64], strides = [1, 1, 1]} : vector<4x16x64xf32> to vector<4x15x64xf32>
      %29 = tpu.concatenate %27, %28 in 1 : vector<4x1x64xf32>, vector<4x15x64xf32> -> vector<4x16x64xf32>
      %30 = vector.extract_strided_slice %26 {offsets = [0, 1, 0], sizes = [4, 15, 64], strides = [1, 1, 1]} : vector<4x16x64xf32> to vector<4x15x64xf32>
      %31 = tpu.concatenate %30, %27 in 1 : vector<4x15x64xf32>, vector<4x1x64xf32> -> vector<4x16x64xf32>
      %32 = tpu.concatenate %29, %26, %31 in 2 : vector<4x16x64xf32>, vector<4x16x64xf32>, vector<4x16x64xf32> -> vector<4x16x192xf32>
      %33 = arith.truncf %32 : vector<4x16x192xf32> to vector<4x16x192xbf16>
      %c4_i32_22 = arith.constant 4 : i32
      %34 = arith.muli %11, %c4_i32_22 : i32
      %c1_i32_23 = arith.constant 1 : i32
      %35 = arith.addi %34, %c1_i32_23 : i32
      %36 = arith.index_cast %35 : i32 to index
      %c0_24 = arith.constant 0 : index
      %c0_25 = arith.constant 0 : index
      %37 = vector.load %arg7[%36, %c0_24, %c0_25] : memref<18x16x192xbf16, #tpu.memory_space<vmem>>, vector<4x16x192xbf16>
      tpu.vector_store %arg7[%36, %c0_24, %c0_25], %33 {strides = array<i32>} : memref<18x16x192xbf16, #tpu.memory_space<vmem>>, vector<4x16x192xbf16>,
    }
    %c4_i32_5 = arith.constant 4 : i32
    %c0_i32_6 = arith.constant 0 : i32
    %c2_i32 = arith.constant 2 : i32
    %9 = arith.addi %c0_i32_6, %c2_i32 : i32
    %c1_i32_7 = arith.constant 1 : i32
    scf.for %arg8 = %c0_i32_6 to %9 step %c1_i32_7  : i32 {
      %c1_i32_9 = arith.constant 1 : i32
      %10 = arith.muli %arg8, %c1_i32_9 : i32
      %c0_i32_10 = arith.constant 0 : i32
      %11 = arith.addi %c0_i32_10, %10 : i32
      %c8_i32 = arith.constant 8 : i32
      %12 = arith.muli %11, %c8_i32 : i32
      %cst_11 = arith.constant 0.000000e+00 : f32
      %13 = vector.broadcast %cst_11 : f32 to vector<128x128xf32>
      %c0_i32_12 = arith.constant 0 : i32
      %14 = arith.addi %12, %c0_i32_12 : i32
      %15 = arith.index_cast %14 : i32 to index
      %c0_13 = arith.constant 0 : index
      %c0_14 = arith.constant 0 : index
      %16 = vector.load %arg7[%15, %c0_13, %c0_14] : memref<18x16x192xbf16, #tpu.memory_space<vmem>>, vector<8x16x192xbf16>
      %17 = vector.shape_cast %16 : vector<8x16x192xbf16> to vector<128x192xbf16>
      %c0_15 = arith.constant 0 : index
      %c0_16 = arith.constant 0 : index
      %c0_17 = arith.constant 0 : index
      %18 = vector.load %arg4[%c0_15, %c0_16, %c0_17] : memref<3x192x128xbf16, #tpu.memory_space<vmem>>, vector<1x192x128xbf16>
      %19 = vector.shape_cast %18 : vector<1x192x128xbf16> to vector<192x128xbf16>
      %cst_18 = arith.constant dense<0.000000e+00> : vector<128x128xf32>
      %20 = tpu.matmul %17, %19, %cst_18 {dimension_numbers = #tpu.dot_dimension_numbers<[1], [0], [0], [1], [0, 0, 1, 1], [], []>} : vector<128x192xbf16>, vector<192x128xbf16>, vector<128x128xf32> -> vector<128x128xf32>
      %21 = arith.addf %13, %20 : vector<128x128xf32>
      %c1_i32_19 = arith.constant 1 : i32
      %22 = arith.addi %12, %c1_i32_19 : i32
      %23 = arith.index_cast %22 : i32 to index
      %c0_20 = arith.constant 0 : index
      %c0_21 = arith.constant 0 : index
      %24 = vector.load %arg7[%23, %c0_20, %c0_21] : memref<18x16x192xbf16, #tpu.memory_space<vmem>>, vector<8x16x192xbf16>
      %25 = vector.shape_cast %24 : vector<8x16x192xbf16> to vector<128x192xbf16>
      %c1 = arith.constant 1 : index
      %c0_22 = arith.constant 0 : index
      %c0_23 = arith.constant 0 : index
      %26 = vector.load %arg4[%c1, %c0_22, %c0_23] : memref<3x192x128xbf16, #tpu.memory_space<vmem>>, vector<1x192x128xbf16>
      %27 = vector.shape_cast %26 : vector<1x192x128xbf16> to vector<192x128xbf16>
      %cst_24 = arith.constant dense<0.000000e+00> : vector<128x128xf32>
      %28 = tpu.matmul %25, %27, %cst_24 {dimension_numbers = #tpu.dot_dimension_numbers<[1], [0], [0], [1], [0, 0, 1, 1], [], []>} : vector<128x192xbf16>, vector<192x128xbf16>, vector<128x128xf32> -> vector<128x128xf32>
      %29 = arith.addf %21, %28 : vector<128x128xf32>
      %c2_i32_25 = arith.constant 2 : i32
      %30 = arith.addi %12, %c2_i32_25 : i32
      %31 = arith.index_cast %30 : i32 to index
      %c0_26 = arith.constant 0 : index
      %c0_27 = arith.constant 0 : index
      %32 = vector.load %arg7[%31, %c0_26, %c0_27] : memref<18x16x192xbf16, #tpu.memory_space<vmem>>, vector<8x16x192xbf16>
      %33 = vector.shape_cast %32 : vector<8x16x192xbf16> to vector<128x192xbf16>
      %c2 = arith.constant 2 : index
      %c0_28 = arith.constant 0 : index
      %c0_29 = arith.constant 0 : index
      %34 = vector.load %arg4[%c2, %c0_28, %c0_29] : memref<3x192x128xbf16, #tpu.memory_space<vmem>>, vector<1x192x128xbf16>
      %35 = vector.shape_cast %34 : vector<1x192x128xbf16> to vector<192x128xbf16>
      %cst_30 = arith.constant dense<0.000000e+00> : vector<128x128xf32>
      %36 = tpu.matmul %33, %35, %cst_30 {dimension_numbers = #tpu.dot_dimension_numbers<[1], [0], [0], [1], [0, 0, 1, 1], [], []>} : vector<128x192xbf16>, vector<192x128xbf16>, vector<128x128xf32> -> vector<128x128xf32>
      %37 = arith.addf %29, %36 : vector<128x128xf32>
      %c0_31 = arith.constant 0 : index
      %c0_32 = arith.constant 0 : index
      %38 = vector.load %arg5[%c0_31, %c0_32] : memref<1x128xf32, #tpu.memory_space<vmem>>, vector<1x128xf32>
      %39 = vector.broadcast %38 : vector<1x128xf32> to vector<128x128xf32>
      %40 = arith.addf %37, %39 : vector<128x128xf32>
      %cst_33 = arith.constant 0.000000e+00 : f32
      %41 = vector.broadcast %cst_33 : f32 to vector<128x128xf32>
      %42 = arith.maximumf %40, %41 : vector<128x128xf32>
      %43 = vector.shape_cast %42 : vector<128x128xf32> to vector<4x2x8x2x128xf32>
      %cst_34 = arith.constant dense<0xFF800000> : vector<4x2x8x128xf32>
      %44 = vector.multi_reduction <maximumf>, %43, %cst_34 [3] : vector<4x2x8x2x128xf32> to vector<4x2x8x128xf32>
      %cst_35 = arith.constant dense<0xFF800000> : vector<4x8x128xf32>
      %45 = vector.multi_reduction <maximumf>, %44, %cst_35 [1] : vector<4x2x8x128xf32> to vector<4x8x128xf32>
      %46 = vector.shape_cast %45 : vector<4x8x128xf32> to vector<32x128xf32>
      %47 = arith.truncf %46 : vector<32x128xf32> to vector<32x128xbf16>
      %c32_i32 = arith.constant 32 : i32
      %48 = arith.muli %11, %c32_i32 : i32
      %49 = tpu.assume_multiple %48, 32 : i32
      %c0_36 = arith.constant 0 : index
      %50 = arith.index_cast %49 : i32 to index
      %c0_37 = arith.constant 0 : index
      %51 = vector.load %arg6[%c0_36, %50, %c0_37] : memref<1x64x128xbf16, #tpu.memory_space<vmem>>, vector<1x32x128xbf16>
      %52 = vector.shape_cast %51 : vector<1x32x128xbf16> to vector<32x128xbf16>
      %53 = vector.shape_cast %47 : vector<32x128xbf16> to vector<1x32x128xbf16>
      tpu.vector_store %arg6[%c0_36, %50, %c0_37], %53 {strides = array<i32>} : memref<1x64x128xbf16, #tpu.memory_space<vmem>>, vector<1x32x128xbf16>,
    }
    %c2_i32_8 = arith.constant 2 : i32
    return
  }
  func.func @transform_0(%arg0: i32) -> (i32, i32, i32) {
    %c0_i32 = arith.constant 0 : i32
    %c0_i32_0 = arith.constant 0 : i32
    %c0_i32_1 = arith.constant 0 : i32
    return %arg0, %c0_i32, %c0_i32_0 : i32, i32, i32
  }
  func.func @transform_1(%arg0: i32) -> (i32, i32) {
    %c0_i32 = arith.constant 0 : i32
    %c0_i32_0 = arith.constant 0 : i32
    %c0_i32_1 = arith.constant 0 : i32
    return %c0_i32, %c0_i32_0 : i32, i32
  }
  func.func @transform_2(%arg0: i32) -> (i32, i32) {
    %c0_i32 = arith.constant 0 : i32
    %c0_i32_0 = arith.constant 0 : i32
    %c0_i32_1 = arith.constant 0 : i32
    return %c0_i32, %c0_i32_0 : i32, i32
  }
  func.func @transform_3(%arg0: i32) -> (i32, i32, i32) {
    %c0_i32 = arith.constant 0 : i32
    %c0_i32_0 = arith.constant 0 : i32
    %c0_i32_1 = arith.constant 0 : i32
    %c0_i32_2 = arith.constant 0 : i32
    return %c0_i32, %c0_i32_0, %c0_i32_1 : i32, i32, i32
  }
  func.func @transform_4(%arg0: i32) -> (i32, i32) {
    %c0_i32 = arith.constant 0 : i32
    %c0_i32_0 = arith.constant 0 : i32
    %c0_i32_1 = arith.constant 0 : i32
    return %c0_i32, %c0_i32_0 : i32, i32
  }
  func.func @transform_5(%arg0: i32) -> (i32, i32, i32) {
    %c0_i32 = arith.constant 0 : i32
    %c0_i32_0 = arith.constant 0 : i32
    %c0_i32_1 = arith.constant 0 : i32
    return %arg0, %c0_i32, %c0_i32_0 : i32, i32, i32
  }
}

</mosaic_0001>

<llo_original>
// kernel: cnn_forward.1
$region0: #{cnn_forward.1}
  #allocation0 [shape = 'u32[]', space=smem, size = 0x4, offset = 0x4, fixed_abs, tag = 'smem constant byte address 0x4 - core index']
  #allocation1 [shape = 'u32[144,128]{1,0:T(1,128)}', space=vmem, size = 0x12000, scoped, tag = 'internal scratch']
  #allocation2 [shape = 'bf16[18,16,192]{2,1,0:T(8,128)(2,1)}', space=vmem, size = 0x24000, scoped, tag = 'scratch operand']
  %s0 = inlined_call_operand.vmem [shape: bf16[2,1024,27], index: 0, kind: input, shape index: {}]
  %s1 = inlined_call_operand.vmem [shape: bf16[27,64], index: 1, kind: input, shape index: {}]
  %s2 = inlined_call_operand.vmem [shape: f32[1,64], index: 2, kind: input, shape index: {}]
  %s3 = inlined_call_operand.vmem [shape: bf16[3,192,128], index: 3, kind: input, shape index: {}]
  %s4 = inlined_call_operand.vmem [shape: f32[1,128], index: 4, kind: input, shape index: {}]
  %s5 = inlined_call_operand.vmem [shape: bf16[2,64,128], index: 5, kind: output, shape index: {}]
  %s6 = sld [smem:[#allocation0]]
  $region67: #{cnn_forward.1} parent=0
    _
  %s8 = ssub.s32 1, %s6
  %s9 = scalar_select 0, %s8, %s6
  loop: start=0, step=1, limit=4
  $region2: #{cnn_forward.1} parent=0 // loop_pre_header
    _
  $region3: #{cnn_forward.1} parent=0 // loop_header
    %s11 = sphi 0, %s15
    %p12 = scmp.ge.s32.totalorder %s11, 4
    %s21 = sphi 0, %s23
    %s24 = sphi 0, %s21
    %s25 = sphi 0, %s24
    %s41 = sphi 0, %s25
    %s45 = sphi 0, %s45
    %s47 = sphi 0, %s45
    %s48 = sphi 0, %s47
    %s62 = sphi 0, %s48
    %s66 = sphi 0, %s66
    %s68 = sphi 0, %s66
    %s69 = sphi 0, %s68
    %s83 = sphi 0, %s69
    %s87 = sphi 0, %s87
    %s89 = sphi 0, %s87
    %s90 = sphi 0, %s89
    %s104 = sphi 0, %s90
    %s108 = sphi 0, %s108
    %s110 = sphi 0, %s108
    %s111 = sphi 0, %s110
    %s125 = sphi 0, %s111
    %s131 = sphi 0, %s133
    %s134 = sphi 0, %s131
    %s135 = sphi 0, %s134
    %s151 = sphi 0, %s135
  $region4: #{cnn_forward.1} parent=0 // loop_header_branch
    %14 = sbr.rel (%p12) target = $region8
  $region5: #{cnn_forward.1} parent=0 // loop_body
    %s16 = ssub.s32 %s11, 1
    %s17 = ssub.s32 %s11, 2
    %s18 = sadd.s32 %s11, 1
    %s19 = ssub.s32 %s11, %s18
    %p20 = scmp.eq.s32.totalorder %s19, 0
    %s22 = sadd.s32 %s21, 1
    %s23 = scalar_select %p20, %s21, %s22
    %p26 = pneg %p20
    %p27 = scmp.eq.s32.totalorder %s11, 1
    %p28 = por %p26, %p27
    %p29 = scmp.ne.s32.totalorder %s21, %s24
    %p30 = scmp.eq.s32.totalorder %s11, 0
    %p31 = por %p29, %p30
    %p32 = scmp.ne.s32.totalorder %s21, %s24
    %p33 = scmp.eq.s32.totalorder %s16, 1
    %p34 = por %p32, %p33
    %p35 = scmp.ne.s32.totalorder %s24, %s25
    %p36 = scmp.eq.s32.totalorder %s16, 0
    %p37 = por %p35, %p36
    %p38 = scmp.ne.s32.totalorder %s24, %s25
    %p39 = scmp.eq.s32.totalorder %s17, 1
    %p40 = por %p38, %p39
    %p42 = scmp.ne.s32.totalorder %s25, %s41
    %p43 = scmp.eq.s32.totalorder %s17, 0
    %p44 = por %p42, %p43
    %s46 = sadd.s32 %s45, 1
    %p49 = scmp.eq.s32.totalorder %s11, 1
    %p50 = scmp.ne.s32.totalorder %s45, %s47
    %p51 = scmp.eq.s32.totalorder %s11, 0
    %p52 = por %p50, %p51
    %p53 = scmp.ne.s32.totalorder %s45, %s47
    %p54 = scmp.eq.s32.totalorder %s16, 1
    %p55 = por %p53, %p54
    %p56 = scmp.ne.s32.totalorder %s47, %s48
    %p57 = scmp.eq.s32.totalorder %s16, 0
    %p58 = por %p56, %p57
    %p59 = scmp.ne.s32.totalorder %s47, %s48
    %p60 = scmp.eq.s32.totalorder %s17, 1
    %p61 = por %p59, %p60
    %p63 = scmp.ne.s32.totalorder %s48, %s62
    %p64 = scmp.eq.s32.totalorder %s17, 0
    %p65 = por %p63, %p64
    %s67 = sadd.s32 %s66, 1
    %p70 = scmp.eq.s32.totalorder %s11, 1
    %p71 = scmp.ne.s32.totalorder %s66, %s68
    %p72 = scmp.eq.s32.totalorder %s11, 0
    %p73 = por %p71, %p72
    %p74 = scmp.ne.s32.totalorder %s66, %s68
    %p75 = scmp.eq.s32.totalorder %s16, 1
    %p76 = por %p74, %p75
    %p77 = scmp.ne.s32.totalorder %s68, %s69
    %p78 = scmp.eq.s32.totalorder %s16, 0
    %p79 = por %p77, %p78
    %p80 = scmp.ne.s32.totalorder %s68, %s69
    %p81 = scmp.eq.s32.totalorder %s17, 1
    %p82 = por %p80, %p81
    %p84 = scmp.ne.s32.totalorder %s69, %s83
    %p85 = scmp.eq.s32.totalorder %s17, 0
    %p86 = por %p84, %p85
    %s88 = sadd.s32 %s87, 1
    %p91 = scmp.eq.s32.totalorder %s11, 1
    %p92 = scmp.ne.s32.totalorder %s87, %s89
    %p93 = scmp.eq.s32.totalorder %s11, 0
    %p94 = por %p92, %p93
    %p95 = scmp.ne.s32.totalorder %s87, %s89
    %p96 = scmp.eq.s32.totalorder %s16, 1
    %p97 = por %p95, %p96
    %p98 = scmp.ne.s32.totalorder %s89, %s90
    %p99 = scmp.eq.s32.totalorder %s16, 0
    %p100 = por %p98, %p99
    %p101 = scmp.ne.s32.totalorder %s89, %s90
    %p102 = scmp.eq.s32.totalorder %s17, 1
    %p103 = por %p101, %p102
    %p105 = scmp.ne.s32.totalorder %s90, %s104
    %p106 = scmp.eq.s32.totalorder %s17, 0
    %p107 = por %p105, %p106
    %s109 = sadd.s32 %s108, 1
    %p112 = scmp.eq.s32.totalorder %s11, 1
    %p113 = scmp.ne.s32.totalorder %s108, %s110
    %p114 = scmp.eq.s32.totalorder %s11, 0
    %p115 = por %p113, %p114
    %p116 = scmp.ne.s32.totalorder %s108, %s110
    %p117 = scmp.eq.s32.totalorder %s16, 1
    %p118 = por %p116, %p117
    %p119 = scmp.ne.s32.totalorder %s110, %s111
    %p120 = scmp.eq.s32.totalorder %s16, 0
    %p121 = por %p119, %p120
    %p122 = scmp.ne.s32.totalorder %s110, %s111
    %p123 = scmp.eq.s32.totalorder %s17, 1
    %p124 = por %p122, %p123
    %p126 = scmp.ne.s32.totalorder %s111, %s125
    %p127 = scmp.eq.s32.totalorder %s17, 0
    %p128 = por %p126, %p127
    %s129 = ssub.s32 %s11, %s18
    %p130 = scmp.eq.s32.totalorder %s129, 0
    %s132 = sadd.s32 %s131, 1
    %s133 = scalar_select %p130, %s131, %s132
    %p136 = pneg %p130
    %p137 = scmp.eq.s32.totalorder %s11, 1
    %p138 = por %p136, %p137
    %p139 = scmp.ne.s32.totalorder %s131, %s134
    %p140 = scmp.eq.s32.totalorder %s11, 0
    %p141 = por %p139, %p140
    %p142 = scmp.ne.s32.totalorder %s131, %s134
    %p143 = scmp.eq.s32.totalorder %s16, 1
    %p144 = por %p142, %p143
    %p145 = scmp.ne.s32.totalorder %s134, %s135
    %p146 = scmp.eq.s32.totalorder %s16, 0
    %p147 = por %p145, %p146
    %p148 = scmp.ne.s32.totalorder %s134, %s135
    %p149 = scmp.eq.s32.totalorder %s17, 1
    %p150 = por %p148, %p149
    %p152 = scmp.ne.s32.totalorder %s135, %s151
    %p153 = scmp.eq.s32.totalorder %s17, 0
    %p154 = por %p152, %p153
    %p155 = scmp.le.s32.totalorder 1, %s11
    %p156 = scmp.lt.s32.totalorder %s11, 3
    %p157 = pnand %p155, %p156
    %p158 = pneg %p157
    // Predicated region
    $region9: #{cnn_forward.1} parent=5 // pred_check
      _
    $region10: #{cnn_forward.1} parent=5 // pred_check_branch
      %160 = sbr.rel (%p157) target = $region12
    $region11: #{cnn_forward.1} parent=5 // pred_region
      %s161 = ssub.s32 %s11, 1
      // Predicated region
      $region13: #{cnn_forward.1} parent=11 // pred_check
        %p162 = pneg %p58
      $region14: #{cnn_forward.1} parent=11 // pred_check_branch
        %164 = sbr.rel (%p162) target = $region16
      $region15: #{cnn_forward.1} parent=11 // pred_region
        _
      $region16: #{cnn_forward.1} parent=11 // pred_fallthru
        _
      // Predicated region
      $region17: #{cnn_forward.1} parent=11 // pred_check
        %p165 = pneg %p79
      $region18: #{cnn_forward.1} parent=11 // pred_check_branch
        %167 = sbr.rel (%p165) target = $region20
      $region19: #{cnn_forward.1} parent=11 // pred_region
        _
      $region20: #{cnn_forward.1} parent=11 // pred_fallthru
        _
      // Predicated region
      $region21: #{cnn_forward.1} parent=11 // pred_check
        %p168 = pneg %p100
      $region22: #{cnn_forward.1} parent=11 // pred_check_branch
        %170 = sbr.rel (%p168) target = $region24
      $region23: #{cnn_forward.1} parent=11 // pred_region
        _
      $region24: #{cnn_forward.1} parent=11 // pred_fallthru
        _
      // Predicated region
      $region25: #{cnn_forward.1} parent=11 // pred_check
        %p171 = pneg %p121
      $region26: #{cnn_forward.1} parent=11 // pred_check_branch
        %173 = sbr.rel (%p171) target = $region28
      $region27: #{cnn_forward.1} parent=11 // pred_region
        _
      $region28: #{cnn_forward.1} parent=11 // pred_fallthru
        _
    $region12: #{cnn_forward.1} parent=5 // pred_fallthru
      _
    %p174 = scmp.lt.s32.totalorder %s11, 2
    // Predicated region
    $region29: #{cnn_forward.1} parent=5 // pred_check
      %p175 = pneg %p174
    $region30: #{cnn_forward.1} parent=5 // pred_check_branch
      %177 = sbr.rel (%p175) target = $region32
    $region31: #{cnn_forward.1} parent=5 // pred_region
      // Predicated region
      $region33: #{cnn_forward.1} parent=31 // pred_check
        %p178 = pneg %p31
      $region34: #{cnn_forward.1} parent=31 // pred_check_branch
        %180 = sbr.rel (%p178) target = $region36
      $region35: #{cnn_forward.1} parent=31 // pred_region
        %p181 = scmp.lt.s32.totalorder %s11, 1
        %s182 = scalar_select %p181, %s11, 1
        %s183 = smul.addr %s182, 128
        %s184 = smul.addr %s183, 4
        %s185 = scalar_lea.vmem %s0, %s184
      $region36: #{cnn_forward.1} parent=31 // pred_fallthru
        _
    $region32: #{cnn_forward.1} parent=5 // pred_fallthru
      _
    %p186 = scmp.le.s32.totalorder 1, %s11
    %p187 = scmp.lt.s32.totalorder %s11, 3
    %p188 = pnand %p186, %p187
    %p189 = pneg %p188
    // Predicated region
    $region37: #{cnn_forward.1} parent=5 // pred_check
      _
    $region38: #{cnn_forward.1} parent=5 // pred_check_branch
      %191 = sbr.rel (%p188) target = $region40
    $region39: #{cnn_forward.1} parent=5 // pred_region
      %s192 = ssub.s32 %s11, 1
      %p193 = scmp.lt.s32.totalorder %s16, 1
      %s194 = scalar_select %p193, %s16, 1
      %s195 = smul.addr %s194, 128
      %s196 = smul.addr %s195, 4
      %s197 = scalar_lea.vmem %s0, %s196
      %p198 = pneg %p37
      %p199 = pneg %p34
      %p200 = pneg %p58
      %p201 = pneg %p55
      %p202 = pneg %p79
      %p203 = pneg %p76
      %p204 = pneg %p100
      %p205 = pneg %p97
      %p206 = pneg %p121
      %p207 = pneg %p118
      %p208 = pneg %p147
      %p209 = pneg %p144
      %p210 = scmp.lt.s32.totalorder %s16, 1
      %s211 = scalar_select %p210, %s16, 1
      %s212 = smul.addr %s211, 8
      %s213 = smul.addr %s212, 4
      %s214 = scalar_lea.vmem %s5, %s213
      %p215 = scmp.lt.s32.totalorder %s16, 1
      %s216 = scalar_select %p215, %s16, 1
      %s217 = smul.addr %s216, 128
      %s218 = smul.addr %s217, 4
      %s219 = scalar_lea.vmem %s0, %s218
      %p220 = scmp.lt.s32.totalorder %s16, 1
      %s221 = scalar_select %p220, %s16, 1
      %s222 = smul.addr %s221, 8
      %s223 = smul.addr %s222, 4
      %s224 = scalar_lea.vmem %s5, %s223
      %vm226 = vcmask 1043456
      %vm227 = vcmask 523268
      %vm228 = vmor %vm227, %vm226
      %229 = vst.msk [vmem:[#allocation2] sm:$0xff] %vm228, 0
      %230 = vst.msk [vmem:[#allocation2 + $0x8] sm:$0xff] %vm228, 0
      %s231 = scalar_lea.vmem [#allocation2], 272
      %232 = vst.msk [vmem:[%s231] sm:$0xff] %vm228, 0
      %233 = vst.msk [vmem:[%s231 + $0x8] sm:$0xff] %vm228, 0
      loop: start=0, step=1, limit=4
      $region41: #{cnn_forward.1} parent=39 // loop_pre_header
        _
      $region42: #{cnn_forward.1} parent=39 // loop_header
        %s235 = sphi 0, %s239
        %p236 = scmp.ge.s32.totalorder %s235, 4
      $region43: #{cnn_forward.1} parent=39 // loop_header_branch
        %238 = sbr.rel (%p236) target = $region47
      $region44: #{cnn_forward.1} parent=39 // loop_body
        %s240 = smul.u32 %s235, 256
        %s241 = sshra.s32 %s240, 3
        %s242 = sand.u32 %s240, 7
        %s243 = smul.addr %s241, 4
        %s244 = scalar_lea.vmem %s219, %s243
        %v245 = vld [vmem:[%s244] sm:$0xf]
        %v246 = vld [vmem:[%s244 + $0x4] sm:$0xf]
        %v247 = vld [vmem:[%s244 + $0x8] sm:$0xf]
        %v248 = vld [vmem:[%s244 + $0xc] sm:$0xf]
        %v249 = vld [vmem:[%s244 + $0x10] sm:$0xf]
        %v250 = vld [vmem:[%s244 + $0x14] sm:$0xf]
        %v251 = vld [vmem:[%s244 + $0x18] sm:$0xf]
        %v252 = vld [vmem:[%s244 + $0x1c] sm:$0xf]
        %v253 = vld [vmem:[%s244 + $0x20] sm:$0xf]
        %v254 = vld [vmem:[%s244 + $0x24] sm:$0xf]
        %v255 = vld [vmem:[%s244 + $0x28] sm:$0xf]
        %v256 = vld [vmem:[%s244 + $0x2c] sm:$0xf]
        %v257 = vld [vmem:[%s244 + $0x30] sm:$0xf]
        %v258 = vld [vmem:[%s244 + $0x34] sm:$0xf]
        %v259 = vld [vmem:[%s244 + $0x38] sm:$0xf]
        %v260 = vld [vmem:[%s244 + $0x3c] sm:$0xf]
        %v261 = vld [vmem:[%s244 + $0x40] sm:$0xf]
        %v262 = vld [vmem:[%s244 + $0x44] sm:$0xf]
        %v263 = vld [vmem:[%s244 + $0x48] sm:$0xf]
        %v264 = vld [vmem:[%s244 + $0x4c] sm:$0xf]
        %v265 = vld [vmem:[%s244 + $0x50] sm:$0xf]
        %v266 = vld [vmem:[%s244 + $0x54] sm:$0xf]
        %v267 = vld [vmem:[%s244 + $0x58] sm:$0xf]
        %v268 = vld [vmem:[%s244 + $0x5c] sm:$0xf]
        %v269 = vld [vmem:[%s244 + $0x60] sm:$0xf]
        %v270 = vld [vmem:[%s244 + $0x64] sm:$0xf]
        %v271 = vld [vmem:[%s244 + $0x68] sm:$0xf]
        %v272 = vld [vmem:[%s244 + $0x6c] sm:$0xf]
        %v273 = vld [vmem:[%s244 + $0x70] sm:$0xf]
        %v274 = vld [vmem:[%s244 + $0x74] sm:$0xf]
        %v275 = vld [vmem:[%s244 + $0x78] sm:$0xf]
        %v276 = vld [vmem:[%s244 + $0x7c] sm:$0xf]
        %v277 = vld [vmem:[%s1] sm:$0xf]
        %v278 = vld [vmem:[%s1 + $0x4] sm:$0xf]
        %v279 = vld [vmem:[%s1 + $0x8] sm:$0xf]
        %v280 = vld [vmem:[%s1 + $0xc] sm:$0x3]
        %v281 = vld [vmem:[%s2] sm:$0x1]
        %v283 = vlaneseq
        %v284 = vshrl.u32 %v283, 7
        %v285 = vsub.s32 0, %v284
        %v286 = vrot.slane %v281, %v285
        %v320 = vunpack.c.l.b16 %v245
        %v321 = vunpack.c.l.b16 %v246
        %v322 = vunpack.c.l.b16 %v247
        %v323 = vunpack.c.l.b16 %v248
        %v324 = vunpack.c.l.b16 %v249
        %v325 = vunpack.c.l.b16 %v250
        %v326 = vunpack.c.l.b16 %v251
        %v327 = vunpack.c.l.b16 %v252
        %v328 = vunpack.c.l.b16 %v253
        %v329 = vunpack.c.l.b16 %v254
        %v330 = vunpack.c.l.b16 %v255
        %v331 = vunpack.c.l.b16 %v256
        %v332 = vunpack.c.l.b16 %v257
        %v333 = vunpack.c.l.b16 %v258
        %v334 = vunpack.c.l.b16 %v259
        %v335 = vunpack.c.l.b16 %v260
        %v336 = vunpack.c.l.b16 %v261
        %v337 = vunpack.c.l.b16 %v262
        %v338 = vunpack.c.l.b16 %v263
        %v339 = vunpack.c.l.b16 %v264
        %v340 = vunpack.c.l.b16 %v265
        %v341 = vunpack.c.l.b16 %v266
        %v342 = vunpack.c.l.b16 %v267
        %v343 = vunpack.c.l.b16 %v268
        %v344 = vunpack.c.l.b16 %v269
        %v345 = vunpack.c.l.b16 %v270
        %v346 = vunpack.c.l.b16 %v271
        %v347 = vunpack.c.l.b16 %v272
        %v348 = vunpack.c.l.b16 %v273
        %v349 = vunpack.c.l.b16 %v274
        %v350 = vunpack.c.l.b16 %v275
        %v351 = vunpack.c.l.b16 %v276
        %v352 = vpack.c.b16 %v321, %v320
        %v353 = vpack.c.b16 %v323, %v322
        %v354 = vpack.c.b16 %v325, %v324
        %v355 = vpack.c.b16 %v327, %v326
        %v356 = vpack.c.b16 %v329, %v328
        %v357 = vpack.c.b16 %v331, %v330
        %v358 = vpack.c.b16 %v333, %v332
        %v359 = vpack.c.b16 %v335, %v334
        %v360 = vpack.c.b16 %v337, %v336
        %v361 = vpack.c.b16 %v339, %v338
        %v362 = vpack.c.b16 %v341, %v340
        %v363 = vpack.c.b16 %v343, %v342
        %v364 = vpack.c.b16 %v345, %v344
        %v365 = vpack.c.b16 %v347, %v346
        %v366 = vpack.c.b16 %v349, %v348
        %v367 = vpack.c.b16 %v351, %v350
        %v372 = vunpack.c.l.b16 %v277
        %v373 = vunpack.c.l.b16 %v278
        %v374 = vunpack.c.l.b16 %v279
        %v375 = vunpack.c.l.b16 %v280
        %v376 = vpack.c.b16 %v373, %v372
        %v377 = vpack.c.b16 %v375, %v374
        %vm379 = vcmask 220160
        %v381 = vsel %vm379, %v352, 0
        %v384 = vsel %vm379, %v353, 0
        %v387 = vsel %vm379, %v354, 0
        %v390 = vsel %vm379, %v355, 0
        %v393 = vsel %vm379, %v356, 0
        %v396 = vsel %vm379, %v357, 0
        %v399 = vsel %vm379, %v358, 0
        %v402 = vsel %vm379, %v359, 0
        %v405 = vsel %vm379, %v360, 0
        %v408 = vsel %vm379, %v361, 0
        %v411 = vsel %vm379, %v362, 0
        %v414 = vsel %vm379, %v363, 0
        %v417 = vsel %vm379, %v364, 0
        %v420 = vsel %vm379, %v365, 0
        %v423 = vsel %vm379, %v366, 0
        %v426 = vsel %vm379, %v367, 0
        %vm428 = vcmask 1044480
        %vm429 = vcmask 1045504
        %v430 = vsel %vm428, 4294967295, 65535
        %v431 = vsel %vm429, %v430, 0
        %v433 = vand.u32 %v377, %v431
        %435 = vmatprep.subr.bf16.mxu0 0
        %436 = vmatpush1.bf16.msra.mxu0 0
        %437 = vmatprep.subr.bf16.mxu0 0
        %438 = vmatpush1.bf16.msra.mxu0 0
        %439 = vmatprep.subr.bf16.mxu0 0
        %440 = vmatpush1.bf16.msra.mxu0 0
        %441 = vmatprep.subr.bf16.mxu0 0
        %442 = vmatpush1.bf16.msra.mxu0 0
        %443 = vmatprep.subr.bf16.mxu0 0
        %444 = vmatpush1.bf16.msra.mxu0 0
        %445 = vmatprep.subr.bf16.mxu0 0
        %446 = vmatpush1.bf16.msra.mxu0 0
        %447 = vmatprep.subr.bf16.mxu0 0
        %448 = vmatpush1.bf16.msra.mxu0 %v433
        %449 = vmatprep.subr.bf16.mxu0 0
        %450 = vmatpush1.bf16.msra.mxu0 %v376
        %451 = vmatprep.subr.bf16.mxu0 0
        %452 = vmatpush2.bf16.msra.mxu0 0
        %453 = vmatprep.subr.bf16.mxu0 0
        %454 = vmatpush2.bf16.msra.mxu0 0
        %455 = vmatprep.subr.bf16.mxu0 0
        %456 = vmatpush2.bf16.msra.mxu0 0
        %457 = vmatprep.subr.bf16.mxu0 0
        %458 = vmatpush2.bf16.msra.mxu0 0
        %459 = vmatprep.subr.bf16.mxu0 0
        %460 = vmatpush2.bf16.msra.mxu0 0
        %461 = vmatprep.subr.bf16.mxu0 0
        %462 = vmatpush2.bf16.msra.mxu0 0
        %463 = vmatprep.subr.bf16.mxu0 0
        %464 = vmatpush2.bf16.msra.mxu0 0
        %465 = vmatprep.subr.bf16.mxu0 0
        %466 = vmatpush2.bf16.msra.mxu0 0
        %467 = vmatprep.mubr.bf16.mxu0 0
        %468 = vmatmul.mubr.bf16.gmra.mxu0 %v381
        %v469 = vpop.f32.mrf.mxu0
        %v470 = vadd.f32 %v286, %v469
        %v471 = vpop.f32.mrf.mxu0
        %v472 = vpop.f32.mrf.mxu0
        %v473 = vadd.f32 %v286, %v472
        %v474 = vpop.f32.mrf.mxu0
        %475 = vmatprep.mubr.bf16.mxu0 0
        %476 = vmatmul.mubr.bf16.gmra.mxu0 %v384
        %v477 = vpop.f32.mrf.mxu0
        %v478 = vadd.f32 %v286, %v477
        %v479 = vpop.f32.mrf.mxu0
        %v480 = vpop.f32.mrf.mxu0
        %v481 = vadd.f32 %v286, %v480
        %v482 = vpop.f32.mrf.mxu0
        %483 = vmatprep.mubr.bf16.mxu0 0
        %484 = vmatmul.mubr.bf16.gmra.mxu0 %v387
        %v485 = vpop.f32.mrf.mxu0
        %v486 = vadd.f32 %v286, %v485
        %v487 = vpop.f32.mrf.mxu0
        %v488 = vpop.f32.mrf.mxu0
        %v489 = vadd.f32 %v286, %v488
        %v490 = vpop.f32.mrf.mxu0
        %491 = vmatprep.mubr.bf16.mxu0 0
        %492 = vmatmul.mubr.bf16.gmra.mxu0 %v390
        %v493 = vpop.f32.mrf.mxu0
        %v494 = vadd.f32 %v286, %v493
        %v495 = vpop.f32.mrf.mxu0
        %v496 = vpop.f32.mrf.mxu0
        %v497 = vadd.f32 %v286, %v496
        %v498 = vpop.f32.mrf.mxu0
        %499 = vmatprep.mubr.bf16.mxu0 0
        %500 = vmatmul.mubr.bf16.gmra.mxu0 %v393
        %v501 = vpop.f32.mrf.mxu0
        %v502 = vadd.f32 %v286, %v501
        %v503 = vpop.f32.mrf.mxu0
        %v504 = vpop.f32.mrf.mxu0
        %v505 = vadd.f32 %v286, %v504
        %v506 = vpop.f32.mrf.mxu0
        %507 = vmatprep.mubr.bf16.mxu0 0
        %508 = vmatmul.mubr.bf16.gmra.mxu0 %v396
        %v509 = vpop.f32.mrf.mxu0
        %v510 = vadd.f32 %v286, %v509
        %v511 = vpop.f32.mrf.mxu0
        %v512 = vpop.f32.mrf.mxu0
        %v513 = vadd.f32 %v286, %v512
        %v514 = vpop.f32.mrf.mxu0
        %515 = vmatprep.mubr.bf16.mxu0 0
        %516 = vmatmul.mubr.bf16.gmra.mxu0 %v399
        %v517 = vpop.f32.mrf.mxu0
        %v518 = vadd.f32 %v286, %v517
        %v519 = vpop.f32.mrf.mxu0
        %v520 = vpop.f32.mrf.mxu0
        %v521 = vadd.f32 %v286, %v520
        %v522 = vpop.f32.mrf.mxu0
        %523 = vmatprep.mubr.bf16.mxu0 0
        %524 = vmatmul.mubr.bf16.gmra.mxu0 %v402
        %v525 = vpop.f32.mrf.mxu0
        %v526 = vadd.f32 %v286, %v525
        %v527 = vpop.f32.mrf.mxu0
        %v528 = vpop.f32.mrf.mxu0
        %v529 = vadd.f32 %v286, %v528
        %v530 = vpop.f32.mrf.mxu0
        %531 = vmatprep.mubr.bf16.mxu0 0
        %532 = vmatmul.mubr.bf16.gmra.mxu0 %v405
        %v533 = vpop.f32.mrf.mxu0
        %v534 = vadd.f32 %v286, %v533
        %v535 = vpop.f32.mrf.mxu0
        %v536 = vpop.f32.mrf.mxu0
        %v537 = vadd.f32 %v286, %v536
        %v538 = vpop.f32.mrf.mxu0
        %539 = vmatprep.mubr.bf16.mxu0 0
        %540 = vmatmul.mubr.bf16.gmra.mxu0 %v408
        %v541 = vpop.f32.mrf.mxu0
        %v542 = vadd.f32 %v286, %v541
        %v543 = vpop.f32.mrf.mxu0
        %v544 = vpop.f32.mrf.mxu0
        %v545 = vadd.f32 %v286, %v544
        %v546 = vpop.f32.mrf.mxu0
        %547 = vmatprep.mubr.bf16.mxu0 0
        %548 = vmatmul.mubr.bf16.gmra.mxu0 %v411
        %v549 = vpop.f32.mrf.mxu0
        %v550 = vadd.f32 %v286, %v549
        %v551 = vpop.f32.mrf.mxu0
        %v552 = vpop.f32.mrf.mxu0
        %v553 = vadd.f32 %v286, %v552
        %v554 = vpop.f32.mrf.mxu0
        %555 = vmatprep.mubr.bf16.mxu0 0
        %556 = vmatmul.mubr.bf16.gmra.mxu0 %v414
        %v557 = vpop.f32.mrf.mxu0
        %v558 = vadd.f32 %v286, %v557
        %v559 = vpop.f32.mrf.mxu0
        %v560 = vpop.f32.mrf.mxu0
        %v561 = vadd.f32 %v286, %v560
        %v562 = vpop.f32.mrf.mxu0
        %563 = vmatprep.mubr.bf16.mxu0 0
        %564 = vmatmul.mubr.bf16.gmra.mxu0 %v417
        %v565 = vpop.f32.mrf.mxu0
        %v566 = vadd.f32 %v286, %v565
        %v567 = vpop.f32.mrf.mxu0
        %v568 = vpop.f32.mrf.mxu0
        %v569 = vadd.f32 %v286, %v568
        %v570 = vpop.f32.mrf.mxu0
        %571 = vmatprep.mubr.bf16.mxu0 0
        %572 = vmatmul.mubr.bf16.gmra.mxu0 %v420
        %v573 = vpop.f32.mrf.mxu0
        %v574 = vadd.f32 %v286, %v573
        %v575 = vpop.f32.mrf.mxu0
        %v576 = vpop.f32.mrf.mxu0
        %v577 = vadd.f32 %v286, %v576
        %v578 = vpop.f32.mrf.mxu0
        %579 = vmatprep.mubr.bf16.mxu0 0
        %580 = vmatmul.mubr.bf16.gmra.mxu0 %v423
        %v581 = vpop.f32.mrf.mxu0
        %v582 = vadd.f32 %v286, %v581
        %v583 = vpop.f32.mrf.mxu0
        %v584 = vpop.f32.mrf.mxu0
        %v585 = vadd.f32 %v286, %v584
        %v586 = vpop.f32.mrf.mxu0
        %587 = vmatprep.mubr.bf16.mxu0 0
        %588 = vmatmul.mubr.bf16.gmra.mxu0 %v426
        %v589 = vpop.f32.mrf.mxu0
        %v590 = vadd.f32 %v286, %v589
        %v591 = vpop.f32.mrf.mxu0
        %v592 = vpop.f32.mrf.mxu0
        %v593 = vadd.f32 %v286, %v592
        %v594 = vpop.f32.mrf.mxu0
        %595 = vdwg.mxu0
        %v596 = vmax.f32 %v470, 0.0
        %v597 = vmax.f32 %v473, 0.0
        %v598 = vmax.f32 %v478, 0.0
        %v599 = vmax.f32 %v481, 0.0
        %v600 = vmax.f32 %v486, 0.0
        %v601 = vmax.f32 %v489, 0.0
        %v602 = vmax.f32 %v494, 0.0
        %v603 = vmax.f32 %v497, 0.0
        %v604 = vmax.f32 %v502, 0.0
        %v605 = vmax.f32 %v505, 0.0
        %v606 = vmax.f32 %v510, 0.0
        %v607 = vmax.f32 %v513, 0.0
        %v608 = vmax.f32 %v518, 0.0
        %v609 = vmax.f32 %v521, 0.0
        %v610 = vmax.f32 %v526, 0.0
        %v611 = vmax.f32 %v529, 0.0
        %v612 = vmax.f32 %v534, 0.0
        %v613 = vmax.f32 %v537, 0.0
        %v614 = vmax.f32 %v542, 0.0
        %v615 = vmax.f32 %v545, 0.0
        %v616 = vmax.f32 %v550, 0.0
        %v617 = vmax.f32 %v553, 0.0
        %v618 = vmax.f32 %v558, 0.0
        %v619 = vmax.f32 %v561, 0.0
        %v620 = vmax.f32 %v566, 0.0
        %v621 = vmax.f32 %v569, 0.0
        %v622 = vmax.f32 %v574, 0.0
        %v623 = vmax.f32 %v577, 0.0
        %v624 = vmax.f32 %v582, 0.0
        %v625 = vmax.f32 %v585, 0.0
        %v626 = vmax.f32 %v590, 0.0
        %v627 = vmax.f32 %v593, 0.0
        %v660 = vcombine.high %v596, %v596
        %v662 = vunpack.c.l.s4 1983009808
        %v663 = vunpack.c.0.s8 %v662
        %v664 = vlaneseq
        %v665 = vshrl.u32 %v664, 7
        %v666 = vsub.s32 %v663, %v665
        %v667 = vrot.slane %v596, %v666
        %v669 = vunpack.c.l.s4 1983009808
        %v670 = vunpack.c.0.s8 %v669
        %v671 = vlaneseq
        %v672 = vshrl.u32 %v671, 7
        %v673 = vsub.s32 %v670, %v672
        %v674 = vrot.slane %v660, %v673
        %v675 = vcombine.high %v667, %v667
        %v676 = vcombine.high %v674, %v674
        %v677 = vcombine.high %v597, %v597
        %v679 = vunpack.c.l.s4 1983009808
        %v680 = vunpack.c.0.s8 %v679
        %v681 = vlaneseq
        %v682 = vshrl.u32 %v681, 7
        %v683 = vsub.s32 %v680, %v682
        %v684 = vrot.slane %v597, %v683
        %v686 = vunpack.c.l.s4 1983009808
        %v687 = vunpack.c.0.s8 %v686
        %v688 = vlaneseq
        %v689 = vshrl.u32 %v688, 7
        %v690 = vsub.s32 %v687, %v689
        %v691 = vrot.slane %v677, %v690
        %v692 = vcombine.high %v684, %v684
        %v693 = vcombine.high %v691, %v691
        %v694 = vcombine.high %v598, %v598
        %v696 = vunpack.c.l.s4 1983009808
        %v697 = vunpack.c.0.s8 %v696
        %v698 = vlaneseq
        %v699 = vshrl.u32 %v698, 7
        %v700 = vsub.s32 %v697, %v699
        %v701 = vrot.slane %v598, %v700
        %v703 = vunpack.c.l.s4 1983009808
        %v704 = vunpack.c.0.s8 %v703
        %v705 = vlaneseq
        %v706 = vshrl.u32 %v705, 7
        %v707 = vsub.s32 %v704, %v706
        %v708 = vrot.slane %v694, %v707
        %v709 = vcombine.high %v701, %v701
        %v710 = vcombine.high %v708, %v708
        %v711 = vcombine.high %v599, %v599
        %v713 = vunpack.c.l.s4 1983009808
        %v714 = vunpack.c.0.s8 %v713
        %v715 = vlaneseq
        %v716 = vshrl.u32 %v715, 7
        %v717 = vsub.s32 %v714, %v716
        %v718 = vrot.slane %v599, %v717
        %v720 = vunpack.c.l.s4 1983009808
        %v721 = vunpack.c.0.s8 %v720
        %v722 = vlaneseq
        %v723 = vshrl.u32 %v722, 7
        %v724 = vsub.s32 %v721, %v723
        %v725 = vrot.slane %v711, %v724
        %v726 = vcombine.high %v718, %v718
        %v727 = vcombine.high %v725, %v725
        %v728 = vcombine.high %v600, %v600
        %v730 = vunpack.c.l.s4 1983009808
        %v731 = vunpack.c.0.s8 %v730
        %v732 = vlaneseq
        %v733 = vshrl.u32 %v732, 7
        %v734 = vsub.s32 %v731, %v733
        %v735 = vrot.slane %v600, %v734
        %v737 = vunpack.c.l.s4 1983009808
        %v738 = vunpack.c.0.s8 %v737
        %v739 = vlaneseq
        %v740 = vshrl.u32 %v739, 7
        %v741 = vsub.s32 %v738, %v740
        %v742 = vrot.slane %v728, %v741
        %v743 = vcombine.high %v735, %v735
        %v744 = vcombine.high %v742, %v742
        %v745 = vcombine.high %v601, %v601
        %v747 = vunpack.c.l.s4 1983009808
        %v748 = vunpack.c.0.s8 %v747
        %v749 = vlaneseq
        %v750 = vshrl.u32 %v749, 7
        %v751 = vsub.s32 %v748, %v750
        %v752 = vrot.slane %v601, %v751
        %v754 = vunpack.c.l.s4 1983009808
        %v755 = vunpack.c.0.s8 %v754
        %v756 = vlaneseq
        %v757 = vshrl.u32 %v756, 7
        %v758 = vsub.s32 %v755, %v757
        %v759 = vrot.slane %v745, %v758
        %v760 = vcombine.high %v752, %v752
        %v761 = vcombine.high %v759, %v759
        %v762 = vcombine.high %v602, %v602
        %v764 = vunpack.c.l.s4 1983009808
        %v765 = vunpack.c.0.s8 %v764
        %v766 = vlaneseq
        %v767 = vshrl.u32 %v766, 7
        %v768 = vsub.s32 %v765, %v767
        %v769 = vrot.slane %v602, %v768
        %v771 = vunpack.c.l.s4 1983009808
        %v772 = vunpack.c.0.s8 %v771
        %v773 = vlaneseq
        %v774 = vshrl.u32 %v773, 7
        %v775 = vsub.s32 %v772, %v774
        %v776 = vrot.slane %v762, %v775
        %v777 = vcombine.high %v769, %v769
        %v778 = vcombine.high %v776, %v776
        %v779 = vcombine.high %v603, %v603
        %v781 = vunpack.c.l.s4 1983009808
        %v782 = vunpack.c.0.s8 %v781
        %v783 = vlaneseq
        %v784 = vshrl.u32 %v783, 7
        %v785 = vsub.s32 %v782, %v784
        %v786 = vrot.slane %v603, %v785
        %v788 = vunpack.c.l.s4 1983009808
        %v789 = vunpack.c.0.s8 %v788
        %v790 = vlaneseq
        %v791 = vshrl.u32 %v790, 7
        %v792 = vsub.s32 %v789, %v791
        %v793 = vrot.slane %v779, %v792
        %v794 = vcombine.high %v786, %v786
        %v795 = vcombine.high %v793, %v793
        %v796 = vcombine.high %v604, %v604
        %v798 = vunpack.c.l.s4 1983009808
        %v799 = vunpack.c.0.s8 %v798
        %v800 = vlaneseq
        %v801 = vshrl.u32 %v800, 7
        %v802 = vsub.s32 %v799, %v801
        %v803 = vrot.slane %v604, %v802
        %v805 = vunpack.c.l.s4 1983009808
        %v806 = vunpack.c.0.s8 %v805
        %v807 = vlaneseq
        %v808 = vshrl.u32 %v807, 7
        %v809 = vsub.s32 %v806, %v808
        %v810 = vrot.slane %v796, %v809
        %v811 = vcombine.high %v803, %v803
        %v812 = vcombine.high %v810, %v810
        %v813 = vcombine.high %v605, %v605
        %v815 = vunpack.c.l.s4 1983009808
        %v816 = vunpack.c.0.s8 %v815
        %v817 = vlaneseq
        %v818 = vshrl.u32 %v817, 7
        %v819 = vsub.s32 %v816, %v818
        %v820 = vrot.slane %v605, %v819
        %v822 = vunpack.c.l.s4 1983009808
        %v823 = vunpack.c.0.s8 %v822
        %v824 = vlaneseq
        %v825 = vshrl.u32 %v824, 7
        %v826 = vsub.s32 %v823, %v825
        %v827 = vrot.slane %v813, %v826
        %v828 = vcombine.high %v820, %v820
        %v829 = vcombine.high %v827, %v827
        %v830 = vcombine.high %v606, %v606
        %v832 = vunpack.c.l.s4 1983009808
        %v833 = vunpack.c.0.s8 %v832
        %v834 = vlaneseq
        %v835 = vshrl.u32 %v834, 7
        %v836 = vsub.s32 %v833, %v835
        %v837 = vrot.slane %v606, %v836
        %v839 = vunpack.c.l.s4 1983009808
        %v840 = vunpack.c.0.s8 %v839
        %v841 = vlaneseq
        %v842 = vshrl.u32 %v841, 7
        %v843 = vsub.s32 %v840, %v842
        %v844 = vrot.slane %v830, %v843
        %v845 = vcombine.high %v837, %v837
        %v846 = vcombine.high %v844, %v844
        %v847 = vcombine.high %v607, %v607
        %v849 = vunpack.c.l.s4 1983009808
        %v850 = vunpack.c.0.s8 %v849
        %v851 = vlaneseq
        %v852 = vshrl.u32 %v851, 7
        %v853 = vsub.s32 %v850, %v852
        %v854 = vrot.slane %v607, %v853
        %v856 = vunpack.c.l.s4 1983009808
        %v857 = vunpack.c.0.s8 %v856
        %v858 = vlaneseq
        %v859 = vshrl.u32 %v858, 7
        %v860 = vsub.s32 %v857, %v859
        %v861 = vrot.slane %v847, %v860
        %v862 = vcombine.high %v854, %v854
        %v863 = vcombine.high %v861, %v861
        %v864 = vcombine.high %v608, %v608
        %v866 = vunpack.c.l.s4 1983009808
        %v867 = vunpack.c.0.s8 %v866
        %v868 = vlaneseq
        %v869 = vshrl.u32 %v868, 7
        %v870 = vsub.s32 %v867, %v869
        %v871 = vrot.slane %v608, %v870
        %v873 = vunpack.c.l.s4 1983009808
        %v874 = vunpack.c.0.s8 %v873
        %v875 = vlaneseq
        %v876 = vshrl.u32 %v875, 7
        %v877 = vsub.s32 %v874, %v876
        %v878 = vrot.slane %v864, %v877
        %v879 = vcombine.high %v871, %v871
        %v880 = vcombine.high %v878, %v878
        %v881 = vcombine.high %v609, %v609
        %v883 = vunpack.c.l.s4 1983009808
        %v884 = vunpack.c.0.s8 %v883
        %v885 = vlaneseq
        %v886 = vshrl.u32 %v885, 7
        %v887 = vsub.s32 %v884, %v886
        %v888 = vrot.slane %v609, %v887
        %v890 = vunpack.c.l.s4 1983009808
        %v891 = vunpack.c.0.s8 %v890
        %v892 = vlaneseq
        %v893 = vshrl.u32 %v892, 7
        %v894 = vsub.s32 %v891, %v893
        %v895 = vrot.slane %v881, %v894
        %v896 = vcombine.high %v888, %v888
        %v897 = vcombine.high %v895, %v895
        %v898 = vcombine.high %v610, %v610
        %v900 = vunpack.c.l.s4 1983009808
        %v901 = vunpack.c.0.s8 %v900
        %v902 = vlaneseq
        %v903 = vshrl.u32 %v902, 7
        %v904 = vsub.s32 %v901, %v903
        %v905 = vrot.slane %v610, %v904
        %v907 = vunpack.c.l.s4 1983009808
        %v908 = vunpack.c.0.s8 %v907
        %v909 = vlaneseq
        %v910 = vshrl.u32 %v909, 7
        %v911 = vsub.s32 %v908, %v910
        %v912 = vrot.slane %v898, %v911
        %v913 = vcombine.high %v905, %v905
        %v914 = vcombine.high %v912, %v912
        %v915 = vcombine.high %v611, %v611
        %v917 = vunpack.c.l.s4 1983009808
        %v918 = vunpack.c.0.s8 %v917
        %v919 = vlaneseq
        %v920 = vshrl.u32 %v919, 7
        %v921 = vsub.s32 %v918, %v920
        %v922 = vrot.slane %v611, %v921
        %v924 = vunpack.c.l.s4 1983009808
        %v925 = vunpack.c.0.s8 %v924
        %v926 = vlaneseq
        %v927 = vshrl.u32 %v926, 7
        %v928 = vsub.s32 %v925, %v927
        %v929 = vrot.slane %v915, %v928
        %v930 = vcombine.high %v922, %v922
        %v931 = vcombine.high %v929, %v929
        %v932 = vcombine.high %v612, %v612
        %v934 = vunpack.c.l.s4 1983009808
        %v935 = vunpack.c.0.s8 %v934
        %v936 = vlaneseq
        %v937 = vshrl.u32 %v936, 7
        %v938 = vsub.s32 %v935, %v937
        %v939 = vrot.slane %v612, %v938
        %v941 = vunpack.c.l.s4 1983009808
        %v942 = vunpack.c.0.s8 %v941
        %v943 = vlaneseq
        %v944 = vshrl.u32 %v943, 7
        %v945 = vsub.s32 %v942, %v944
        %v946 = vrot.slane %v932, %v945
        %v947 = vcombine.high %v939, %v939
        %v948 = vcombine.high %v946, %v946
        %v949 = vcombine.high %v613, %v613
        %v951 = vunpack.c.l.s4 1983009808
        %v952 = vunpack.c.0.s8 %v951
        %v953 = vlaneseq
        %v954 = vshrl.u32 %v953, 7
        %v955 = vsub.s32 %v952, %v954
        %v956 = vrot.slane %v613, %v955
        %v958 = vunpack.c.l.s4 1983009808
        %v959 = vunpack.c.0.s8 %v958
        %v960 = vlaneseq
        %v961 = vshrl.u32 %v960, 7
        %v962 = vsub.s32 %v959, %v961
        %v963 = vrot.slane %v949, %v962
        %v964 = vcombine.high %v956, %v956
        %v965 = vcombine.high %v963, %v963
        %v966 = vcombine.high %v614, %v614
        %v968 = vunpack.c.l.s4 1983009808
        %v969 = vunpack.c.0.s8 %v968
        %v970 = vlaneseq
        %v971 = vshrl.u32 %v970, 7
        %v972 = vsub.s32 %v969, %v971
        %v973 = vrot.slane %v614, %v972
        %v975 = vunpack.c.l.s4 1983009808
        %v976 = vunpack.c.0.s8 %v975
        %v977 = vlaneseq
        %v978 = vshrl.u32 %v977, 7
        %v979 = vsub.s32 %v976, %v978
        %v980 = vrot.slane %v966, %v979
        %v981 = vcombine.high %v973, %v973
        %v982 = vcombine.high %v980, %v980
        %v983 = vcombine.high %v615, %v615
        %v985 = vunpack.c.l.s4 1983009808
        %v986 = vunpack.c.0.s8 %v985
        %v987 = vlaneseq
        %v988 = vshrl.u32 %v987, 7
        %v989 = vsub.s32 %v986, %v988
        %v990 = vrot.slane %v615, %v989
        %v992 = vunpack.c.l.s4 1983009808
        %v993 = vunpack.c.0.s8 %v992
        %v994 = vlaneseq
        %v995 = vshrl.u32 %v994, 7
        %v996 = vsub.s32 %v993, %v995
        %v997 = vrot.slane %v983, %v996
        %v998 = vcombine.high %v990, %v990
        %v999 = vcombine.high %v997, %v997
        %v1000 = vcombine.high %v616, %v616
        %v1002 = vunpack.c.l.s4 1983009808
        %v1003 = vunpack.c.0.s8 %v1002
        %v1004 = vlaneseq
        %v1005 = vshrl.u32 %v1004, 7
        %v1006 = vsub.s32 %v1003, %v1005
        %v1007 = vrot.slane %v616, %v1006
        %v1009 = vunpack.c.l.s4 1983009808
        %v1010 = vunpack.c.0.s8 %v1009
        %v1011 = vlaneseq
        %v1012 = vshrl.u32 %v1011, 7
        %v1013 = vsub.s32 %v1010, %v1012
        %v1014 = vrot.slane %v1000, %v1013
        %v1015 = vcombine.high %v1007, %v1007
        %v1016 = vcombine.high %v1014, %v1014
        %v1017 = vcombine.high %v617, %v617
        %v1019 = vunpack.c.l.s4 1983009808
        %v1020 = vunpack.c.0.s8 %v1019
        %v1021 = vlaneseq
        %v1022 = vshrl.u32 %v1021, 7
        %v1023 = vsub.s32 %v1020, %v1022
        %v1024 = vrot.slane %v617, %v1023
        %v1026 = vunpack.c.l.s4 1983009808
        %v1027 = vunpack.c.0.s8 %v1026
        %v1028 = vlaneseq
        %v1029 = vshrl.u32 %v1028, 7
        %v1030 = vsub.s32 %v1027, %v1029
        %v1031 = vrot.slane %v1017, %v1030
        %v1032 = vcombine.high %v1024, %v1024
        %v1033 = vcombine.high %v1031, %v1031
        %v1034 = vcombine.high %v618, %v618
        %v1036 = vunpack.c.l.s4 1983009808
        %v1037 = vunpack.c.0.s8 %v1036
        %v1038 = vlaneseq
        %v1039 = vshrl.u32 %v1038, 7
        %v1040 = vsub.s32 %v1037, %v1039
        %v1041 = vrot.slane %v618, %v1040
        %v1043 = vunpack.c.l.s4 1983009808
        %v1044 = vunpack.c.0.s8 %v1043
        %v1045 = vlaneseq
        %v1046 = vshrl.u32 %v1045, 7
        %v1047 = vsub.s32 %v1044, %v1046
        %v1048 = vrot.slane %v1034, %v1047
        %v1049 = vcombine.high %v1041, %v1041
        %v1050 = vcombine.high %v1048, %v1048
        %v1051 = vcombine.high %v619, %v619
        %v1053 = vunpack.c.l.s4 1983009808
        %v1054 = vunpack.c.0.s8 %v1053
        %v1055 = vlaneseq
        %v1056 = vshrl.u32 %v1055, 7
        %v1057 = vsub.s32 %v1054, %v1056
        %v1058 = vrot.slane %v619, %v1057
        %v1060 = vunpack.c.l.s4 1983009808
        %v1061 = vunpack.c.0.s8 %v1060
        %v1062 = vlaneseq
        %v1063 = vshrl.u32 %v1062, 7
        %v1064 = vsub.s32 %v1061, %v1063
        %v1065 = vrot.slane %v1051, %v1064
        %v1066 = vcombine.high %v1058, %v1058
        %v1067 = vcombine.high %v1065, %v1065
        %v1068 = vcombine.high %v620, %v620
        %v1070 = vunpack.c.l.s4 1983009808
        %v1071 = vunpack.c.0.s8 %v1070
        %v1072 = vlaneseq
        %v1073 = vshrl.u32 %v1072, 7
        %v1074 = vsub.s32 %v1071, %v1073
        %v1075 = vrot.slane %v620, %v1074
        %v1077 = vunpack.c.l.s4 1983009808
        %v1078 = vunpack.c.0.s8 %v1077
        %v1079 = vlaneseq
        %v1080 = vshrl.u32 %v1079, 7
        %v1081 = vsub.s32 %v1078, %v1080
        %v1082 = vrot.slane %v1068, %v1081
        %v1083 = vcombine.high %v1075, %v1075
        %v1084 = vcombine.high %v1082, %v1082
        %v1085 = vcombine.high %v621, %v621
        %v1087 = vunpack.c.l.s4 1983009808
        %v1088 = vunpack.c.0.s8 %v1087
        %v1089 = vlaneseq
        %v1090 = vshrl.u32 %v1089, 7
        %v1091 = vsub.s32 %v1088, %v1090
        %v1092 = vrot.slane %v621, %v1091
        %v1094 = vunpack.c.l.s4 1983009808
        %v1095 = vunpack.c.0.s8 %v1094
        %v1096 = vlaneseq
        %v1097 = vshrl.u32 %v1096, 7
        %v1098 = vsub.s32 %v1095, %v1097
        %v1099 = vrot.slane %v1085, %v1098
        %v1100 = vcombine.high %v1092, %v1092
        %v1101 = vcombine.high %v1099, %v1099
        %v1102 = vcombine.high %v622, %v622
        %v1104 = vunpack.c.l.s4 1983009808
        %v1105 = vunpack.c.0.s8 %v1104
        %v1106 = vlaneseq
        %v1107 = vshrl.u32 %v1106, 7
        %v1108 = vsub.s32 %v1105, %v1107
        %v1109 = vrot.slane %v622, %v1108
        %v1111 = vunpack.c.l.s4 1983009808
        %v1112 = vunpack.c.0.s8 %v1111
        %v1113 = vlaneseq
        %v1114 = vshrl.u32 %v1113, 7
        %v1115 = vsub.s32 %v1112, %v1114
        %v1116 = vrot.slane %v1102, %v1115
        %v1117 = vcombine.high %v1109, %v1109
        %v1118 = vcombine.high %v1116, %v1116
        %v1119 = vcombine.high %v623, %v623
        %v1121 = vunpack.c.l.s4 1983009808
        %v1122 = vunpack.c.0.s8 %v1121
        %v1123 = vlaneseq
        %v1124 = vshrl.u32 %v1123, 7
        %v1125 = vsub.s32 %v1122, %v1124
        %v1126 = vrot.slane %v623, %v1125
        %v1128 = vunpack.c.l.s4 1983009808
        %v1129 = vunpack.c.0.s8 %v1128
        %v1130 = vlaneseq
        %v1131 = vshrl.u32 %v1130, 7
        %v1132 = vsub.s32 %v1129, %v1131
        %v1133 = vrot.slane %v1119, %v1132
        %v1134 = vcombine.high %v1126, %v1126
        %v1135 = vcombine.high %v1133, %v1133
        %v1136 = vcombine.high %v624, %v624
        %v1138 = vunpack.c.l.s4 1983009808
        %v1139 = vunpack.c.0.s8 %v1138
        %v1140 = vlaneseq
        %v1141 = vshrl.u32 %v1140, 7
        %v1142 = vsub.s32 %v1139, %v1141
        %v1143 = vrot.slane %v624, %v1142
        %v1145 = vunpack.c.l.s4 1983009808
        %v1146 = vunpack.c.0.s8 %v1145
        %v1147 = vlaneseq
        %v1148 = vshrl.u32 %v1147, 7
        %v1149 = vsub.s32 %v1146, %v1148
        %v1150 = vrot.slane %v1136, %v1149
        %v1151 = vcombine.high %v1143, %v1143
        %v1152 = vcombine.high %v1150, %v1150
        %v1153 = vcombine.high %v625, %v625
        %v1155 = vunpack.c.l.s4 1983009808
        %v1156 = vunpack.c.0.s8 %v1155
        %v1157 = vlaneseq
        %v1158 = vshrl.u32 %v1157, 7
        %v1159 = vsub.s32 %v1156, %v1158
        %v1160 = vrot.slane %v625, %v1159
        %v1162 = vunpack.c.l.s4 1983009808
        %v1163 = vunpack.c.0.s8 %v1162
        %v1164 = vlaneseq
        %v1165 = vshrl.u32 %v1164, 7
        %v1166 = vsub.s32 %v1163, %v1165
        %v1167 = vrot.slane %v1153, %v1166
        %v1168 = vcombine.high %v1160, %v1160
        %v1169 = vcombine.high %v1167, %v1167
        %v1170 = vcombine.high %v626, %v626
        %v1172 = vunpack.c.l.s4 1983009808
        %v1173 = vunpack.c.0.s8 %v1172
        %v1174 = vlaneseq
        %v1175 = vshrl.u32 %v1174, 7
        %v1176 = vsub.s32 %v1173, %v1175
        %v1177 = vrot.slane %v626, %v1176
        %v1179 = vunpack.c.l.s4 1983009808
        %v1180 = vunpack.c.0.s8 %v1179
        %v1181 = vlaneseq
        %v1182 = vshrl.u32 %v1181, 7
        %v1183 = vsub.s32 %v1180, %v1182
        %v1184 = vrot.slane %v1170, %v1183
        %v1185 = vcombine.high %v1177, %v1177
        %v1186 = vcombine.high %v1184, %v1184
        %v1187 = vcombine.high %v627, %v627
        %v1189 = vunpack.c.l.s4 1983009808
        %v1190 = vunpack.c.0.s8 %v1189
        %v1191 = vlaneseq
        %v1192 = vshrl.u32 %v1191, 7
        %v1193 = vsub.s32 %v1190, %v1192
        %v1194 = vrot.slane %v627, %v1193
        %v1196 = vunpack.c.l.s4 1983009808
        %v1197 = vunpack.c.0.s8 %v1196
        %v1198 = vlaneseq
        %v1199 = vshrl.u32 %v1198, 7
        %v1200 = vsub.s32 %v1197, %v1199
        %v1201 = vrot.slane %v1187, %v1200
        %v1202 = vcombine.high %v1194, %v1194
        %v1203 = vcombine.high %v1201, %v1201
        %vm1332 = vcmask 517120
        %v1333 = vsel %vm1332, %v667, -inf
        %v1334 = vrot.slane %v1333, 4
        %v1335 = vmax.f32 %v1333, %v1334
        %v1336 = vrot.slane %v1335, 2
        %v1337 = vmax.f32 %v1335, %v1336
        %v1338 = vrot.slane %v1337, 1
        %v1339 = vmax.f32 %v1337, %v1338
        %v1340 = vsel %vm1332, %v675, -inf
        %v1341 = vrot.slane %v1340, 4
        %v1342 = vmax.f32 %v1340, %v1341
        %v1343 = vrot.slane %v1342, 2
        %v1344 = vmax.f32 %v1342, %v1343
        %v1345 = vrot.slane %v1344, 1
        %v1346 = vmax.f32 %v1344, %v1345
        %v1347 = vsel %vm1332, %v674, -inf
        %v1348 = vrot.slane %v1347, 4
        %v1349 = vmax.f32 %v1347, %v1348
        %v1350 = vrot.slane %v1349, 2
        %v1351 = vmax.f32 %v1349, %v1350
        %v1352 = vrot.slane %v1351, 1
        %v1353 = vmax.f32 %v1351, %v1352
        %v1354 = vsel %vm1332, %v676, -inf
        %v1355 = vrot.slane %v1354, 4
        %v1356 = vmax.f32 %v1354, %v1355
        %v1357 = vrot.slane %v1356, 2
        %v1358 = vmax.f32 %v1356, %v1357
        %v1359 = vrot.slane %v1358, 1
        %v1360 = vmax.f32 %v1358, %v1359
        %v1361 = vsel %vm1332, %v684, -inf
        %v1362 = vrot.slane %v1361, 4
        %v1363 = vmax.f32 %v1361, %v1362
        %v1364 = vrot.slane %v1363, 2
        %v1365 = vmax.f32 %v1363, %v1364
        %v1366 = vrot.slane %v1365, 1
        %v1367 = vmax.f32 %v1365, %v1366
        %v1368 = vsel %vm1332, %v692, -inf
        %v1369 = vrot.slane %v1368, 4
        %v1370 = vmax.f32 %v1368, %v1369
        %v1371 = vrot.slane %v1370, 2
        %v1372 = vmax.f32 %v1370, %v1371
        %v1373 = vrot.slane %v1372, 1
        %v1374 = vmax.f32 %v1372, %v1373
        %v1375 = vsel %vm1332, %v691, -inf
        %v1376 = vrot.slane %v1375, 4
        %v1377 = vmax.f32 %v1375, %v1376
        %v1378 = vrot.slane %v1377, 2
        %v1379 = vmax.f32 %v1377, %v1378
        %v1380 = vrot.slane %v1379, 1
        %v1381 = vmax.f32 %v1379, %v1380
        %v1382 = vsel %vm1332, %v693, -inf
        %v1383 = vrot.slane %v1382, 4
        %v1384 = vmax.f32 %v1382, %v1383
        %v1385 = vrot.slane %v1384, 2
        %v1386 = vmax.f32 %v1384, %v1385
        %v1387 = vrot.slane %v1386, 1
        %v1388 = vmax.f32 %v1386, %v1387
        %v1389 = vsel %vm1332, %v701, -inf
        %v1390 = vrot.slane %v1389, 4
        %v1391 = vmax.f32 %v1389, %v1390
        %v1392 = vrot.slane %v1391, 2
        %v1393 = vmax.f32 %v1391, %v1392
        %v1394 = vrot.slane %v1393, 1
        %v1395 = vmax.f32 %v1393, %v1394
        %v1396 = vsel %vm1332, %v709, -inf
        %v1397 = vrot.slane %v1396, 4
        %v1398 = vmax.f32 %v1396, %v1397
        %v1399 = vrot.slane %v1398, 2
        %v1400 = vmax.f32 %v1398, %v1399
        %v1401 = vrot.slane %v1400, 1
        %v1402 = vmax.f32 %v1400, %v1401
        %v1403 = vsel %vm1332, %v708, -inf
        %v1404 = vrot.slane %v1403, 4
        %v1405 = vmax.f32 %v1403, %v1404
        %v1406 = vrot.slane %v1405, 2
        %v1407 = vmax.f32 %v1405, %v1406
        %v1408 = vrot.slane %v1407, 1
        %v1409 = vmax.f32 %v1407, %v1408
        %v1410 = vsel %vm1332, %v710, -inf
        %v1411 = vrot.slane %v1410, 4
        %v1412 = vmax.f32 %v1410, %v1411
        %v1413 = vrot.slane %v1412, 2
        %v1414 = vmax.f32 %v1412, %v1413
        %v1415 = vrot.slane %v1414, 1
        %v1416 = vmax.f32 %v1414, %v1415
        %v1417 = vsel %vm1332, %v718, -inf
        %v1418 = vrot.slane %v1417, 4
        %v1419 = vmax.f32 %v1417, %v1418
        %v1420 = vrot.slane %v1419, 2
        %v1421 = vmax.f32 %v1419, %v1420
        %v1422 = vrot.slane %v1421, 1
        %v1423 = vmax.f32 %v1421, %v1422
        %v1424 = vsel %vm1332, %v726, -inf
        %v1425 = vrot.slane %v1424, 4
        %v1426 = vmax.f32 %v1424, %v1425
        %v1427 = vrot.slane %v1426, 2
        %v1428 = vmax.f32 %v1426, %v1427
        %v1429 = vrot.slane %v1428, 1
        %v1430 = vmax.f32 %v1428, %v1429
        %v1431 = vsel %vm1332, %v725, -inf
        %v1432 = vrot.slane %v1431, 4
        %v1433 = vmax.f32 %v1431, %v1432
        %v1434 = vrot.slane %v1433, 2
        %v1435 = vmax.f32 %v1433, %v1434
        %v1436 = vrot.slane %v1435, 1
        %v1437 = vmax.f32 %v1435, %v1436
        %v1438 = vsel %vm1332, %v727, -inf
        %v1439 = vrot.slane %v1438, 4
        %v1440 = vmax.f32 %v1438, %v1439
        %v1441 = vrot.slane %v1440, 2
        %v1442 = vmax.f32 %v1440, %v1441
        %v1443 = vrot.slane %v1442, 1
        %v1444 = vmax.f32 %v1442, %v1443
        %v1445 = vsel %vm1332, %v735, -inf
        %v1446 = vrot.slane %v1445, 4
        %v1447 = vmax.f32 %v1445, %v1446
        %v1448 = vrot.slane %v1447, 2
        %v1449 = vmax.f32 %v1447, %v1448
        %v1450 = vrot.slane %v1449, 1
        %v1451 = vmax.f32 %v1449, %v1450
        %v1452 = vsel %vm1332, %v743, -inf
        %v1453 = vrot.slane %v1452, 4
        %v1454 = vmax.f32 %v1452, %v1453
        %v1455 = vrot.slane %v1454, 2
        %v1456 = vmax.f32 %v1454, %v1455
        %v1457 = vrot.slane %v1456, 1
        %v1458 = vmax.f32 %v1456, %v1457
        %v1459 = vsel %vm1332, %v742, -inf
        %v1460 = vrot.slane %v1459, 4
        %v1461 = vmax.f32 %v1459, %v1460
        %v1462 = vrot.slane %v1461, 2
        %v1463 = vmax.f32 %v1461, %v1462
        %v1464 = vrot.slane %v1463, 1
        %v1465 = vmax.f32 %v1463, %v1464
        %v1466 = vsel %vm1332, %v744, -inf
        %v1467 = vrot.slane %v1466, 4
        %v1468 = vmax.f32 %v1466, %v1467
        %v1469 = vrot.slane %v1468, 2
        %v1470 = vmax.f32 %v1468, %v1469
        %v1471 = vrot.slane %v1470, 1
        %v1472 = vmax.f32 %v1470, %v1471
        %v1473 = vsel %vm1332, %v752, -inf
        %v1474 = vrot.slane %v1473, 4
        %v1475 = vmax.f32 %v1473, %v1474
        %v1476 = vrot.slane %v1475, 2
        %v1477 = vmax.f32 %v1475, %v1476
        %v1478 = vrot.slane %v1477, 1
        %v1479 = vmax.f32 %v1477, %v1478
        %v1480 = vsel %vm1332, %v760, -inf
        %v1481 = vrot.slane %v1480, 4
        %v1482 = vmax.f32 %v1480, %v1481
        %v1483 = vrot.slane %v1482, 2
        %v1484 = vmax.f32 %v1482, %v1483
        %v1485 = vrot.slane %v1484, 1
        %v1486 = vmax.f32 %v1484, %v1485
        %v1487 = vsel %vm1332, %v759, -inf
        %v1488 = vrot.slane %v1487, 4
        %v1489 = vmax.f32 %v1487, %v1488
        %v1490 = vrot.slane %v1489, 2
        %v1491 = vmax.f32 %v1489, %v1490
        %v1492 = vrot.slane %v1491, 1
        %v1493 = vmax.f32 %v1491, %v1492
        %v1494 = vsel %vm1332, %v761, -inf
        %v1495 = vrot.slane %v1494, 4
        %v1496 = vmax.f32 %v1494, %v1495
        %v1497 = vrot.slane %v1496, 2
        %v1498 = vmax.f32 %v1496, %v1497
        %v1499 = vrot.slane %v1498, 1
        %v1500 = vmax.f32 %v1498, %v1499
        %v1501 = vsel %vm1332, %v769, -inf
        %v1502 = vrot.slane %v1501, 4
        %v1503 = vmax.f32 %v1501, %v1502
        %v1504 = vrot.slane %v1503, 2
        %v1505 = vmax.f32 %v1503, %v1504
        %v1506 = vrot.slane %v1505, 1
        %v1507 = vmax.f32 %v1505, %v1506
        %v1508 = vsel %vm1332, %v777, -inf
        %v1509 = vrot.slane %v1508, 4
        %v1510 = vmax.f32 %v1508, %v1509
        %v1511 = vrot.slane %v1510, 2
        %v1512 = vmax.f32 %v1510, %v1511
        %v1513 = vrot.slane %v1512, 1
        %v1514 = vmax.f32 %v1512, %v1513
        %v1515 = vsel %vm1332, %v776, -inf
        %v1516 = vrot.slane %v1515, 4
        %v1517 = vmax.f32 %v1515, %v1516
        %v1518 = vrot.slane %v1517, 2
        %v1519 = vmax.f32 %v1517, %v1518
        %v1520 = vrot.slane %v1519, 1
        %v1521 = vmax.f32 %v1519, %v1520
        %v1522 = vsel %vm1332, %v778, -inf
        %v1523 = vrot.slane %v1522, 4
        %v1524 = vmax.f32 %v1522, %v1523
        %v1525 = vrot.slane %v1524, 2
        %v1526 = vmax.f32 %v1524, %v1525
        %v1527 = vrot.slane %v1526, 1
        %v1528 = vmax.f32 %v1526, %v1527
        %v1529 = vsel %vm1332, %v786, -inf
        %v1530 = vrot.slane %v1529, 4
        %v1531 = vmax.f32 %v1529, %v1530
        %v1532 = vrot.slane %v1531, 2
        %v1533 = vmax.f32 %v1531, %v1532
        %v1534 = vrot.slane %v1533, 1
        %v1535 = vmax.f32 %v1533, %v1534
        %v1536 = vsel %vm1332, %v794, -inf
        %v1537 = vrot.slane %v1536, 4
        %v1538 = vmax.f32 %v1536, %v1537
        %v1539 = vrot.slane %v1538, 2
        %v1540 = vmax.f32 %v1538, %v1539
        %v1541 = vrot.slane %v1540, 1
        %v1542 = vmax.f32 %v1540, %v1541
        %v1543 = vsel %vm1332, %v793, -inf
        %v1544 = vrot.slane %v1543, 4
        %v1545 = vmax.f32 %v1543, %v1544
        %v1546 = vrot.slane %v1545, 2
        %v1547 = vmax.f32 %v1545, %v1546
        %v1548 = vrot.slane %v1547, 1
        %v1549 = vmax.f32 %v1547, %v1548
        %v1550 = vsel %vm1332, %v795, -inf
        %v1551 = vrot.slane %v1550, 4
        %v1552 = vmax.f32 %v1550, %v1551
        %v1553 = vrot.slane %v1552, 2
        %v1554 = vmax.f32 %v1552, %v1553
        %v1555 = vrot.slane %v1554, 1
        %v1556 = vmax.f32 %v1554, %v1555
        %v1557 = vsel %vm1332, %v803, -inf
        %v1558 = vrot.slane %v1557, 4
        %v1559 = vmax.f32 %v1557, %v1558
        %v1560 = vrot.slane %v1559, 2
        %v1561 = vmax.f32 %v1559, %v1560
        %v1562 = vrot.slane %v1561, 1
        %v1563 = vmax.f32 %v1561, %v1562
        %v1564 = vsel %vm1332, %v811, -inf
        %v1565 = vrot.slane %v1564, 4
        %v1566 = vmax.f32 %v1564, %v1565
        %v1567 = vrot.slane %v1566, 2
        %v1568 = vmax.f32 %v1566, %v1567
        %v1569 = vrot.slane %v1568, 1
        %v1570 = vmax.f32 %v1568, %v1569
        %v1571 = vsel %vm1332, %v810, -inf
        %v1572 = vrot.slane %v1571, 4
        %v1573 = vmax.f32 %v1571, %v1572
        %v1574 = vrot.slane %v1573, 2
        %v1575 = vmax.f32 %v1573, %v1574
        %v1576 = vrot.slane %v1575, 1
        %v1577 = vmax.f32 %v1575, %v1576
        %v1578 = vsel %vm1332, %v812, -inf
        %v1579 = vrot.slane %v1578, 4
        %v1580 = vmax.f32 %v1578, %v1579
        %v1581 = vrot.slane %v1580, 2
        %v1582 = vmax.f32 %v1580, %v1581
        %v1583 = vrot.slane %v1582, 1
        %v1584 = vmax.f32 %v1582, %v1583
        %v1585 = vsel %vm1332, %v820, -inf
        %v1586 = vrot.slane %v1585, 4
        %v1587 = vmax.f32 %v1585, %v1586
        %v1588 = vrot.slane %v1587, 2
        %v1589 = vmax.f32 %v1587, %v1588
        %v1590 = vrot.slane %v1589, 1
        %v1591 = vmax.f32 %v1589, %v1590
        %v1592 = vsel %vm1332, %v828, -inf
        %v1593 = vrot.slane %v1592, 4
        %v1594 = vmax.f32 %v1592, %v1593
        %v1595 = vrot.slane %v1594, 2
        %v1596 = vmax.f32 %v1594, %v1595
        %v1597 = vrot.slane %v1596, 1
        %v1598 = vmax.f32 %v1596, %v1597
        %v1599 = vsel %vm1332, %v827, -inf
        %v1600 = vrot.slane %v1599, 4
        %v1601 = vmax.f32 %v1599, %v1600
        %v1602 = vrot.slane %v1601, 2
        %v1603 = vmax.f32 %v1601, %v1602
        %v1604 = vrot.slane %v1603, 1
        %v1605 = vmax.f32 %v1603, %v1604
        %v1606 = vsel %vm1332, %v829, -inf
        %v1607 = vrot.slane %v1606, 4
        %v1608 = vmax.f32 %v1606, %v1607
        %v1609 = vrot.slane %v1608, 2
        %v1610 = vmax.f32 %v1608, %v1609
        %v1611 = vrot.slane %v1610, 1
        %v1612 = vmax.f32 %v1610, %v1611
        %v1613 = vsel %vm1332, %v837, -inf
        %v1614 = vrot.slane %v1613, 4
        %v1615 = vmax.f32 %v1613, %v1614
        %v1616 = vrot.slane %v1615, 2
        %v1617 = vmax.f32 %v1615, %v1616
        %v1618 = vrot.slane %v1617, 1
        %v1619 = vmax.f32 %v1617, %v1618
        %v1620 = vsel %vm1332, %v845, -inf
        %v1621 = vrot.slane %v1620, 4
        %v1622 = vmax.f32 %v1620, %v1621
        %v1623 = vrot.slane %v1622, 2
        %v1624 = vmax.f32 %v1622, %v1623
        %v1625 = vrot.slane %v1624, 1
        %v1626 = vmax.f32 %v1624, %v1625
        %v1627 = vsel %vm1332, %v844, -inf
        %v1628 = vrot.slane %v1627, 4
        %v1629 = vmax.f32 %v1627, %v1628
        %v1630 = vrot.slane %v1629, 2
        %v1631 = vmax.f32 %v1629, %v1630
        %v1632 = vrot.slane %v1631, 1
        %v1633 = vmax.f32 %v1631, %v1632
        %v1634 = vsel %vm1332, %v846, -inf
        %v1635 = vrot.slane %v1634, 4
        %v1636 = vmax.f32 %v1634, %v1635
        %v1637 = vrot.slane %v1636, 2
        %v1638 = vmax.f32 %v1636, %v1637
        %v1639 = vrot.slane %v1638, 1
        %v1640 = vmax.f32 %v1638, %v1639
        %v1641 = vsel %vm1332, %v854, -inf
        %v1642 = vrot.slane %v1641, 4
        %v1643 = vmax.f32 %v1641, %v1642
        %v1644 = vrot.slane %v1643, 2
        %v1645 = vmax.f32 %v1643, %v1644
        %v1646 = vrot.slane %v1645, 1
        %v1647 = vmax.f32 %v1645, %v1646
        %v1648 = vsel %vm1332, %v862, -inf
        %v1649 = vrot.slane %v1648, 4
        %v1650 = vmax.f32 %v1648, %v1649
        %v1651 = vrot.slane %v1650, 2
        %v1652 = vmax.f32 %v1650, %v1651
        %v1653 = vrot.slane %v1652, 1
        %v1654 = vmax.f32 %v1652, %v1653
        %v1655 = vsel %vm1332, %v861, -inf
        %v1656 = vrot.slane %v1655, 4
        %v1657 = vmax.f32 %v1655, %v1656
        %v1658 = vrot.slane %v1657, 2
        %v1659 = vmax.f32 %v1657, %v1658
        %v1660 = vrot.slane %v1659, 1
        %v1661 = vmax.f32 %v1659, %v1660
        %v1662 = vsel %vm1332, %v863, -inf
        %v1663 = vrot.slane %v1662, 4
        %v1664 = vmax.f32 %v1662, %v1663
        %v1665 = vrot.slane %v1664, 2
        %v1666 = vmax.f32 %v1664, %v1665
        %v1667 = vrot.slane %v1666, 1
        %v1668 = vmax.f32 %v1666, %v1667
        %v1669 = vsel %vm1332, %v871, -inf
        %v1670 = vrot.slane %v1669, 4
        %v1671 = vmax.f32 %v1669, %v1670
        %v1672 = vrot.slane %v1671, 2
        %v1673 = vmax.f32 %v1671, %v1672
        %v1674 = vrot.slane %v1673, 1
        %v1675 = vmax.f32 %v1673, %v1674
        %v1676 = vsel %vm1332, %v879, -inf
        %v1677 = vrot.slane %v1676, 4
        %v1678 = vmax.f32 %v1676, %v1677
        %v1679 = vrot.slane %v1678, 2
        %v1680 = vmax.f32 %v1678, %v1679
        %v1681 = vrot.slane %v1680, 1
        %v1682 = vmax.f32 %v1680, %v1681
        %v1683 = vsel %vm1332, %v878, -inf
        %v1684 = vrot.slane %v1683, 4
        %v1685 = vmax.f32 %v1683, %v1684
        %v1686 = vrot.slane %v1685, 2
        %v1687 = vmax.f32 %v1685, %v1686
        %v1688 = vrot.slane %v1687, 1
        %v1689 = vmax.f32 %v1687, %v1688
        %v1690 = vsel %vm1332, %v880, -inf
        %v1691 = vrot.slane %v1690, 4
        %v1692 = vmax.f32 %v1690, %v1691
        %v1693 = vrot.slane %v1692, 2
        %v1694 = vmax.f32 %v1692, %v1693
        %v1695 = vrot.slane %v1694, 1
        %v1696 = vmax.f32 %v1694, %v1695
        %v1697 = vsel %vm1332, %v888, -inf
        %v1698 = vrot.slane %v1697, 4
        %v1699 = vmax.f32 %v1697, %v1698
        %v1700 = vrot.slane %v1699, 2
        %v1701 = vmax.f32 %v1699, %v1700
        %v1702 = vrot.slane %v1701, 1
        %v1703 = vmax.f32 %v1701, %v1702
        %v1704 = vsel %vm1332, %v896, -inf
        %v1705 = vrot.slane %v1704, 4
        %v1706 = vmax.f32 %v1704, %v1705
        %v1707 = vrot.slane %v1706, 2
        %v1708 = vmax.f32 %v1706, %v1707
        %v1709 = vrot.slane %v1708, 1
        %v1710 = vmax.f32 %v1708, %v1709
        %v1711 = vsel %vm1332, %v895, -inf
        %v1712 = vrot.slane %v1711, 4
        %v1713 = vmax.f32 %v1711, %v1712
        %v1714 = vrot.slane %v1713, 2
        %v1715 = vmax.f32 %v1713, %v1714
        %v1716 = vrot.slane %v1715, 1
        %v1717 = vmax.f32 %v1715, %v1716
        %v1718 = vsel %vm1332, %v897, -inf
        %v1719 = vrot.slane %v1718, 4
        %v1720 = vmax.f32 %v1718, %v1719
        %v1721 = vrot.slane %v1720, 2
        %v1722 = vmax.f32 %v1720, %v1721
        %v1723 = vrot.slane %v1722, 1
        %v1724 = vmax.f32 %v1722, %v1723
        %v1725 = vsel %vm1332, %v905, -inf
        %v1726 = vrot.slane %v1725, 4
        %v1727 = vmax.f32 %v1725, %v1726
        %v1728 = vrot.slane %v1727, 2
        %v1729 = vmax.f32 %v1727, %v1728
        %v1730 = vrot.slane %v1729, 1
        %v1731 = vmax.f32 %v1729, %v1730
        %v1732 = vsel %vm1332, %v913, -inf
        %v1733 = vrot.slane %v1732, 4
        %v1734 = vmax.f32 %v1732, %v1733
        %v1735 = vrot.slane %v1734, 2
        %v1736 = vmax.f32 %v1734, %v1735
        %v1737 = vrot.slane %v1736, 1
        %v1738 = vmax.f32 %v1736, %v1737
        %v1739 = vsel %vm1332, %v912, -inf
        %v1740 = vrot.slane %v1739, 4
        %v1741 = vmax.f32 %v1739, %v1740
        %v1742 = vrot.slane %v1741, 2
        %v1743 = vmax.f32 %v1741, %v1742
        %v1744 = vrot.slane %v1743, 1
        %v1745 = vmax.f32 %v1743, %v1744
        %v1746 = vsel %vm1332, %v914, -inf
        %v1747 = vrot.slane %v1746, 4
        %v1748 = vmax.f32 %v1746, %v1747
        %v1749 = vrot.slane %v1748, 2
        %v1750 = vmax.f32 %v1748, %v1749
        %v1751 = vrot.slane %v1750, 1
        %v1752 = vmax.f32 %v1750, %v1751
        %v1753 = vsel %vm1332, %v922, -inf
        %v1754 = vrot.slane %v1753, 4
        %v1755 = vmax.f32 %v1753, %v1754
        %v1756 = vrot.slane %v1755, 2
        %v1757 = vmax.f32 %v1755, %v1756
        %v1758 = vrot.slane %v1757, 1
        %v1759 = vmax.f32 %v1757, %v1758
        %v1760 = vsel %vm1332, %v930, -inf
        %v1761 = vrot.slane %v1760, 4
        %v1762 = vmax.f32 %v1760, %v1761
        %v1763 = vrot.slane %v1762, 2
        %v1764 = vmax.f32 %v1762, %v1763
        %v1765 = vrot.slane %v1764, 1
        %v1766 = vmax.f32 %v1764, %v1765
        %v1767 = vsel %vm1332, %v929, -inf
        %v1768 = vrot.slane %v1767, 4
        %v1769 = vmax.f32 %v1767, %v1768
        %v1770 = vrot.slane %v1769, 2
        %v1771 = vmax.f32 %v1769, %v1770
        %v1772 = vrot.slane %v1771, 1
        %v1773 = vmax.f32 %v1771, %v1772
        %v1774 = vsel %vm1332, %v931, -inf
        %v1775 = vrot.slane %v1774, 4
        %v1776 = vmax.f32 %v1774, %v1775
        %v1777 = vrot.slane %v1776, 2
        %v1778 = vmax.f32 %v1776, %v1777
        %v1779 = vrot.slane %v1778, 1
        %v1780 = vmax.f32 %v1778, %v1779
        %v1781 = vsel %vm1332, %v939, -inf
        %v1782 = vrot.slane %v1781, 4
        %v1783 = vmax.f32 %v1781, %v1782
        %v1784 = vrot.slane %v1783, 2
        %v1785 = vmax.f32 %v1783, %v1784
        %v1786 = vrot.slane %v1785, 1
        %v1787 = vmax.f32 %v1785, %v1786
        %v1788 = vsel %vm1332, %v947, -inf
        %v1789 = vrot.slane %v1788, 4
        %v1790 = vmax.f32 %v1788, %v1789
        %v1791 = vrot.slane %v1790, 2
        %v1792 = vmax.f32 %v1790, %v1791
        %v1793 = vrot.slane %v1792, 1
        %v1794 = vmax.f32 %v1792, %v1793
        %v1795 = vsel %vm1332, %v946, -inf
        %v1796 = vrot.slane %v1795, 4
        %v1797 = vmax.f32 %v1795, %v1796
        %v1798 = vrot.slane %v1797, 2
        %v1799 = vmax.f32 %v1797, %v1798
        %v1800 = vrot.slane %v1799, 1
        %v1801 = vmax.f32 %v1799, %v1800
        %v1802 = vsel %vm1332, %v948, -inf
        %v1803 = vrot.slane %v1802, 4
        %v1804 = vmax.f32 %v1802, %v1803
        %v1805 = vrot.slane %v1804, 2
        %v1806 = vmax.f32 %v1804, %v1805
        %v1807 = vrot.slane %v1806, 1
        %v1808 = vmax.f32 %v1806, %v1807
        %v1809 = vsel %vm1332, %v956, -inf
        %v1810 = vrot.slane %v1809, 4
        %v1811 = vmax.f32 %v1809, %v1810
        %v1812 = vrot.slane %v1811, 2
        %v1813 = vmax.f32 %v1811, %v1812
        %v1814 = vrot.slane %v1813, 1
        %v1815 = vmax.f32 %v1813, %v1814
        %v1816 = vsel %vm1332, %v964, -inf
        %v1817 = vrot.slane %v1816, 4
        %v1818 = vmax.f32 %v1816, %v1817
        %v1819 = vrot.slane %v1818, 2
        %v1820 = vmax.f32 %v1818, %v1819
        %v1821 = vrot.slane %v1820, 1
        %v1822 = vmax.f32 %v1820, %v1821
        %v1823 = vsel %vm1332, %v963, -inf
        %v1824 = vrot.slane %v1823, 4
        %v1825 = vmax.f32 %v1823, %v1824
        %v1826 = vrot.slane %v1825, 2
        %v1827 = vmax.f32 %v1825, %v1826
        %v1828 = vrot.slane %v1827, 1
        %v1829 = vmax.f32 %v1827, %v1828
        %v1830 = vsel %vm1332, %v965, -inf
        %v1831 = vrot.slane %v1830, 4
        %v1832 = vmax.f32 %v1830, %v1831
        %v1833 = vrot.slane %v1832, 2
        %v1834 = vmax.f32 %v1832, %v1833
        %v1835 = vrot.slane %v1834, 1
        %v1836 = vmax.f32 %v1834, %v1835
        %v1837 = vsel %vm1332, %v973, -inf
        %v1838 = vrot.slane %v1837, 4
        %v1839 = vmax.f32 %v1837, %v1838
        %v1840 = vrot.slane %v1839, 2
        %v1841 = vmax.f32 %v1839, %v1840
        %v1842 = vrot.slane %v1841, 1
        %v1843 = vmax.f32 %v1841, %v1842
        %v1844 = vsel %vm1332, %v981, -inf
        %v1845 = vrot.slane %v1844, 4
        %v1846 = vmax.f32 %v1844, %v1845
        %v1847 = vrot.slane %v1846, 2
        %v1848 = vmax.f32 %v1846, %v1847
        %v1849 = vrot.slane %v1848, 1
        %v1850 = vmax.f32 %v1848, %v1849
        %v1851 = vsel %vm1332, %v980, -inf
        %v1852 = vrot.slane %v1851, 4
        %v1853 = vmax.f32 %v1851, %v1852
        %v1854 = vrot.slane %v1853, 2
        %v1855 = vmax.f32 %v1853, %v1854
        %v1856 = vrot.slane %v1855, 1
        %v1857 = vmax.f32 %v1855, %v1856
        %v1858 = vsel %vm1332, %v982, -inf
        %v1859 = vrot.slane %v1858, 4
        %v1860 = vmax.f32 %v1858, %v1859
        %v1861 = vrot.slane %v1860, 2
        %v1862 = vmax.f32 %v1860, %v1861
        %v1863 = vrot.slane %v1862, 1
        %v1864 = vmax.f32 %v1862, %v1863
        %v1865 = vsel %vm1332, %v990, -inf
        %v1866 = vrot.slane %v1865, 4
        %v1867 = vmax.f32 %v1865, %v1866
        %v1868 = vrot.slane %v1867, 2
        %v1869 = vmax.f32 %v1867, %v1868
        %v1870 = vrot.slane %v1869, 1
        %v1871 = vmax.f32 %v1869, %v1870
        %v1872 = vsel %vm1332, %v998, -inf
        %v1873 = vrot.slane %v1872, 4
        %v1874 = vmax.f32 %v1872, %v1873
        %v1875 = vrot.slane %v1874, 2
        %v1876 = vmax.f32 %v1874, %v1875
        %v1877 = vrot.slane %v1876, 1
        %v1878 = vmax.f32 %v1876, %v1877
        %v1879 = vsel %vm1332, %v997, -inf
        %v1880 = vrot.slane %v1879, 4
        %v1881 = vmax.f32 %v1879, %v1880
        %v1882 = vrot.slane %v1881, 2
        %v1883 = vmax.f32 %v1881, %v1882
        %v1884 = vrot.slane %v1883, 1
        %v1885 = vmax.f32 %v1883, %v1884
        %v1886 = vsel %vm1332, %v999, -inf
        %v1887 = vrot.slane %v1886, 4
        %v1888 = vmax.f32 %v1886, %v1887
        %v1889 = vrot.slane %v1888, 2
        %v1890 = vmax.f32 %v1888, %v1889
        %v1891 = vrot.slane %v1890, 1
        %v1892 = vmax.f32 %v1890, %v1891
        %v1893 = vsel %vm1332, %v1007, -inf
        %v1894 = vrot.slane %v1893, 4
        %v1895 = vmax.f32 %v1893, %v1894
        %v1896 = vrot.slane %v1895, 2
        %v1897 = vmax.f32 %v1895, %v1896
        %v1898 = vrot.slane %v1897, 1
        %v1899 = vmax.f32 %v1897, %v1898
        %v1900 = vsel %vm1332, %v1015, -inf
        %v1901 = vrot.slane %v1900, 4
        %v1902 = vmax.f32 %v1900, %v1901
        %v1903 = vrot.slane %v1902, 2
        %v1904 = vmax.f32 %v1902, %v1903
        %v1905 = vrot.slane %v1904, 1
        %v1906 = vmax.f32 %v1904, %v1905
        %v1907 = vsel %vm1332, %v1014, -inf
        %v1908 = vrot.slane %v1907, 4
        %v1909 = vmax.f32 %v1907, %v1908
        %v1910 = vrot.slane %v1909, 2
        %v1911 = vmax.f32 %v1909, %v1910
        %v1912 = vrot.slane %v1911, 1
        %v1913 = vmax.f32 %v1911, %v1912
        %v1914 = vsel %vm1332, %v1016, -inf
        %v1915 = vrot.slane %v1914, 4
        %v1916 = vmax.f32 %v1914, %v1915
        %v1917 = vrot.slane %v1916, 2
        %v1918 = vmax.f32 %v1916, %v1917
        %v1919 = vrot.slane %v1918, 1
        %v1920 = vmax.f32 %v1918, %v1919
        %v1921 = vsel %vm1332, %v1024, -inf
        %v1922 = vrot.slane %v1921, 4
        %v1923 = vmax.f32 %v1921, %v1922
        %v1924 = vrot.slane %v1923, 2
        %v1925 = vmax.f32 %v1923, %v1924
        %v1926 = vrot.slane %v1925, 1
        %v1927 = vmax.f32 %v1925, %v1926
        %v1928 = vsel %vm1332, %v1032, -inf
        %v1929 = vrot.slane %v1928, 4
        %v1930 = vmax.f32 %v1928, %v1929
        %v1931 = vrot.slane %v1930, 2
        %v1932 = vmax.f32 %v1930, %v1931
        %v1933 = vrot.slane %v1932, 1
        %v1934 = vmax.f32 %v1932, %v1933
        %v1935 = vsel %vm1332, %v1031, -inf
        %v1936 = vrot.slane %v1935, 4
        %v1937 = vmax.f32 %v1935, %v1936
        %v1938 = vrot.slane %v1937, 2
        %v1939 = vmax.f32 %v1937, %v1938
        %v1940 = vrot.slane %v1939, 1
        %v1941 = vmax.f32 %v1939, %v1940
        %v1942 = vsel %vm1332, %v1033, -inf
        %v1943 = vrot.slane %v1942, 4
        %v1944 = vmax.f32 %v1942, %v1943
        %v1945 = vrot.slane %v1944, 2
        %v1946 = vmax.f32 %v1944, %v1945
        %v1947 = vrot.slane %v1946, 1
        %v1948 = vmax.f32 %v1946, %v1947
        %v1949 = vsel %vm1332, %v1041, -inf
        %v1950 = vrot.slane %v1949, 4
        %v1951 = vmax.f32 %v1949, %v1950
        %v1952 = vrot.slane %v1951, 2
        %v1953 = vmax.f32 %v1951, %v1952
        %v1954 = vrot.slane %v1953, 1
        %v1955 = vmax.f32 %v1953, %v1954
        %v1956 = vsel %vm1332, %v1049, -inf
        %v1957 = vrot.slane %v1956, 4
        %v1958 = vmax.f32 %v1956, %v1957
        %v1959 = vrot.slane %v1958, 2
        %v1960 = vmax.f32 %v1958, %v1959
        %v1961 = vrot.slane %v1960, 1
        %v1962 = vmax.f32 %v1960, %v1961
        %v1963 = vsel %vm1332, %v1048, -inf
        %v1964 = vrot.slane %v1963, 4
        %v1965 = vmax.f32 %v1963, %v1964
        %v1966 = vrot.slane %v1965, 2
        %v1967 = vmax.f32 %v1965, %v1966
        %v1968 = vrot.slane %v1967, 1
        %v1969 = vmax.f32 %v1967, %v1968
        %v1970 = vsel %vm1332, %v1050, -inf
        %v1971 = vrot.slane %v1970, 4
        %v1972 = vmax.f32 %v1970, %v1971
        %v1973 = vrot.slane %v1972, 2
        %v1974 = vmax.f32 %v1972, %v1973
        %v1975 = vrot.slane %v1974, 1
        %v1976 = vmax.f32 %v1974, %v1975
        %v1977 = vsel %vm1332, %v1058, -inf
        %v1978 = vrot.slane %v1977, 4
        %v1979 = vmax.f32 %v1977, %v1978
        %v1980 = vrot.slane %v1979, 2
        %v1981 = vmax.f32 %v1979, %v1980
        %v1982 = vrot.slane %v1981, 1
        %v1983 = vmax.f32 %v1981, %v1982
        %v1984 = vsel %vm1332, %v1066, -inf
        %v1985 = vrot.slane %v1984, 4
        %v1986 = vmax.f32 %v1984, %v1985
        %v1987 = vrot.slane %v1986, 2
        %v1988 = vmax.f32 %v1986, %v1987
        %v1989 = vrot.slane %v1988, 1
        %v1990 = vmax.f32 %v1988, %v1989
        %v1991 = vsel %vm1332, %v1065, -inf
        %v1992 = vrot.slane %v1991, 4
        %v1993 = vmax.f32 %v1991, %v1992
        %v1994 = vrot.slane %v1993, 2
        %v1995 = vmax.f32 %v1993, %v1994
        %v1996 = vrot.slane %v1995, 1
        %v1997 = vmax.f32 %v1995, %v1996
        %v1998 = vsel %vm1332, %v1067, -inf
        %v1999 = vrot.slane %v1998, 4
        %v2000 = vmax.f32 %v1998, %v1999
        %v2001 = vrot.slane %v2000, 2
        %v2002 = vmax.f32 %v2000, %v2001
        %v2003 = vrot.slane %v2002, 1
        %v2004 = vmax.f32 %v2002, %v2003
        %v2005 = vsel %vm1332, %v1075, -inf
        %v2006 = vrot.slane %v2005, 4
        %v2007 = vmax.f32 %v2005, %v2006
        %v2008 = vrot.slane %v2007, 2
        %v2009 = vmax.f32 %v2007, %v2008
        %v2010 = vrot.slane %v2009, 1
        %v2011 = vmax.f32 %v2009, %v2010
        %v2012 = vsel %vm1332, %v1083, -inf
        %v2013 = vrot.slane %v2012, 4
        %v2014 = vmax.f32 %v2012, %v2013
        %v2015 = vrot.slane %v2014, 2
        %v2016 = vmax.f32 %v2014, %v2015
        %v2017 = vrot.slane %v2016, 1
        %v2018 = vmax.f32 %v2016, %v2017
        %v2019 = vsel %vm1332, %v1082, -inf
        %v2020 = vrot.slane %v2019, 4
        %v2021 = vmax.f32 %v2019, %v2020
        %v2022 = vrot.slane %v2021, 2
        %v2023 = vmax.f32 %v2021, %v2022
        %v2024 = vrot.slane %v2023, 1
        %v2025 = vmax.f32 %v2023, %v2024
        %v2026 = vsel %vm1332, %v1084, -inf
        %v2027 = vrot.slane %v2026, 4
        %v2028 = vmax.f32 %v2026, %v2027
        %v2029 = vrot.slane %v2028, 2
        %v2030 = vmax.f32 %v2028, %v2029
        %v2031 = vrot.slane %v2030, 1
        %v2032 = vmax.f32 %v2030, %v2031
        %v2033 = vsel %vm1332, %v1092, -inf
        %v2034 = vrot.slane %v2033, 4
        %v2035 = vmax.f32 %v2033, %v2034
        %v2036 = vrot.slane %v2035, 2
        %v2037 = vmax.f32 %v2035, %v2036
        %v2038 = vrot.slane %v2037, 1
        %v2039 = vmax.f32 %v2037, %v2038
        %v2040 = vsel %vm1332, %v1100, -inf
        %v2041 = vrot.slane %v2040, 4
        %v2042 = vmax.f32 %v2040, %v2041
        %v2043 = vrot.slane %v2042, 2
        %v2044 = vmax.f32 %v2042, %v2043
        %v2045 = vrot.slane %v2044, 1
        %v2046 = vmax.f32 %v2044, %v2045
        %v2047 = vsel %vm1332, %v1099, -inf
        %v2048 = vrot.slane %v2047, 4
        %v2049 = vmax.f32 %v2047, %v2048
        %v2050 = vrot.slane %v2049, 2
        %v2051 = vmax.f32 %v2049, %v2050
        %v2052 = vrot.slane %v2051, 1
        %v2053 = vmax.f32 %v2051, %v2052
        %v2054 = vsel %vm1332, %v1101, -inf
        %v2055 = vrot.slane %v2054, 4
        %v2056 = vmax.f32 %v2054, %v2055
        %v2057 = vrot.slane %v2056, 2
        %v2058 = vmax.f32 %v2056, %v2057
        %v2059 = vrot.slane %v2058, 1
        %v2060 = vmax.f32 %v2058, %v2059
        %v2061 = vsel %vm1332, %v1109, -inf
        %v2062 = vrot.slane %v2061, 4
        %v2063 = vmax.f32 %v2061, %v2062
        %v2064 = vrot.slane %v2063, 2
        %v2065 = vmax.f32 %v2063, %v2064
        %v2066 = vrot.slane %v2065, 1
        %v2067 = vmax.f32 %v2065, %v2066
        %v2068 = vsel %vm1332, %v1117, -inf
        %v2069 = vrot.slane %v2068, 4
        %v2070 = vmax.f32 %v2068, %v2069
        %v2071 = vrot.slane %v2070, 2
        %v2072 = vmax.f32 %v2070, %v2071
        %v2073 = vrot.slane %v2072, 1
        %v2074 = vmax.f32 %v2072, %v2073
        %v2075 = vsel %vm1332, %v1116, -inf
        %v2076 = vrot.slane %v2075, 4
        %v2077 = vmax.f32 %v2075, %v2076
        %v2078 = vrot.slane %v2077, 2
        %v2079 = vmax.f32 %v2077, %v2078
        %v2080 = vrot.slane %v2079, 1
        %v2081 = vmax.f32 %v2079, %v2080
        %v2082 = vsel %vm1332, %v1118, -inf
        %v2083 = vrot.slane %v2082, 4
        %v2084 = vmax.f32 %v2082, %v2083
        %v2085 = vrot.slane %v2084, 2
        %v2086 = vmax.f32 %v2084, %v2085
        %v2087 = vrot.slane %v2086, 1
        %v2088 = vmax.f32 %v2086, %v2087
        %v2089 = vsel %vm1332, %v1126, -inf
        %v2090 = vrot.slane %v2089, 4
        %v2091 = vmax.f32 %v2089, %v2090
        %v2092 = vrot.slane %v2091, 2
        %v2093 = vmax.f32 %v2091, %v2092
        %v2094 = vrot.slane %v2093, 1
        %v2095 = vmax.f32 %v2093, %v2094
        %v2096 = vsel %vm1332, %v1134, -inf
        %v2097 = vrot.slane %v2096, 4
        %v2098 = vmax.f32 %v2096, %v2097
        %v2099 = vrot.slane %v2098, 2
        %v2100 = vmax.f32 %v2098, %v2099
        %v2101 = vrot.slane %v2100, 1
        %v2102 = vmax.f32 %v2100, %v2101
        %v2103 = vsel %vm1332, %v1133, -inf
        %v2104 = vrot.slane %v2103, 4
        %v2105 = vmax.f32 %v2103, %v2104
        %v2106 = vrot.slane %v2105, 2
        %v2107 = vmax.f32 %v2105, %v2106
        %v2108 = vrot.slane %v2107, 1
        %v2109 = vmax.f32 %v2107, %v2108
        %v2110 = vsel %vm1332, %v1135, -inf
        %v2111 = vrot.slane %v2110, 4
        %v2112 = vmax.f32 %v2110, %v2111
        %v2113 = vrot.slane %v2112, 2
        %v2114 = vmax.f32 %v2112, %v2113
        %v2115 = vrot.slane %v2114, 1
        %v2116 = vmax.f32 %v2114, %v2115
        %v2117 = vsel %vm1332, %v1143, -inf
        %v2118 = vrot.slane %v2117, 4
        %v2119 = vmax.f32 %v2117, %v2118
        %v2120 = vrot.slane %v2119, 2
        %v2121 = vmax.f32 %v2119, %v2120
        %v2122 = vrot.slane %v2121, 1
        %v2123 = vmax.f32 %v2121, %v2122
        %v2124 = vsel %vm1332, %v1151, -inf
        %v2125 = vrot.slane %v2124, 4
        %v2126 = vmax.f32 %v2124, %v2125
        %v2127 = vrot.slane %v2126, 2
        %v2128 = vmax.f32 %v2126, %v2127
        %v2129 = vrot.slane %v2128, 1
        %v2130 = vmax.f32 %v2128, %v2129
        %v2131 = vsel %vm1332, %v1150, -inf
        %v2132 = vrot.slane %v2131, 4
        %v2133 = vmax.f32 %v2131, %v2132
        %v2134 = vrot.slane %v2133, 2
        %v2135 = vmax.f32 %v2133, %v2134
        %v2136 = vrot.slane %v2135, 1
        %v2137 = vmax.f32 %v2135, %v2136
        %v2138 = vsel %vm1332, %v1152, -inf
        %v2139 = vrot.slane %v2138, 4
        %v2140 = vmax.f32 %v2138, %v2139
        %v2141 = vrot.slane %v2140, 2
        %v2142 = vmax.f32 %v2140, %v2141
        %v2143 = vrot.slane %v2142, 1
        %v2144 = vmax.f32 %v2142, %v2143
        %v2145 = vsel %vm1332, %v1160, -inf
        %v2146 = vrot.slane %v2145, 4
        %v2147 = vmax.f32 %v2145, %v2146
        %v2148 = vrot.slane %v2147, 2
        %v2149 = vmax.f32 %v2147, %v2148
        %v2150 = vrot.slane %v2149, 1
        %v2151 = vmax.f32 %v2149, %v2150
        %v2152 = vsel %vm1332, %v1168, -inf
        %v2153 = vrot.slane %v2152, 4
        %v2154 = vmax.f32 %v2152, %v2153
        %v2155 = vrot.slane %v2154, 2
        %v2156 = vmax.f32 %v2154, %v2155
        %v2157 = vrot.slane %v2156, 1
        %v2158 = vmax.f32 %v2156, %v2157
        %v2159 = vsel %vm1332, %v1167, -inf
        %v2160 = vrot.slane %v2159, 4
        %v2161 = vmax.f32 %v2159, %v2160
        %v2162 = vrot.slane %v2161, 2
        %v2163 = vmax.f32 %v2161, %v2162
        %v2164 = vrot.slane %v2163, 1
        %v2165 = vmax.f32 %v2163, %v2164
        %v2166 = vsel %vm1332, %v1169, -inf
        %v2167 = vrot.slane %v2166, 4
        %v2168 = vmax.f32 %v2166, %v2167
        %v2169 = vrot.slane %v2168, 2
        %v2170 = vmax.f32 %v2168, %v2169
        %v2171 = vrot.slane %v2170, 1
        %v2172 = vmax.f32 %v2170, %v2171
        %v2173 = vsel %vm1332, %v1177, -inf
        %v2174 = vrot.slane %v2173, 4
        %v2175 = vmax.f32 %v2173, %v2174
        %v2176 = vrot.slane %v2175, 2
        %v2177 = vmax.f32 %v2175, %v2176
        %v2178 = vrot.slane %v2177, 1
        %v2179 = vmax.f32 %v2177, %v2178
        %v2180 = vsel %vm1332, %v1185, -inf
        %v2181 = vrot.slane %v2180, 4
        %v2182 = vmax.f32 %v2180, %v2181
        %v2183 = vrot.slane %v2182, 2
        %v2184 = vmax.f32 %v2182, %v2183
        %v2185 = vrot.slane %v2184, 1
        %v2186 = vmax.f32 %v2184, %v2185
        %v2187 = vsel %vm1332, %v1184, -inf
        %v2188 = vrot.slane %v2187, 4
        %v2189 = vmax.f32 %v2187, %v2188
        %v2190 = vrot.slane %v2189, 2
        %v2191 = vmax.f32 %v2189, %v2190
        %v2192 = vrot.slane %v2191, 1
        %v2193 = vmax.f32 %v2191, %v2192
        %v2194 = vsel %vm1332, %v1186, -inf
        %v2195 = vrot.slane %v2194, 4
        %v2196 = vmax.f32 %v2194, %v2195
        %v2197 = vrot.slane %v2196, 2
        %v2198 = vmax.f32 %v2196, %v2197
        %v2199 = vrot.slane %v2198, 1
        %v2200 = vmax.f32 %v2198, %v2199
        %v2201 = vsel %vm1332, %v1194, -inf
        %v2202 = vrot.slane %v2201, 4
        %v2203 = vmax.f32 %v2201, %v2202
        %v2204 = vrot.slane %v2203, 2
        %v2205 = vmax.f32 %v2203, %v2204
        %v2206 = vrot.slane %v2205, 1
        %v2207 = vmax.f32 %v2205, %v2206
        %v2208 = vsel %vm1332, %v1202, -inf
        %v2209 = vrot.slane %v2208, 4
        %v2210 = vmax.f32 %v2208, %v2209
        %v2211 = vrot.slane %v2210, 2
        %v2212 = vmax.f32 %v2210, %v2211
        %v2213 = vrot.slane %v2212, 1
        %v2214 = vmax.f32 %v2212, %v2213
        %v2215 = vsel %vm1332, %v1201, -inf
        %v2216 = vrot.slane %v2215, 4
        %v2217 = vmax.f32 %v2215, %v2216
        %v2218 = vrot.slane %v2217, 2
        %v2219 = vmax.f32 %v2217, %v2218
        %v2220 = vrot.slane %v2219, 1
        %v2221 = vmax.f32 %v2219, %v2220
        %v2222 = vsel %vm1332, %v1203, -inf
        %v2223 = vrot.slane %v2222, 4
        %v2224 = vmax.f32 %v2222, %v2223
        %v2225 = vrot.slane %v2224, 2
        %v2226 = vmax.f32 %v2224, %v2225
        %v2227 = vrot.slane %v2226, 1
        %v2228 = vmax.f32 %v2226, %v2227
        %vm2229 = vcmask 523264
        %v2230 = vsel %vm2229, %v1339, -inf
        %v2231 = vsel %vm2229, %v1451, -inf
        %v2232 = vmax.f32 %v2230, %v2231
        %v2233 = vsel %vm2229, %v1346, -inf
        %v2234 = vsel %vm2229, %v1458, -inf
        %v2235 = vmax.f32 %v2233, %v2234
        %v2236 = vsel %vm2229, %v1353, -inf
        %v2237 = vsel %vm2229, %v1465, -inf
        %v2238 = vmax.f32 %v2236, %v2237
        %v2239 = vsel %vm2229, %v1360, -inf
        %v2240 = vsel %vm2229, %v1472, -inf
        %v2241 = vmax.f32 %v2239, %v2240
        %v2242 = vsel %vm2229, %v1367, -inf
        %v2243 = vsel %vm2229, %v1479, -inf
        %v2244 = vmax.f32 %v2242, %v2243
        %v2245 = vsel %vm2229, %v1374, -inf
        %v2246 = vsel %vm2229, %v1486, -inf
        %v2247 = vmax.f32 %v2245, %v2246
        %v2248 = vsel %vm2229, %v1381, -inf
        %v2249 = vsel %vm2229, %v1493, -inf
        %v2250 = vmax.f32 %v2248, %v2249
        %v2251 = vsel %vm2229, %v1388, -inf
        %v2252 = vsel %vm2229, %v1500, -inf
        %v2253 = vmax.f32 %v2251, %v2252
        %v2254 = vsel %vm2229, %v1395, -inf
        %v2255 = vsel %vm2229, %v1507, -inf
        %v2256 = vmax.f32 %v2254, %v2255
        %v2257 = vsel %vm2229, %v1402, -inf
        %v2258 = vsel %vm2229, %v1514, -inf
        %v2259 = vmax.f32 %v2257, %v2258
        %v2260 = vsel %vm2229, %v1409, -inf
        %v2261 = vsel %vm2229, %v1521, -inf
        %v2262 = vmax.f32 %v2260, %v2261
        %v2263 = vsel %vm2229, %v1416, -inf
        %v2264 = vsel %vm2229, %v1528, -inf
        %v2265 = vmax.f32 %v2263, %v2264
        %v2266 = vsel %vm2229, %v1423, -inf
        %v2267 = vsel %vm2229, %v1535, -inf
        %v2268 = vmax.f32 %v2266, %v2267
        %v2269 = vsel %vm2229, %v1430, -inf
        %v2270 = vsel %vm2229, %v1542, -inf
        %v2271 = vmax.f32 %v2269, %v2270
        %v2272 = vsel %vm2229, %v1437, -inf
        %v2273 = vsel %vm2229, %v1549, -inf
        %v2274 = vmax.f32 %v2272, %v2273
        %v2275 = vsel %vm2229, %v1444, -inf
        %v2276 = vsel %vm2229, %v1556, -inf
        %v2277 = vmax.f32 %v2275, %v2276
        %v2278 = vsel %vm2229, %v1563, -inf
        %v2279 = vsel %vm2229, %v1675, -inf
        %v2280 = vmax.f32 %v2278, %v2279
        %v2281 = vsel %vm2229, %v1570, -inf
        %v2282 = vsel %vm2229, %v1682, -inf
        %v2283 = vmax.f32 %v2281, %v2282
        %v2284 = vsel %vm2229, %v1577, -inf
        %v2285 = vsel %vm2229, %v1689, -inf
        %v2286 = vmax.f32 %v2284, %v2285
        %v2287 = vsel %vm2229, %v1584, -inf
        %v2288 = vsel %vm2229, %v1696, -inf
        %v2289 = vmax.f32 %v2287, %v2288
        %v2290 = vsel %vm2229, %v1591, -inf
        %v2291 = vsel %vm2229, %v1703, -inf
        %v2292 = vmax.f32 %v2290, %v2291
        %v2293 = vsel %vm2229, %v1598, -inf
        %v2294 = vsel %vm2229, %v1710, -inf
        %v2295 = vmax.f32 %v2293, %v2294
        %v2296 = vsel %vm2229, %v1605, -inf
        %v2297 = vsel %vm2229, %v1717, -inf
        %v2298 = vmax.f32 %v2296, %v2297
        %v2299 = vsel %vm2229, %v1612, -inf
        %v2300 = vsel %vm2229, %v1724, -inf
        %v2301 = vmax.f32 %v2299, %v2300
        %v2302 = vsel %vm2229, %v1619, -inf
        %v2303 = vsel %vm2229, %v1731, -inf
        %v2304 = vmax.f32 %v2302, %v2303
        %v2305 = vsel %vm2229, %v1626, -inf
        %v2306 = vsel %vm2229, %v1738, -inf
        %v2307 = vmax.f32 %v2305, %v2306
        %v2308 = vsel %vm2229, %v1633, -inf
        %v2309 = vsel %vm2229, %v1745, -inf
        %v2310 = vmax.f32 %v2308, %v2309
        %v2311 = vsel %vm2229, %v1640, -inf
        %v2312 = vsel %vm2229, %v1752, -inf
        %v2313 = vmax.f32 %v2311, %v2312
        %v2314 = vsel %vm2229, %v1647, -inf
        %v2315 = vsel %vm2229, %v1759, -inf
        %v2316 = vmax.f32 %v2314, %v2315
        %v2317 = vsel %vm2229, %v1654, -inf
        %v2318 = vsel %vm2229, %v1766, -inf
        %v2319 = vmax.f32 %v2317, %v2318
        %v2320 = vsel %vm2229, %v1661, -inf
        %v2321 = vsel %vm2229, %v1773, -inf
        %v2322 = vmax.f32 %v2320, %v2321
        %v2323 = vsel %vm2229, %v1668, -inf
        %v2324 = vsel %vm2229, %v1780, -inf
        %v2325 = vmax.f32 %v2323, %v2324
        %v2326 = vsel %vm2229, %v1787, -inf
        %v2327 = vsel %vm2229, %v1899, -inf
        %v2328 = vmax.f32 %v2326, %v2327
        %v2329 = vsel %vm2229, %v1794, -inf
        %v2330 = vsel %vm2229, %v1906, -inf
        %v2331 = vmax.f32 %v2329, %v2330
        %v2332 = vsel %vm2229, %v1801, -inf
        %v2333 = vsel %vm2229, %v1913, -inf
        %v2334 = vmax.f32 %v2332, %v2333
        %v2335 = vsel %vm2229, %v1808, -inf
        %v2336 = vsel %vm2229, %v1920, -inf
        %v2337 = vmax.f32 %v2335, %v2336
        %v2338 = vsel %vm2229, %v1815, -inf
        %v2339 = vsel %vm2229, %v1927, -inf
        %v2340 = vmax.f32 %v2338, %v2339
        %v2341 = vsel %vm2229, %v1822, -inf
        %v2342 = vsel %vm2229, %v1934, -inf
        %v2343 = vmax.f32 %v2341, %v2342
        %v2344 = vsel %vm2229, %v1829, -inf
        %v2345 = vsel %vm2229, %v1941, -inf
        %v2346 = vmax.f32 %v2344, %v2345
        %v2347 = vsel %vm2229, %v1836, -inf
        %v2348 = vsel %vm2229, %v1948, -inf
        %v2349 = vmax.f32 %v2347, %v2348
        %v2350 = vsel %vm2229, %v1843, -inf
        %v2351 = vsel %vm2229, %v1955, -inf
        %v2352 = vmax.f32 %v2350, %v2351
        %v2353 = vsel %vm2229, %v1850, -inf
        %v2354 = vsel %vm2229, %v1962, -inf
        %v2355 = vmax.f32 %v2353, %v2354
        %v2356 = vsel %vm2229, %v1857, -inf
        %v2357 = vsel %vm2229, %v1969, -inf
        %v2358 = vmax.f32 %v2356, %v2357
        %v2359 = vsel %vm2229, %v1864, -inf
        %v2360 = vsel %vm2229, %v1976, -inf
        %v2361 = vmax.f32 %v2359, %v2360
        %v2362 = vsel %vm2229, %v1871, -inf
        %v2363 = vsel %vm2229, %v1983, -inf
        %v2364 = vmax.f32 %v2362, %v2363
        %v2365 = vsel %vm2229, %v1878, -inf
        %v2366 = vsel %vm2229, %v1990, -inf
        %v2367 = vmax.f32 %v2365, %v2366
        %v2368 = vsel %vm2229, %v1885, -inf
        %v2369 = vsel %vm2229, %v1997, -inf
        %v2370 = vmax.f32 %v2368, %v2369
        %v2371 = vsel %vm2229, %v1892, -inf
        %v2372 = vsel %vm2229, %v2004, -inf
        %v2373 = vmax.f32 %v2371, %v2372
        %v2374 = vsel %vm2229, %v2011, -inf
        %v2375 = vsel %vm2229, %v2123, -inf
        %v2376 = vmax.f32 %v2374, %v2375
        %v2377 = vsel %vm2229, %v2018, -inf
        %v2378 = vsel %vm2229, %v2130, -inf
        %v2379 = vmax.f32 %v2377, %v2378
        %v2380 = vsel %vm2229, %v2025, -inf
        %v2381 = vsel %vm2229, %v2137, -inf
        %v2382 = vmax.f32 %v2380, %v2381
        %v2383 = vsel %vm2229, %v2032, -inf
        %v2384 = vsel %vm2229, %v2144, -inf
        %v2385 = vmax.f32 %v2383, %v2384
        %v2386 = vsel %vm2229, %v2039, -inf
        %v2387 = vsel %vm2229, %v2151, -inf
        %v2388 = vmax.f32 %v2386, %v2387
        %v2389 = vsel %vm2229, %v2046, -inf
        %v2390 = vsel %vm2229, %v2158, -inf
        %v2391 = vmax.f32 %v2389, %v2390
        %v2392 = vsel %vm2229, %v2053, -inf
        %v2393 = vsel %vm2229, %v2165, -inf
        %v2394 = vmax.f32 %v2392, %v2393
        %v2395 = vsel %vm2229, %v2060, -inf
        %v2396 = vsel %vm2229, %v2172, -inf
        %v2397 = vmax.f32 %v2395, %v2396
        %v2398 = vsel %vm2229, %v2067, -inf
        %v2399 = vsel %vm2229, %v2179, -inf
        %v2400 = vmax.f32 %v2398, %v2399
        %v2401 = vsel %vm2229, %v2074, -inf
        %v2402 = vsel %vm2229, %v2186, -inf
        %v2403 = vmax.f32 %v2401, %v2402
        %v2404 = vsel %vm2229, %v2081, -inf
        %v2405 = vsel %vm2229, %v2193, -inf
        %v2406 = vmax.f32 %v2404, %v2405
        %v2407 = vsel %vm2229, %v2088, -inf
        %v2408 = vsel %vm2229, %v2200, -inf
        %v2409 = vmax.f32 %v2407, %v2408
        %v2410 = vsel %vm2229, %v2095, -inf
        %v2411 = vsel %vm2229, %v2207, -inf
        %v2412 = vmax.f32 %v2410, %v2411
        %v2413 = vsel %vm2229, %v2102, -inf
        %v2414 = vsel %vm2229, %v2214, -inf
        %v2415 = vmax.f32 %v2413, %v2414
        %v2416 = vsel %vm2229, %v2109, -inf
        %v2417 = vsel %vm2229, %v2221, -inf
        %v2418 = vmax.f32 %v2416, %v2417
        %v2419 = vsel %vm2229, %v2116, -inf
        %v2420 = vsel %vm2229, %v2228, -inf
        %v2421 = vmax.f32 %v2419, %v2420
        %vm2482 = vcmask 1042434
        %v2483 = vsel %vm2482, %v2235, %v2232
        %vm2484 = vcmask 1043459
        %v2485 = vsel %vm2484, %v2238, %v2483
        %vm2486 = vcmask 1044484
        %v2487 = vsel %vm2486, %v2241, %v2485
        %vm2488 = vcmask 1045509
        %v2489 = vsel %vm2488, %v2244, %v2487
        %vm2490 = vcmask 1046534
        %v2491 = vsel %vm2490, %v2247, %v2489
        %vm2492 = vcmask 1047559
        %v2493 = vsel %vm2492, %v2250, %v2491
        %vm2494 = vcmask 1041409
        %v2495 = vsel %vm2494, %v2256, %v2253
        %v2496 = vsel %vm2482, %v2259, %v2495
        %v2497 = vsel %vm2484, %v2262, %v2496
        %v2498 = vsel %vm2486, %v2265, %v2497
        %v2499 = vsel %vm2488, %v2268, %v2498
        %v2500 = vsel %vm2490, %v2271, %v2499
        %v2501 = vsel %vm2492, %v2274, %v2500
        %v2502 = vsel %vm2482, %v2283, %v2280
        %v2503 = vsel %vm2484, %v2286, %v2502
        %v2504 = vsel %vm2486, %v2289, %v2503
        %v2505 = vsel %vm2488, %v2292, %v2504
        %v2506 = vsel %vm2490, %v2295, %v2505
        %v2507 = vsel %vm2492, %v2298, %v2506
        %v2508 = vsel %vm2494, %v2304, %v2301
        %v2509 = vsel %vm2482, %v2307, %v2508
        %v2510 = vsel %vm2484, %v2310, %v2509
        %v2511 = vsel %vm2486, %v2313, %v2510
        %v2512 = vsel %vm2488, %v2316, %v2511
        %v2513 = vsel %vm2490, %v2319, %v2512
        %v2514 = vsel %vm2492, %v2322, %v2513
        %v2515 = vsel %vm2482, %v2331, %v2328
        %v2516 = vsel %vm2484, %v2334, %v2515
        %v2517 = vsel %vm2486, %v2337, %v2516
        %v2518 = vsel %vm2488, %v2340, %v2517
        %v2519 = vsel %vm2490, %v2343, %v2518
        %v2520 = vsel %vm2492, %v2346, %v2519
        %v2521 = vsel %vm2494, %v2352, %v2349
        %v2522 = vsel %vm2482, %v2355, %v2521
        %v2523 = vsel %vm2484, %v2358, %v2522
        %v2524 = vsel %vm2486, %v2361, %v2523
        %v2525 = vsel %vm2488, %v2364, %v2524
        %v2526 = vsel %vm2490, %v2367, %v2525
        %v2527 = vsel %vm2492, %v2370, %v2526
        %v2528 = vsel %vm2482, %v2379, %v2376
        %v2529 = vsel %vm2484, %v2382, %v2528
        %v2530 = vsel %vm2486, %v2385, %v2529
        %v2531 = vsel %vm2488, %v2388, %v2530
        %v2532 = vsel %vm2490, %v2391, %v2531
        %v2533 = vsel %vm2492, %v2394, %v2532
        %v2534 = vsel %vm2494, %v2400, %v2397
        %v2535 = vsel %vm2482, %v2403, %v2534
        %v2536 = vsel %vm2484, %v2406, %v2535
        %v2537 = vsel %vm2486, %v2409, %v2536
        %v2538 = vsel %vm2488, %v2412, %v2537
        %v2539 = vsel %vm2490, %v2415, %v2538
        %v2540 = vsel %vm2492, %v2418, %v2539
        %vm2549 = vcmask 1040384
        %v2550 = vsel %vm2549, 0.0, %v2493
        %v2551 = vsel %vm2549, 0.0, %v2507
        %v2552 = vsel %vm2549, 0.0, %v2520
        %v2553 = vsel %vm2549, 0.0, %v2533
        %v2558 = vsel %vm2494, %v2238, %v2235
        %v2559 = vsel %vm2482, %v2241, %v2558
        %v2560 = vsel %vm2484, %v2244, %v2559
        %v2561 = vsel %vm2486, %v2247, %v2560
        %v2562 = vsel %vm2488, %v2250, %v2561
        %v2563 = vsel %vm2490, %v2253, %v2562
        %v2564 = vsel %vm2492, %v2256, %v2563
        %v2565 = vsel %vm2494, %v2262, %v2259
        %v2566 = vsel %vm2482, %v2265, %v2565
        %v2567 = vsel %vm2484, %v2268, %v2566
        %v2568 = vsel %vm2486, %v2271, %v2567
        %v2569 = vsel %vm2488, %v2274, %v2568
        %v2570 = vsel %vm2490, %v2277, %v2569
        %v2571 = vsel %vm2494, %v2286, %v2283
        %v2572 = vsel %vm2482, %v2289, %v2571
        %v2573 = vsel %vm2484, %v2292, %v2572
        %v2574 = vsel %vm2486, %v2295, %v2573
        %v2575 = vsel %vm2488, %v2298, %v2574
        %v2576 = vsel %vm2490, %v2301, %v2575
        %v2577 = vsel %vm2492, %v2304, %v2576
        %v2578 = vsel %vm2494, %v2310, %v2307
        %v2579 = vsel %vm2482, %v2313, %v2578
        %v2580 = vsel %vm2484, %v2316, %v2579
        %v2581 = vsel %vm2486, %v2319, %v2580
        %v2582 = vsel %vm2488, %v2322, %v2581
        %v2583 = vsel %vm2490, %v2325, %v2582
        %v2584 = vsel %vm2494, %v2334, %v2331
        %v2585 = vsel %vm2482, %v2337, %v2584
        %v2586 = vsel %vm2484, %v2340, %v2585
        %v2587 = vsel %vm2486, %v2343, %v2586
        %v2588 = vsel %vm2488, %v2346, %v2587
        %v2589 = vsel %vm2490, %v2349, %v2588
        %v2590 = vsel %vm2492, %v2352, %v2589
        %v2591 = vsel %vm2494, %v2358, %v2355
        %v2592 = vsel %vm2482, %v2361, %v2591
        %v2593 = vsel %vm2484, %v2364, %v2592
        %v2594 = vsel %vm2486, %v2367, %v2593
        %v2595 = vsel %vm2488, %v2370, %v2594
        %v2596 = vsel %vm2490, %v2373, %v2595
        %v2597 = vsel %vm2494, %v2382, %v2379
        %v2598 = vsel %vm2482, %v2385, %v2597
        %v2599 = vsel %vm2484, %v2388, %v2598
        %v2600 = vsel %vm2486, %v2391, %v2599
        %v2601 = vsel %vm2488, %v2394, %v2600
        %v2602 = vsel %vm2490, %v2397, %v2601
        %v2603 = vsel %vm2492, %v2400, %v2602
        %v2604 = vsel %vm2494, %v2406, %v2403
        %v2605 = vsel %vm2482, %v2409, %v2604
        %v2606 = vsel %vm2484, %v2412, %v2605
        %v2607 = vsel %vm2486, %v2415, %v2606
        %v2608 = vsel %vm2488, %v2418, %v2607
        %v2609 = vsel %vm2490, %v2421, %v2608
        %vm2618 = vcmask 1046528
        %v2619 = vsel %vm2618, %v2570, 0.0
        %v2620 = vsel %vm2618, %v2583, 0.0
        %v2621 = vsel %vm2618, %v2596, 0.0
        %v2622 = vsel %vm2618, %v2609, 0.0
        %v2623 = vsel %vm2494, %v2235, %v2232
        %v2624 = vsel %vm2482, %v2238, %v2623
        %v2625 = vsel %vm2484, %v2241, %v2624
        %v2626 = vsel %vm2486, %v2244, %v2625
        %v2627 = vsel %vm2488, %v2247, %v2626
        %v2628 = vsel %vm2490, %v2250, %v2627
        %v2629 = vsel %vm2492, %v2253, %v2628
        %v2630 = vsel %vm2494, %v2259, %v2256
        %v2631 = vsel %vm2482, %v2262, %v2630
        %v2632 = vsel %vm2484, %v2265, %v2631
        %v2633 = vsel %vm2486, %v2268, %v2632
        %v2634 = vsel %vm2488, %v2271, %v2633
        %v2635 = vsel %vm2490, %v2274, %v2634
        %v2636 = vsel %vm2492, %v2277, %v2635
        %v2637 = vsel %vm2494, %v2283, %v2280
        %v2638 = vsel %vm2482, %v2286, %v2637
        %v2639 = vsel %vm2484, %v2289, %v2638
        %v2640 = vsel %vm2486, %v2292, %v2639
        %v2641 = vsel %vm2488, %v2295, %v2640
        %v2642 = vsel %vm2490, %v2298, %v2641
        %v2643 = vsel %vm2492, %v2301, %v2642
        %v2644 = vsel %vm2494, %v2307, %v2304
        %v2645 = vsel %vm2482, %v2310, %v2644
        %v2646 = vsel %vm2484, %v2313, %v2645
        %v2647 = vsel %vm2486, %v2316, %v2646
        %v2648 = vsel %vm2488, %v2319, %v2647
        %v2649 = vsel %vm2490, %v2322, %v2648
        %v2650 = vsel %vm2492, %v2325, %v2649
        %v2651 = vsel %vm2494, %v2331, %v2328
        %v2652 = vsel %vm2482, %v2334, %v2651
        %v2653 = vsel %vm2484, %v2337, %v2652
        %v2654 = vsel %vm2486, %v2340, %v2653
        %v2655 = vsel %vm2488, %v2343, %v2654
        %v2656 = vsel %vm2490, %v2346, %v2655
        %v2657 = vsel %vm2492, %v2349, %v2656
        %v2658 = vsel %vm2494, %v2355, %v2352
        %v2659 = vsel %vm2482, %v2358, %v2658
        %v2660 = vsel %vm2484, %v2361, %v2659
        %v2661 = vsel %vm2486, %v2364, %v2660
        %v2662 = vsel %vm2488, %v2367, %v2661
        %v2663 = vsel %vm2490, %v2370, %v2662
        %v2664 = vsel %vm2492, %v2373, %v2663
        %v2665 = vsel %vm2494, %v2379, %v2376
        %v2666 = vsel %vm2482, %v2382, %v2665
        %v2667 = vsel %vm2484, %v2385, %v2666
        %v2668 = vsel %vm2486, %v2388, %v2667
        %v2669 = vsel %vm2488, %v2391, %v2668
        %v2670 = vsel %vm2490, %v2394, %v2669
        %v2671 = vsel %vm2492, %v2397, %v2670
        %v2672 = vsel %vm2494, %v2403, %v2400
        %v2673 = vsel %vm2482, %v2406, %v2672
        %v2674 = vsel %vm2484, %v2409, %v2673
        %v2675 = vsel %vm2486, %v2412, %v2674
        %v2676 = vsel %vm2488, %v2415, %v2675
        %v2677 = vsel %vm2490, %v2418, %v2676
        %v2678 = vsel %vm2492, %v2421, %v2677
        %2679 = vrot.lane.b32.xlu0 %v2629, 64
        %v2680 = vpop.permute.xlu0 %2679
        %2681 = vrot.lane.b32.xlu0 %v2636, 64
        %v2682 = vpop.permute.xlu0 %2681
        %2683 = vrot.lane.b32.xlu0 %v2643, 64
        %v2684 = vpop.permute.xlu0 %2683
        %2685 = vrot.lane.b32.xlu0 %v2650, 64
        %v2686 = vpop.permute.xlu0 %2685
        %2687 = vrot.lane.b32.xlu0 %v2657, 64
        %v2688 = vpop.permute.xlu0 %2687
        %2689 = vrot.lane.b32.xlu0 %v2664, 64
        %v2690 = vpop.permute.xlu0 %2689
        %2691 = vrot.lane.b32.xlu0 %v2671, 64
        %v2692 = vpop.permute.xlu0 %2691
        %2693 = vrot.lane.b32.xlu0 %v2678, 64
        %v2694 = vpop.permute.xlu0 %2693
        %v2703 = vsel %vm2229, %v2550, %v2680
        %v2704 = vsel %vm2229, %v2501, %v2682
        %v2705 = vsel %vm2229, %v2551, %v2684
        %v2706 = vsel %vm2229, %v2514, %v2686
        %v2707 = vsel %vm2229, %v2552, %v2688
        %v2708 = vsel %vm2229, %v2527, %v2690
        %v2709 = vsel %vm2229, %v2553, %v2692
        %v2710 = vsel %vm2229, %v2540, %v2694
        %v2711 = vpack.c.bf16 %v2704, %v2703
        %v2712 = vpack.c.bf16 %v2619, %v2564
        %v2713 = vpack.c.bf16 %v2706, %v2705
        %v2714 = vpack.c.bf16 %v2620, %v2577
        %v2715 = vpack.c.bf16 %v2708, %v2707
        %v2716 = vpack.c.bf16 %v2621, %v2590
        %v2717 = vpack.c.bf16 %v2710, %v2709
        %v2718 = vpack.c.bf16 %v2622, %v2603
        %s2719 = smul.u32 %s235, 4
        %s2720 = sadd.s32 %s2719, 1
        %v2729 = vunpack.c.l.b16 %v2711
        %v2730 = vunpack.c.l.b16 %v2712
        %v2731 = vunpack.c.h.b16 %v2711
        %v2732 = vunpack.c.h.b16 %v2712
        %v2733 = vunpack.c.l.b16 %v2713
        %v2734 = vunpack.c.l.b16 %v2714
        %v2735 = vunpack.c.h.b16 %v2713
        %v2736 = vunpack.c.h.b16 %v2714
        %v2737 = vunpack.c.l.b16 %v2715
        %v2738 = vunpack.c.l.b16 %v2716
        %v2739 = vunpack.c.h.b16 %v2715
        %v2740 = vunpack.c.h.b16 %v2716
        %v2741 = vunpack.c.l.b16 %v2717
        %v2742 = vunpack.c.l.b16 %v2718
        %v2743 = vunpack.c.h.b16 %v2717
        %v2744 = vunpack.c.h.b16 %v2718
        %v2745 = vpack.c.b16 %v2730, %v2729
        %v2746 = vpack.c.b16 %v2732, %v2731
        %v2747 = vpack.c.b16 %v2734, %v2733
        %v2748 = vpack.c.b16 %v2736, %v2735
        %v2749 = vpack.c.b16 %v2738, %v2737
        %v2750 = vpack.c.b16 %v2740, %v2739
        %v2751 = vpack.c.b16 %v2742, %v2741
        %v2752 = vpack.c.b16 %v2744, %v2743
        %s2761 = smul.u32 %s2720, 4
        %s2762 = smul.addr %s2761, 4
        %s2763 = scalar_lea.vmem [#allocation2], %s2762
        %2764 = vst.msk [vmem:[%s2763] sm:$0xff] %vm228, %v2745
        %2765 = vst.msk [vmem:[%s2763 + $0x8] sm:$0xff] %vm228, %v2746
        %2766 = vst.msk [vmem:[%s2763 + $0x10] sm:$0xff] %vm228, %v2747
        %2767 = vst.msk [vmem:[%s2763 + $0x18] sm:$0xff] %vm228, %v2748
        %2768 = vst.msk [vmem:[%s2763 + $0x20] sm:$0xff] %vm228, %v2749
        %2769 = vst.msk [vmem:[%s2763 + $0x28] sm:$0xff] %vm228, %v2750
        %2770 = vst.msk [vmem:[%s2763 + $0x30] sm:$0xff] %vm228, %v2751
        %2771 = vst.msk [vmem:[%s2763 + $0x38] sm:$0xff] %vm228, %v2752
      $region45: #{cnn_forward.1} parent=39 // loop_footer
        %s239 = sadd.s32 1, %s235
      $region46: #{cnn_forward.1} parent=39 // loop_footer_branch
        %234 = sbr.rel target = $region42
      $region47: #{cnn_forward.1} parent=39 // loop_exit
        _
      loop: start=0, step=1, limit=2
      $region48: #{cnn_forward.1} parent=39 // loop_pre_header
        _
      $region49: #{cnn_forward.1} parent=39 // loop_header
        %s2773 = sphi 0, %s2777
        %p2774 = scmp.ge.s32.totalorder %s2773, 2
      $region50: #{cnn_forward.1} parent=39 // loop_header_branch
        %2776 = sbr.rel (%p2774) target = $region54
      $region51: #{cnn_forward.1} parent=39 // loop_body
        %s2778 = smul.u32 %s2773, 8
        %s2779 = smul.u32 %s2778, 4
        %s2780 = smul.addr %s2779, 4
        %s2781 = scalar_lea.vmem [#allocation2], %s2780
        %v2782 = vld [vmem:[%s2781] sm:$0xff]
        %v2783 = vld [vmem:[%s2781 + $0x8] sm:$0xff]
        %v2784 = vld [vmem:[%s2781 + $0x10] sm:$0xff]
        %v2785 = vld [vmem:[%s2781 + $0x18] sm:$0xff]
        %v2786 = vld [vmem:[%s2781 + $0x20] sm:$0xff]
        %v2787 = vld [vmem:[%s2781 + $0x28] sm:$0xff]
        %v2788 = vld [vmem:[%s2781 + $0x30] sm:$0xff]
        %v2789 = vld [vmem:[%s2781 + $0x38] sm:$0xff]
        %v2790 = vld [vmem:[%s2781 + $0x40] sm:$0xff]
        %v2791 = vld [vmem:[%s2781 + $0x48] sm:$0xff]
        %v2792 = vld [vmem:[%s2781 + $0x50] sm:$0xff]
        %v2793 = vld [vmem:[%s2781 + $0x58] sm:$0xff]
        %v2794 = vld [vmem:[%s2781 + $0x60] sm:$0xff]
        %v2795 = vld [vmem:[%s2781 + $0x68] sm:$0xff]
        %v2796 = vld [vmem:[%s2781 + $0x70] sm:$0xff]
        %v2797 = vld [vmem:[%s2781 + $0x78] sm:$0xff]
        %v2798 = vld [vmem:[%s3] sm:$0xf]
        %v2799 = vld [vmem:[%s3 + $0x4] sm:$0xf]
        %v2800 = vld [vmem:[%s3 + $0x8] sm:$0xf]
        %v2801 = vld [vmem:[%s3 + $0xc] sm:$0xf]
        %v2802 = vld [vmem:[%s3 + $0x10] sm:$0xf]
        %v2803 = vld [vmem:[%s3 + $0x14] sm:$0xf]
        %v2804 = vld [vmem:[%s3 + $0x18] sm:$0xf]
        %v2805 = vld [vmem:[%s3 + $0x1c] sm:$0xf]
        %v2806 = vld [vmem:[%s3 + $0x20] sm:$0xf]
        %v2807 = vld [vmem:[%s3 + $0x24] sm:$0xf]
        %v2808 = vld [vmem:[%s3 + $0x28] sm:$0xf]
        %v2809 = vld [vmem:[%s3 + $0x2c] sm:$0xf]
        %v2810 = vld [vmem:[%s3 + $0x30] sm:$0xf]
        %v2811 = vld [vmem:[%s3 + $0x34] sm:$0xf]
        %v2812 = vld [vmem:[%s3 + $0x38] sm:$0xf]
        %v2813 = vld [vmem:[%s3 + $0x3c] sm:$0xf]
        %v2814 = vld [vmem:[%s3 + $0x40] sm:$0xf]
        %v2815 = vld [vmem:[%s3 + $0x44] sm:$0xf]
        %v2816 = vld [vmem:[%s3 + $0x48] sm:$0xf]
        %v2817 = vld [vmem:[%s3 + $0x4c] sm:$0xf]
        %v2818 = vld [vmem:[%s3 + $0x50] sm:$0xf]
        %v2819 = vld [vmem:[%s3 + $0x54] sm:$0xf]
        %v2820 = vld [vmem:[%s3 + $0x58] sm:$0xf]
        %v2821 = vld [vmem:[%s3 + $0x5c] sm:$0xf]
        %s2822 = sadd.s32 %s2778, 1
        %s2823 = smul.u32 %s2822, 4
        %s2824 = smul.addr %s2823, 4
        %s2825 = scalar_lea.vmem [#allocation2], %s2824
        %v2826 = vld [vmem:[%s2825] sm:$0xff]
        %v2827 = vld [vmem:[%s2825 + $0x8] sm:$0xff]
        %v2828 = vld [vmem:[%s2825 + $0x10] sm:$0xff]
        %v2829 = vld [vmem:[%s2825 + $0x18] sm:$0xff]
        %v2830 = vld [vmem:[%s2825 + $0x20] sm:$0xff]
        %v2831 = vld [vmem:[%s2825 + $0x28] sm:$0xff]
        %v2832 = vld [vmem:[%s2825 + $0x30] sm:$0xff]
        %v2833 = vld [vmem:[%s2825 + $0x38] sm:$0xff]
        %v2834 = vld [vmem:[%s2825 + $0x40] sm:$0xff]
        %v2835 = vld [vmem:[%s2825 + $0x48] sm:$0xff]
        %v2836 = vld [vmem:[%s2825 + $0x50] sm:$0xff]
        %v2837 = vld [vmem:[%s2825 + $0x58] sm:$0xff]
        %v2838 = vld [vmem:[%s2825 + $0x60] sm:$0xff]
        %v2839 = vld [vmem:[%s2825 + $0x68] sm:$0xff]
        %v2840 = vld [vmem:[%s2825 + $0x70] sm:$0xff]
        %v2841 = vld [vmem:[%s2825 + $0x78] sm:$0xff]
        %s2842 = scalar_lea.vmem %s3, 96
        %v2843 = vld [vmem:[%s2842] sm:$0xf]
        %v2844 = vld [vmem:[%s2842 + $0x4] sm:$0xf]
        %v2845 = vld [vmem:[%s2842 + $0x8] sm:$0xf]
        %v2846 = vld [vmem:[%s2842 + $0xc] sm:$0xf]
        %v2847 = vld [vmem:[%s2842 + $0x10] sm:$0xf]
        %v2848 = vld [vmem:[%s2842 + $0x14] sm:$0xf]
        %v2849 = vld [vmem:[%s2842 + $0x18] sm:$0xf]
        %v2850 = vld [vmem:[%s2842 + $0x1c] sm:$0xf]
        %v2851 = vld [vmem:[%s2842 + $0x20] sm:$0xf]
        %v2852 = vld [vmem:[%s2842 + $0x24] sm:$0xf]
        %v2853 = vld [vmem:[%s2842 + $0x28] sm:$0xf]
        %v2854 = vld [vmem:[%s2842 + $0x2c] sm:$0xf]
        %v2855 = vld [vmem:[%s2842 + $0x30] sm:$0xf]
        %v2856 = vld [vmem:[%s2842 + $0x34] sm:$0xf]
        %v2857 = vld [vmem:[%s2842 + $0x38] sm:$0xf]
        %v2858 = vld [vmem:[%s2842 + $0x3c] sm:$0xf]
        %v2859 = vld [vmem:[%s2842 + $0x40] sm:$0xf]
        %v2860 = vld [vmem:[%s2842 + $0x44] sm:$0xf]
        %v2861 = vld [vmem:[%s2842 + $0x48] sm:$0xf]
        %v2862 = vld [vmem:[%s2842 + $0x4c] sm:$0xf]
        %v2863 = vld [vmem:[%s2842 + $0x50] sm:$0xf]
        %v2864 = vld [vmem:[%s2842 + $0x54] sm:$0xf]
        %v2865 = vld [vmem:[%s2842 + $0x58] sm:$0xf]
        %v2866 = vld [vmem:[%s2842 + $0x5c] sm:$0xf]
        %v2883 = vunpack.c.l.b16 %v2826
        %v2884 = vunpack.c.h.b16 %v2826
        %v2885 = vunpack.c.l.b16 %v2827
        %v2886 = vunpack.c.h.b16 %v2827
        %v2887 = vunpack.c.l.b16 %v2828
        %v2888 = vunpack.c.h.b16 %v2828
        %v2889 = vunpack.c.l.b16 %v2829
        %v2890 = vunpack.c.h.b16 %v2829
        %v2891 = vunpack.c.l.b16 %v2830
        %v2892 = vunpack.c.h.b16 %v2830
        %v2893 = vunpack.c.l.b16 %v2831
        %v2894 = vunpack.c.h.b16 %v2831
        %v2895 = vunpack.c.l.b16 %v2832
        %v2896 = vunpack.c.h.b16 %v2832
        %v2897 = vunpack.c.l.b16 %v2833
        %v2898 = vunpack.c.h.b16 %v2833
        %v2899 = vunpack.c.l.b16 %v2834
        %v2900 = vunpack.c.h.b16 %v2834
        %v2901 = vunpack.c.l.b16 %v2835
        %v2902 = vunpack.c.h.b16 %v2835
        %v2903 = vunpack.c.l.b16 %v2836
        %v2904 = vunpack.c.h.b16 %v2836
        %v2905 = vunpack.c.l.b16 %v2837
        %v2906 = vunpack.c.h.b16 %v2837
        %v2907 = vunpack.c.l.b16 %v2838
        %v2908 = vunpack.c.h.b16 %v2838
        %v2909 = vunpack.c.l.b16 %v2839
        %v2910 = vunpack.c.h.b16 %v2839
        %v2911 = vunpack.c.l.b16 %v2840
        %v2912 = vunpack.c.h.b16 %v2840
        %v2913 = vunpack.c.l.b16 %v2841
        %v2914 = vunpack.c.h.b16 %v2841
        %v2915 = vpack.c.b16 %v2885, %v2883
        %v2916 = vpack.c.b16 %v2886, %v2884
        %v2917 = vpack.c.b16 %v2889, %v2887
        %v2918 = vpack.c.b16 %v2890, %v2888
        %v2919 = vpack.c.b16 %v2893, %v2891
        %v2920 = vpack.c.b16 %v2894, %v2892
        %v2921 = vpack.c.b16 %v2897, %v2895
        %v2922 = vpack.c.b16 %v2898, %v2896
        %v2923 = vpack.c.b16 %v2901, %v2899
        %v2924 = vpack.c.b16 %v2902, %v2900
        %v2925 = vpack.c.b16 %v2905, %v2903
        %v2926 = vpack.c.b16 %v2906, %v2904
        %v2927 = vpack.c.b16 %v2909, %v2907
        %v2928 = vpack.c.b16 %v2910, %v2908
        %v2929 = vpack.c.b16 %v2913, %v2911
        %v2930 = vpack.c.b16 %v2914, %v2912
        %v2963 = vunpack.c.l.b16 %v2843
        %v2964 = vunpack.c.l.b16 %v2844
        %v2965 = vunpack.c.l.b16 %v2845
        %v2966 = vunpack.c.l.b16 %v2846
        %v2967 = vunpack.c.l.b16 %v2847
        %v2968 = vunpack.c.l.b16 %v2848
        %v2969 = vunpack.c.l.b16 %v2849
        %v2970 = vunpack.c.l.b16 %v2850
        %v2971 = vunpack.c.l.b16 %v2851
        %v2972 = vunpack.c.l.b16 %v2852
        %v2973 = vunpack.c.l.b16 %v2853
        %v2974 = vunpack.c.l.b16 %v2854
        %v2975 = vunpack.c.l.b16 %v2855
        %v2976 = vunpack.c.l.b16 %v2856
        %v2977 = vunpack.c.l.b16 %v2857
        %v2978 = vunpack.c.l.b16 %v2858
        %v2979 = vunpack.c.l.b16 %v2859
        %v2980 = vunpack.c.l.b16 %v2860
        %v2981 = vunpack.c.l.b16 %v2861
        %v2982 = vunpack.c.l.b16 %v2862
        %v2983 = vunpack.c.l.b16 %v2863
        %v2984 = vunpack.c.l.b16 %v2864
        %v2985 = vunpack.c.l.b16 %v2865
        %v2986 = vunpack.c.l.b16 %v2866
        %v2987 = vpack.c.b16 %v2964, %v2963
        %v2988 = vpack.c.b16 %v2966, %v2965
        %v2989 = vpack.c.b16 %v2968, %v2967
        %v2990 = vpack.c.b16 %v2970, %v2969
        %v2991 = vpack.c.b16 %v2972, %v2971
        %v2992 = vpack.c.b16 %v2974, %v2973
        %v2993 = vpack.c.b16 %v2976, %v2975
        %v2994 = vpack.c.b16 %v2978, %v2977
        %v2995 = vpack.c.b16 %v2980, %v2979
        %v2996 = vpack.c.b16 %v2982, %v2981
        %v2997 = vpack.c.b16 %v2984, %v2983
        %v2998 = vpack.c.b16 %v2986, %v2985
        %vm3011 = vcmask 523264
        %v3013 = vsel %vm3011, %v2916, 0
        %v3016 = vsel %vm3011, %v2918, 0
        %v3019 = vsel %vm3011, %v2920, 0
        %v3022 = vsel %vm3011, %v2922, 0
        %v3025 = vsel %vm3011, %v2924, 0
        %v3028 = vsel %vm3011, %v2926, 0
        %v3031 = vsel %vm3011, %v2928, 0
        %v3034 = vsel %vm3011, %v2930, 0
        %3036 = vmatprep.subr.bf16.mxu0 0
        %3037 = vmatpush1.bf16.msra.mxu0 %v2994
        %3038 = vmatprep.subr.bf16.mxu0 0
        %3039 = vmatpush1.bf16.msra.mxu0 %v2993
        %3040 = vmatprep.subr.bf16.mxu0 0
        %3041 = vmatpush1.bf16.msra.mxu0 %v2992
        %3042 = vmatprep.subr.bf16.mxu0 0
        %3043 = vmatpush1.bf16.msra.mxu0 %v2991
        %3044 = vmatprep.subr.bf16.mxu0 0
        %3045 = vmatpush1.bf16.msra.mxu0 %v2990
        %3046 = vmatprep.subr.bf16.mxu0 0
        %3047 = vmatpush1.bf16.msra.mxu0 %v2989
        %3048 = vmatprep.subr.bf16.mxu0 0
        %3049 = vmatpush1.bf16.msra.mxu0 %v2988
        %3050 = vmatprep.subr.bf16.mxu0 0
        %3051 = vmatpush1.bf16.msra.mxu0 %v2987
        %3052 = vmatprep.subr.bf16.mxu0 0
        %3053 = vmatpush2.bf16.msra.mxu0 0
        %3054 = vmatprep.subr.bf16.mxu0 0
        %3055 = vmatpush2.bf16.msra.mxu0 0
        %3056 = vmatprep.subr.bf16.mxu0 0
        %3057 = vmatpush2.bf16.msra.mxu0 0
        %3058 = vmatprep.subr.bf16.mxu0 0
        %3059 = vmatpush2.bf16.msra.mxu0 0
        %3060 = vmatprep.subr.bf16.mxu0 0
        %3061 = vmatpush2.bf16.msra.mxu0 %v2998
        %3062 = vmatprep.subr.bf16.mxu0 0
        %3063 = vmatpush2.bf16.msra.mxu0 %v2997
        %3064 = vmatprep.subr.bf16.mxu0 0
        %3065 = vmatpush2.bf16.msra.mxu0 %v2996
        %3066 = vmatprep.subr.bf16.mxu0 0
        %3067 = vmatpush2.bf16.msra.mxu0 %v2995
        %3068 = vmatprep.mubr.bf16.mxu0 %v3013
        %3069 = vmatmul.mubr.bf16.gmra.mxu0 %v2915
        %v3070 = vpop.f32.mrf.mxu0
        %v3071 = vadd.f32 0.0, %v3070
        %v3072 = vpop.f32.mrf.mxu0
        %v3073 = vpop.f32.mrf.mxu0
        %v3074 = vadd.f32 0.0, %v3073
        %v3075 = vpop.f32.mrf.mxu0
        %3076 = vmatprep.mubr.bf16.mxu0 %v3016
        %3077 = vmatmul.mubr.bf16.gmra.mxu0 %v2917
        %v3078 = vpop.f32.mrf.mxu0
        %v3079 = vadd.f32 0.0, %v3078
        %v3080 = vpop.f32.mrf.mxu0
        %v3081 = vpop.f32.mrf.mxu0
        %v3082 = vadd.f32 0.0, %v3081
        %v3083 = vpop.f32.mrf.mxu0
        %3084 = vmatprep.mubr.bf16.mxu0 %v3019
        %3085 = vmatmul.mubr.bf16.gmra.mxu0 %v2919
        %v3086 = vpop.f32.mrf.mxu0
        %v3087 = vadd.f32 0.0, %v3086
        %v3088 = vpop.f32.mrf.mxu0
        %v3089 = vpop.f32.mrf.mxu0
        %v3090 = vadd.f32 0.0, %v3089
        %v3091 = vpop.f32.mrf.mxu0
        %3092 = vmatprep.mubr.bf16.mxu0 %v3022
        %3093 = vmatmul.mubr.bf16.gmra.mxu0 %v2921
        %v3094 = vpop.f32.mrf.mxu0
        %v3095 = vadd.f32 0.0, %v3094
        %v3096 = vpop.f32.mrf.mxu0
        %v3097 = vpop.f32.mrf.mxu0
        %v3098 = vadd.f32 0.0, %v3097
        %v3099 = vpop.f32.mrf.mxu0
        %3100 = vmatprep.mubr.bf16.mxu0 %v3025
        %3101 = vmatmul.mubr.bf16.gmra.mxu0 %v2923
        %v3102 = vpop.f32.mrf.mxu0
        %v3103 = vadd.f32 0.0, %v3102
        %v3104 = vpop.f32.mrf.mxu0
        %v3105 = vpop.f32.mrf.mxu0
        %v3106 = vadd.f32 0.0, %v3105
        %v3107 = vpop.f32.mrf.mxu0
        %3108 = vmatprep.mubr.bf16.mxu0 %v3028
        %3109 = vmatmul.mubr.bf16.gmra.mxu0 %v2925
        %v3110 = vpop.f32.mrf.mxu0
        %v3111 = vadd.f32 0.0, %v3110
        %v3112 = vpop.f32.mrf.mxu0
        %v3113 = vpop.f32.mrf.mxu0
        %v3114 = vadd.f32 0.0, %v3113
        %v3115 = vpop.f32.mrf.mxu0
        %3116 = vmatprep.mubr.bf16.mxu0 %v3031
        %3117 = vmatmul.mubr.bf16.gmra.mxu0 %v2927
        %v3118 = vpop.f32.mrf.mxu0
        %v3119 = vadd.f32 0.0, %v3118
        %v3120 = vpop.f32.mrf.mxu0
        %v3121 = vpop.f32.mrf.mxu0
        %v3122 = vadd.f32 0.0, %v3121
        %v3123 = vpop.f32.mrf.mxu0
        %3124 = vmatprep.mubr.bf16.mxu0 %v3034
        %3125 = vmatmul.mubr.bf16.gmra.mxu0 %v2929
        %v3126 = vpop.f32.mrf.mxu0
        %v3127 = vadd.f32 0.0, %v3126
        %v3128 = vpop.f32.mrf.mxu0
        %v3129 = vpop.f32.mrf.mxu0
        %v3130 = vadd.f32 0.0, %v3129
        %v3131 = vpop.f32.mrf.mxu0
        %3132 = vdwg.mxu0
        %v3149 = vunpack.c.l.b16 %v2782
        %v3150 = vunpack.c.h.b16 %v2782
        %v3151 = vunpack.c.l.b16 %v2783
        %v3152 = vunpack.c.h.b16 %v2783
        %v3153 = vunpack.c.l.b16 %v2784
        %v3154 = vunpack.c.h.b16 %v2784
        %v3155 = vunpack.c.l.b16 %v2785
        %v3156 = vunpack.c.h.b16 %v2785
        %v3157 = vunpack.c.l.b16 %v2786
        %v3158 = vunpack.c.h.b16 %v2786
        %v3159 = vunpack.c.l.b16 %v2787
        %v3160 = vunpack.c.h.b16 %v2787
        %v3161 = vunpack.c.l.b16 %v2788
        %v3162 = vunpack.c.h.b16 %v2788
        %v3163 = vunpack.c.l.b16 %v2789
        %v3164 = vunpack.c.h.b16 %v2789
        %v3165 = vunpack.c.l.b16 %v2790
        %v3166 = vunpack.c.h.b16 %v2790
        %v3167 = vunpack.c.l.b16 %v2791
        %v3168 = vunpack.c.h.b16 %v2791
        %v3169 = vunpack.c.l.b16 %v2792
        %v3170 = vunpack.c.h.b16 %v2792
        %v3171 = vunpack.c.l.b16 %v2793
        %v3172 = vunpack.c.h.b16 %v2793
        %v3173 = vunpack.c.l.b16 %v2794
        %v3174 = vunpack.c.h.b16 %v2794
        %v3175 = vunpack.c.l.b16 %v2795
        %v3176 = vunpack.c.h.b16 %v2795
        %v3177 = vunpack.c.l.b16 %v2796
        %v3178 = vunpack.c.h.b16 %v2796
        %v3179 = vunpack.c.l.b16 %v2797
        %v3180 = vunpack.c.h.b16 %v2797
        %v3181 = vpack.c.b16 %v3151, %v3149
        %v3182 = vpack.c.b16 %v3152, %v3150
        %v3183 = vpack.c.b16 %v3155, %v3153
        %v3184 = vpack.c.b16 %v3156, %v3154
        %v3185 = vpack.c.b16 %v3159, %v3157
        %v3186 = vpack.c.b16 %v3160, %v3158
        %v3187 = vpack.c.b16 %v3163, %v3161
        %v3188 = vpack.c.b16 %v3164, %v3162
        %v3189 = vpack.c.b16 %v3167, %v3165
        %v3190 = vpack.c.b16 %v3168, %v3166
        %v3191 = vpack.c.b16 %v3171, %v3169
        %v3192 = vpack.c.b16 %v3172, %v3170
        %v3193 = vpack.c.b16 %v3175, %v3173
        %v3194 = vpack.c.b16 %v3176, %v3174
        %v3195 = vpack.c.b16 %v3179, %v3177
        %v3196 = vpack.c.b16 %v3180, %v3178
        %v3229 = vunpack.c.l.b16 %v2798
        %v3230 = vunpack.c.l.b16 %v2799
        %v3231 = vunpack.c.l.b16 %v2800
        %v3232 = vunpack.c.l.b16 %v2801
        %v3233 = vunpack.c.l.b16 %v2802
        %v3234 = vunpack.c.l.b16 %v2803
        %v3235 = vunpack.c.l.b16 %v2804
        %v3236 = vunpack.c.l.b16 %v2805
        %v3237 = vunpack.c.l.b16 %v2806
        %v3238 = vunpack.c.l.b16 %v2807
        %v3239 = vunpack.c.l.b16 %v2808
        %v3240 = vunpack.c.l.b16 %v2809
        %v3241 = vunpack.c.l.b16 %v2810
        %v3242 = vunpack.c.l.b16 %v2811
        %v3243 = vunpack.c.l.b16 %v2812
        %v3244 = vunpack.c.l.b16 %v2813
        %v3245 = vunpack.c.l.b16 %v2814
        %v3246 = vunpack.c.l.b16 %v2815
        %v3247 = vunpack.c.l.b16 %v2816
        %v3248 = vunpack.c.l.b16 %v2817
        %v3249 = vunpack.c.l.b16 %v2818
        %v3250 = vunpack.c.l.b16 %v2819
        %v3251 = vunpack.c.l.b16 %v2820
        %v3252 = vunpack.c.l.b16 %v2821
        %v3253 = vpack.c.b16 %v3230, %v3229
        %v3254 = vpack.c.b16 %v3232, %v3231
        %v3255 = vpack.c.b16 %v3234, %v3233
        %v3256 = vpack.c.b16 %v3236, %v3235
        %v3257 = vpack.c.b16 %v3238, %v3237
        %v3258 = vpack.c.b16 %v3240, %v3239
        %v3259 = vpack.c.b16 %v3242, %v3241
        %v3260 = vpack.c.b16 %v3244, %v3243
        %v3261 = vpack.c.b16 %v3246, %v3245
        %v3262 = vpack.c.b16 %v3248, %v3247
        %v3263 = vpack.c.b16 %v3250, %v3249
        %v3264 = vpack.c.b16 %v3252, %v3251
        %v3278 = vsel %vm3011, %v3182, 0
        %v3281 = vsel %vm3011, %v3184, 0
        %v3284 = vsel %vm3011, %v3186, 0
        %v3287 = vsel %vm3011, %v3188, 0
        %v3290 = vsel %vm3011, %v3190, 0
        %v3293 = vsel %vm3011, %v3192, 0
        %v3296 = vsel %vm3011, %v3194, 0
        %v3299 = vsel %vm3011, %v3196, 0
        %3301 = vmatprep.subr.bf16.mxu0 0
        %3302 = vmatpush1.bf16.msra.mxu0 %v3260
        %3303 = vmatprep.subr.bf16.mxu0 0
        %3304 = vmatpush1.bf16.msra.mxu0 %v3259
        %3305 = vmatprep.subr.bf16.mxu0 0
        %3306 = vmatpush1.bf16.msra.mxu0 %v3258
        %3307 = vmatprep.subr.bf16.mxu0 0
        %3308 = vmatpush1.bf16.msra.mxu0 %v3257
        %3309 = vmatprep.subr.bf16.mxu0 0
        %3310 = vmatpush1.bf16.msra.mxu0 %v3256
        %3311 = vmatprep.subr.bf16.mxu0 0
        %3312 = vmatpush1.bf16.msra.mxu0 %v3255
        %3313 = vmatprep.subr.bf16.mxu0 0
        %3314 = vmatpush1.bf16.msra.mxu0 %v3254
        %3315 = vmatprep.subr.bf16.mxu0 0
        %3316 = vmatpush1.bf16.msra.mxu0 %v3253
        %3317 = vmatprep.subr.bf16.mxu0 0
        %3318 = vmatpush2.bf16.msra.mxu0 0
        %3319 = vmatprep.subr.bf16.mxu0 0
        %3320 = vmatpush2.bf16.msra.mxu0 0
        %3321 = vmatprep.subr.bf16.mxu0 0
        %3322 = vmatpush2.bf16.msra.mxu0 0
        %3323 = vmatprep.subr.bf16.mxu0 0
        %3324 = vmatpush2.bf16.msra.mxu0 0
        %3325 = vmatprep.subr.bf16.mxu0 0
        %3326 = vmatpush2.bf16.msra.mxu0 %v3264
        %3327 = vmatprep.subr.bf16.mxu0 0
        %3328 = vmatpush2.bf16.msra.mxu0 %v3263
        %3329 = vmatprep.subr.bf16.mxu0 0
        %3330 = vmatpush2.bf16.msra.mxu0 %v3262
        %3331 = vmatprep.subr.bf16.mxu0 0
        %3332 = vmatpush2.bf16.msra.mxu0 %v3261
        %3333 = vmatprep.mubr.bf16.mxu0 %v3278
        %3334 = vmatmul.mubr.bf16.gmra.mxu0 %v3181
        %v3335 = vpop.f32.mrf.mxu0
        %v3336 = vadd.f32 %v3071, %v3335
        %v3337 = vpop.f32.mrf.mxu0
        %v3338 = vpop.f32.mrf.mxu0
        %v3339 = vadd.f32 %v3074, %v3338
        %v3340 = vpop.f32.mrf.mxu0
        %3341 = vmatprep.mubr.bf16.mxu0 %v3281
        %3342 = vmatmul.mubr.bf16.gmra.mxu0 %v3183
        %v3343 = vpop.f32.mrf.mxu0
        %v3344 = vadd.f32 %v3079, %v3343
        %v3345 = vpop.f32.mrf.mxu0
        %v3346 = vpop.f32.mrf.mxu0
        %v3347 = vadd.f32 %v3082, %v3346
        %v3348 = vpop.f32.mrf.mxu0
        %3349 = vmatprep.mubr.bf16.mxu0 %v3284
        %3350 = vmatmul.mubr.bf16.gmra.mxu0 %v3185
        %v3351 = vpop.f32.mrf.mxu0
        %v3352 = vadd.f32 %v3087, %v3351
        %v3353 = vpop.f32.mrf.mxu0
        %v3354 = vpop.f32.mrf.mxu0
        %v3355 = vadd.f32 %v3090, %v3354
        %v3356 = vpop.f32.mrf.mxu0
        %3357 = vmatprep.mubr.bf16.mxu0 %v3287
        %3358 = vmatmul.mubr.bf16.gmra.mxu0 %v3187
        %v3359 = vpop.f32.mrf.mxu0
        %v3360 = vadd.f32 %v3095, %v3359
        %v3361 = vpop.f32.mrf.mxu0
        %v3362 = vpop.f32.mrf.mxu0
        %v3363 = vadd.f32 %v3098, %v3362
        %v3364 = vpop.f32.mrf.mxu0
        %3365 = vmatprep.mubr.bf16.mxu0 %v3290
        %3366 = vmatmul.mubr.bf16.gmra.mxu0 %v3189
        %v3367 = vpop.f32.mrf.mxu0
        %v3368 = vadd.f32 %v3103, %v3367
        %v3369 = vpop.f32.mrf.mxu0
        %v3370 = vpop.f32.mrf.mxu0
        %v3371 = vadd.f32 %v3106, %v3370
        %v3372 = vpop.f32.mrf.mxu0
        %3373 = vmatprep.mubr.bf16.mxu0 %v3293
        %3374 = vmatmul.mubr.bf16.gmra.mxu0 %v3191
        %v3375 = vpop.f32.mrf.mxu0
        %v3376 = vadd.f32 %v3111, %v3375
        %v3377 = vpop.f32.mrf.mxu0
        %v3378 = vpop.f32.mrf.mxu0
        %v3379 = vadd.f32 %v3114, %v3378
        %v3380 = vpop.f32.mrf.mxu0
        %3381 = vmatprep.mubr.bf16.mxu0 %v3296
        %3382 = vmatmul.mubr.bf16.gmra.mxu0 %v3193
        %v3383 = vpop.f32.mrf.mxu0
        %v3384 = vadd.f32 %v3119, %v3383
        %v3385 = vpop.f32.mrf.mxu0
        %v3386 = vpop.f32.mrf.mxu0
        %v3387 = vadd.f32 %v3122, %v3386
        %v3388 = vpop.f32.mrf.mxu0
        %3389 = vmatprep.mubr.bf16.mxu0 %v3299
        %3390 = vmatmul.mubr.bf16.gmra.mxu0 %v3195
        %v3391 = vpop.f32.mrf.mxu0
        %v3392 = vadd.f32 %v3127, %v3391
        %v3393 = vpop.f32.mrf.mxu0
        %v3394 = vpop.f32.mrf.mxu0
        %v3395 = vadd.f32 %v3130, %v3394
        %v3396 = vpop.f32.mrf.mxu0
        %3397 = vdwg.mxu0
        %s3398 = sadd.s32 %s2778, 2
        %s3399 = smul.u32 %s3398, 4
        %s3400 = smul.addr %s3399, 4
        %s3401 = scalar_lea.vmem [#allocation2], %s3400
        %v3402 = vld [vmem:[%s3401] sm:$0xff]
        %v3403 = vld [vmem:[%s3401 + $0x8] sm:$0xff]
        %v3404 = vld [vmem:[%s3401 + $0x10] sm:$0xff]
        %v3405 = vld [vmem:[%s3401 + $0x18] sm:$0xff]
        %v3406 = vld [vmem:[%s3401 + $0x20] sm:$0xff]
        %v3407 = vld [vmem:[%s3401 + $0x28] sm:$0xff]
        %v3408 = vld [vmem:[%s3401 + $0x30] sm:$0xff]
        %v3409 = vld [vmem:[%s3401 + $0x38] sm:$0xff]
        %v3410 = vld [vmem:[%s3401 + $0x40] sm:$0xff]
        %v3411 = vld [vmem:[%s3401 + $0x48] sm:$0xff]
        %v3412 = vld [vmem:[%s3401 + $0x50] sm:$0xff]
        %v3413 = vld [vmem:[%s3401 + $0x58] sm:$0xff]
        %v3414 = vld [vmem:[%s3401 + $0x60] sm:$0xff]
        %v3415 = vld [vmem:[%s3401 + $0x68] sm:$0xff]
        %v3416 = vld [vmem:[%s3401 + $0x70] sm:$0xff]
        %v3417 = vld [vmem:[%s3401 + $0x78] sm:$0xff]
        %s3418 = scalar_lea.vmem %s3, 192
        %v3419 = vld [vmem:[%s3418] sm:$0xf]
        %v3420 = vld [vmem:[%s3418 + $0x4] sm:$0xf]
        %v3421 = vld [vmem:[%s3418 + $0x8] sm:$0xf]
        %v3422 = vld [vmem:[%s3418 + $0xc] sm:$0xf]
        %v3423 = vld [vmem:[%s3418 + $0x10] sm:$0xf]
        %v3424 = vld [vmem:[%s3418 + $0x14] sm:$0xf]
        %v3425 = vld [vmem:[%s3418 + $0x18] sm:$0xf]
        %v3426 = vld [vmem:[%s3418 + $0x1c] sm:$0xf]
        %v3427 = vld [vmem:[%s3418 + $0x20] sm:$0xf]
        %v3428 = vld [vmem:[%s3418 + $0x24] sm:$0xf]
        %v3429 = vld [vmem:[%s3418 + $0x28] sm:$0xf]
        %v3430 = vld [vmem:[%s3418 + $0x2c] sm:$0xf]
        %v3431 = vld [vmem:[%s3418 + $0x30] sm:$0xf]
        %v3432 = vld [vmem:[%s3418 + $0x34] sm:$0xf]
        %v3433 = vld [vmem:[%s3418 + $0x38] sm:$0xf]
        %v3434 = vld [vmem:[%s3418 + $0x3c] sm:$0xf]
        %v3435 = vld [vmem:[%s3418 + $0x40] sm:$0xf]
        %v3436 = vld [vmem:[%s3418 + $0x44] sm:$0xf]
        %v3437 = vld [vmem:[%s3418 + $0x48] sm:$0xf]
        %v3438 = vld [vmem:[%s3418 + $0x4c] sm:$0xf]
        %v3439 = vld [vmem:[%s3418 + $0x50] sm:$0xf]
        %v3440 = vld [vmem:[%s3418 + $0x54] sm:$0xf]
        %v3441 = vld [vmem:[%s3418 + $0x58] sm:$0xf]
        %v3442 = vld [vmem:[%s3418 + $0x5c] sm:$0xf]
        %v3459 = vunpack.c.l.b16 %v3402
        %v3460 = vunpack.c.h.b16 %v3402
        %v3461 = vunpack.c.l.b16 %v3403
        %v3462 = vunpack.c.h.b16 %v3403
        %v3463 = vunpack.c.l.b16 %v3404
        %v3464 = vunpack.c.h.b16 %v3404
        %v3465 = vunpack.c.l.b16 %v3405
        %v3466 = vunpack.c.h.b16 %v3405
        %v3467 = vunpack.c.l.b16 %v3406
        %v3468 = vunpack.c.h.b16 %v3406
        %v3469 = vunpack.c.l.b16 %v3407
        %v3470 = vunpack.c.h.b16 %v3407
        %v3471 = vunpack.c.l.b16 %v3408
        %v3472 = vunpack.c.h.b16 %v3408
        %v3473 = vunpack.c.l.b16 %v3409
        %v3474 = vunpack.c.h.b16 %v3409
        %v3475 = vunpack.c.l.b16 %v3410
        %v3476 = vunpack.c.h.b16 %v3410
        %v3477 = vunpack.c.l.b16 %v3411
        %v3478 = vunpack.c.h.b16 %v3411
        %v3479 = vunpack.c.l.b16 %v3412
        %v3480 = vunpack.c.h.b16 %v3412
        %v3481 = vunpack.c.l.b16 %v3413
        %v3482 = vunpack.c.h.b16 %v3413
        %v3483 = vunpack.c.l.b16 %v3414
        %v3484 = vunpack.c.h.b16 %v3414
        %v3485 = vunpack.c.l.b16 %v3415
        %v3486 = vunpack.c.h.b16 %v3415
        %v3487 = vunpack.c.l.b16 %v3416
        %v3488 = vunpack.c.h.b16 %v3416
        %v3489 = vunpack.c.l.b16 %v3417
        %v3490 = vunpack.c.h.b16 %v3417
        %v3491 = vpack.c.b16 %v3461, %v3459
        %v3492 = vpack.c.b16 %v3462, %v3460
        %v3493 = vpack.c.b16 %v3465, %v3463
        %v3494 = vpack.c.b16 %v3466, %v3464
        %v3495 = vpack.c.b16 %v3469, %v3467
        %v3496 = vpack.c.b16 %v3470, %v3468
        %v3497 = vpack.c.b16 %v3473, %v3471
        %v3498 = vpack.c.b16 %v3474, %v3472
        %v3499 = vpack.c.b16 %v3477, %v3475
        %v3500 = vpack.c.b16 %v3478, %v3476
        %v3501 = vpack.c.b16 %v3481, %v3479
        %v3502 = vpack.c.b16 %v3482, %v3480
        %v3503 = vpack.c.b16 %v3485, %v3483
        %v3504 = vpack.c.b16 %v3486, %v3484
        %v3505 = vpack.c.b16 %v3489, %v3487
        %v3506 = vpack.c.b16 %v3490, %v3488
        %v3539 = vunpack.c.l.b16 %v3419
        %v3540 = vunpack.c.l.b16 %v3420
        %v3541 = vunpack.c.l.b16 %v3421
        %v3542 = vunpack.c.l.b16 %v3422
        %v3543 = vunpack.c.l.b16 %v3423
        %v3544 = vunpack.c.l.b16 %v3424
        %v3545 = vunpack.c.l.b16 %v3425
        %v3546 = vunpack.c.l.b16 %v3426
        %v3547 = vunpack.c.l.b16 %v3427
        %v3548 = vunpack.c.l.b16 %v3428
        %v3549 = vunpack.c.l.b16 %v3429
        %v3550 = vunpack.c.l.b16 %v3430
        %v3551 = vunpack.c.l.b16 %v3431
        %v3552 = vunpack.c.l.b16 %v3432
        %v3553 = vunpack.c.l.b16 %v3433
        %v3554 = vunpack.c.l.b16 %v3434
        %v3555 = vunpack.c.l.b16 %v3435
        %v3556 = vunpack.c.l.b16 %v3436
        %v3557 = vunpack.c.l.b16 %v3437
        %v3558 = vunpack.c.l.b16 %v3438
        %v3559 = vunpack.c.l.b16 %v3439
        %v3560 = vunpack.c.l.b16 %v3440
        %v3561 = vunpack.c.l.b16 %v3441
        %v3562 = vunpack.c.l.b16 %v3442
        %v3563 = vpack.c.b16 %v3540, %v3539
        %v3564 = vpack.c.b16 %v3542, %v3541
        %v3565 = vpack.c.b16 %v3544, %v3543
        %v3566 = vpack.c.b16 %v3546, %v3545
        %v3567 = vpack.c.b16 %v3548, %v3547
        %v3568 = vpack.c.b16 %v3550, %v3549
        %v3569 = vpack.c.b16 %v3552, %v3551
        %v3570 = vpack.c.b16 %v3554, %v3553
        %v3571 = vpack.c.b16 %v3556, %v3555
        %v3572 = vpack.c.b16 %v3558, %v3557
        %v3573 = vpack.c.b16 %v3560, %v3559
        %v3574 = vpack.c.b16 %v3562, %v3561
        %v3588 = vsel %vm3011, %v3492, 0
        %v3591 = vsel %vm3011, %v3494, 0
        %v3594 = vsel %vm3011, %v3496, 0
        %v3597 = vsel %vm3011, %v3498, 0
        %v3600 = vsel %vm3011, %v3500, 0
        %v3603 = vsel %vm3011, %v3502, 0
        %v3606 = vsel %vm3011, %v3504, 0
        %v3609 = vsel %vm3011, %v3506, 0
        %3611 = vmatprep.subr.bf16.mxu0 0
        %3612 = vmatpush1.bf16.msra.mxu0 %v3570
        %3613 = vmatprep.subr.bf16.mxu0 0
        %3614 = vmatpush1.bf16.msra.mxu0 %v3569
        %3615 = vmatprep.subr.bf16.mxu0 0
        %3616 = vmatpush1.bf16.msra.mxu0 %v3568
        %3617 = vmatprep.subr.bf16.mxu0 0
        %3618 = vmatpush1.bf16.msra.mxu0 %v3567
        %3619 = vmatprep.subr.bf16.mxu0 0
        %3620 = vmatpush1.bf16.msra.mxu0 %v3566
        %3621 = vmatprep.subr.bf16.mxu0 0
        %3622 = vmatpush1.bf16.msra.mxu0 %v3565
        %3623 = vmatprep.subr.bf16.mxu0 0
        %3624 = vmatpush1.bf16.msra.mxu0 %v3564
        %3625 = vmatprep.subr.bf16.mxu0 0
        %3626 = vmatpush1.bf16.msra.mxu0 %v3563
        %3627 = vmatprep.subr.bf16.mxu0 0
        %3628 = vmatpush2.bf16.msra.mxu0 0
        %3629 = vmatprep.subr.bf16.mxu0 0
        %3630 = vmatpush2.bf16.msra.mxu0 0
        %3631 = vmatprep.subr.bf16.mxu0 0
        %3632 = vmatpush2.bf16.msra.mxu0 0
        %3633 = vmatprep.subr.bf16.mxu0 0
        %3634 = vmatpush2.bf16.msra.mxu0 0
        %3635 = vmatprep.subr.bf16.mxu0 0
        %3636 = vmatpush2.bf16.msra.mxu0 %v3574
        %3637 = vmatprep.subr.bf16.mxu0 0
        %3638 = vmatpush2.bf16.msra.mxu0 %v3573
        %3639 = vmatprep.subr.bf16.mxu0 0
        %3640 = vmatpush2.bf16.msra.mxu0 %v3572
        %3641 = vmatprep.subr.bf16.mxu0 0
        %3642 = vmatpush2.bf16.msra.mxu0 %v3571
        %3643 = vmatprep.mubr.bf16.mxu0 %v3588
        %3644 = vmatmul.mubr.bf16.gmra.mxu0 %v3491
        %v3645 = vpop.f32.mrf.mxu0
        %v3646 = vadd.f32 0.0, %v3645
        %v3647 = vpop.f32.mrf.mxu0
        %v3648 = vpop.f32.mrf.mxu0
        %v3649 = vadd.f32 0.0, %v3648
        %v3650 = vpop.f32.mrf.mxu0
        %3651 = vmatprep.mubr.bf16.mxu0 %v3591
        %3652 = vmatmul.mubr.bf16.gmra.mxu0 %v3493
        %v3653 = vpop.f32.mrf.mxu0
        %v3654 = vadd.f32 0.0, %v3653
        %v3655 = vpop.f32.mrf.mxu0
        %v3656 = vpop.f32.mrf.mxu0
        %v3657 = vadd.f32 0.0, %v3656
        %v3658 = vpop.f32.mrf.mxu0
        %3659 = vmatprep.mubr.bf16.mxu0 %v3594
        %3660 = vmatmul.mubr.bf16.gmra.mxu0 %v3495
        %v3661 = vpop.f32.mrf.mxu0
        %v3662 = vadd.f32 0.0, %v3661
        %v3663 = vpop.f32.mrf.mxu0
        %v3664 = vpop.f32.mrf.mxu0
        %v3665 = vadd.f32 0.0, %v3664
        %v3666 = vpop.f32.mrf.mxu0
        %3667 = vmatprep.mubr.bf16.mxu0 %v3597
        %3668 = vmatmul.mubr.bf16.gmra.mxu0 %v3497
        %v3669 = vpop.f32.mrf.mxu0
        %v3670 = vadd.f32 0.0, %v3669
        %v3671 = vpop.f32.mrf.mxu0
        %v3672 = vpop.f32.mrf.mxu0
        %v3673 = vadd.f32 0.0, %v3672
        %v3674 = vpop.f32.mrf.mxu0
        %3675 = vmatprep.mubr.bf16.mxu0 %v3600
        %3676 = vmatmul.mubr.bf16.gmra.mxu0 %v3499
        %v3677 = vpop.f32.mrf.mxu0
        %v3678 = vadd.f32 0.0, %v3677
        %v3679 = vpop.f32.mrf.mxu0
        %v3680 = vpop.f32.mrf.mxu0
        %v3681 = vadd.f32 0.0, %v3680
        %v3682 = vpop.f32.mrf.mxu0
        %3683 = vmatprep.mubr.bf16.mxu0 %v3603
        %3684 = vmatmul.mubr.bf16.gmra.mxu0 %v3501
        %v3685 = vpop.f32.mrf.mxu0
        %v3686 = vadd.f32 0.0, %v3685
        %v3687 = vpop.f32.mrf.mxu0
        %v3688 = vpop.f32.mrf.mxu0
        %v3689 = vadd.f32 0.0, %v3688
        %v3690 = vpop.f32.mrf.mxu0
        %3691 = vmatprep.mubr.bf16.mxu0 %v3606
        %3692 = vmatmul.mubr.bf16.gmra.mxu0 %v3503
        %v3693 = vpop.f32.mrf.mxu0
        %v3694 = vadd.f32 0.0, %v3693
        %v3695 = vpop.f32.mrf.mxu0
        %v3696 = vpop.f32.mrf.mxu0
        %v3697 = vadd.f32 0.0, %v3696
        %v3698 = vpop.f32.mrf.mxu0
        %3699 = vmatprep.mubr.bf16.mxu0 %v3609
        %3700 = vmatmul.mubr.bf16.gmra.mxu0 %v3505
        %v3701 = vpop.f32.mrf.mxu0
        %v3702 = vadd.f32 0.0, %v3701
        %v3703 = vpop.f32.mrf.mxu0
        %v3704 = vpop.f32.mrf.mxu0
        %v3705 = vadd.f32 0.0, %v3704
        %v3706 = vpop.f32.mrf.mxu0
        %3707 = vdwg.mxu0
        %v3708 = vadd.f32 %v3336, %v3646
        %v3709 = vadd.f32 %v3339, %v3649
        %v3710 = vadd.f32 %v3344, %v3654
        %v3711 = vadd.f32 %v3347, %v3657
        %v3712 = vadd.f32 %v3352, %v3662
        %v3713 = vadd.f32 %v3355, %v3665
        %v3714 = vadd.f32 %v3360, %v3670
        %v3715 = vadd.f32 %v3363, %v3673
        %v3716 = vadd.f32 %v3368, %v3678
        %v3717 = vadd.f32 %v3371, %v3681
        %v3718 = vadd.f32 %v3376, %v3686
        %v3719 = vadd.f32 %v3379, %v3689
        %v3720 = vadd.f32 %v3384, %v3694
        %v3721 = vadd.f32 %v3387, %v3697
        %v3722 = vadd.f32 %v3392, %v3702
        %v3723 = vadd.f32 %v3395, %v3705
        %v3724 = vld [vmem:[%s4] sm:$0x1]
        %v3726 = vlaneseq
        %v3727 = vshrl.u32 %v3726, 7
        %v3728 = vsub.s32 0, %v3727
        %v3729 = vrot.slane %v3724, %v3728
        %v3731 = vadd.f32 %v3708, %v3729
        %v3732 = vadd.f32 %v3709, %v3729
        %v3733 = vadd.f32 %v3710, %v3729
        %v3734 = vadd.f32 %v3711, %v3729
        %v3735 = vadd.f32 %v3712, %v3729
        %v3736 = vadd.f32 %v3713, %v3729
        %v3737 = vadd.f32 %v3714, %v3729
        %v3738 = vadd.f32 %v3715, %v3729
        %v3739 = vadd.f32 %v3716, %v3729
        %v3740 = vadd.f32 %v3717, %v3729
        %v3741 = vadd.f32 %v3718, %v3729
        %v3742 = vadd.f32 %v3719, %v3729
        %v3743 = vadd.f32 %v3720, %v3729
        %v3744 = vadd.f32 %v3721, %v3729
        %v3745 = vadd.f32 %v3722, %v3729
        %v3746 = vadd.f32 %v3723, %v3729
        %v3747 = vmax.f32 %v3731, 0.0
        %v3748 = vmax.f32 %v3732, 0.0
        %v3749 = vmax.f32 %v3733, 0.0
        %v3750 = vmax.f32 %v3734, 0.0
        %v3751 = vmax.f32 %v3735, 0.0
        %v3752 = vmax.f32 %v3736, 0.0
        %v3753 = vmax.f32 %v3737, 0.0
        %v3754 = vmax.f32 %v3738, 0.0
        %v3755 = vmax.f32 %v3739, 0.0
        %v3756 = vmax.f32 %v3740, 0.0
        %v3757 = vmax.f32 %v3741, 0.0
        %v3758 = vmax.f32 %v3742, 0.0
        %v3759 = vmax.f32 %v3743, 0.0
        %v3760 = vmax.f32 %v3744, 0.0
        %v3761 = vmax.f32 %v3745, 0.0
        %v3762 = vmax.f32 %v3746, 0.0
        %v3779 = vcombine.high %v3747, %v3747
        %v3781 = vunpack.c.l.s4 1983009808
        %v3782 = vunpack.c.0.s8 %v3781
        %v3783 = vlaneseq
        %v3784 = vshrl.u32 %v3783, 7
        %v3785 = vsub.s32 %v3782, %v3784
        %v3786 = vrot.slane %v3747, %v3785
        %v3788 = vunpack.c.l.s4 1983009808
        %v3789 = vunpack.c.0.s8 %v3788
        %v3790 = vlaneseq
        %v3791 = vshrl.u32 %v3790, 7
        %v3792 = vsub.s32 %v3789, %v3791
        %v3793 = vrot.slane %v3779, %v3792
        %v3794 = vcombine.high %v3786, %v3786
        %v3795 = vcombine.high %v3793, %v3793
        %v3796 = vcombine.high %v3748, %v3748
        %v3798 = vunpack.c.l.s4 1983009808
        %v3799 = vunpack.c.0.s8 %v3798
        %v3800 = vlaneseq
        %v3801 = vshrl.u32 %v3800, 7
        %v3802 = vsub.s32 %v3799, %v3801
        %v3803 = vrot.slane %v3748, %v3802
        %v3805 = vunpack.c.l.s4 1983009808
        %v3806 = vunpack.c.0.s8 %v3805
        %v3807 = vlaneseq
        %v3808 = vshrl.u32 %v3807, 7
        %v3809 = vsub.s32 %v3806, %v3808
        %v3810 = vrot.slane %v3796, %v3809
        %v3811 = vcombine.high %v3803, %v3803
        %v3812 = vcombine.high %v3810, %v3810
        %v3813 = vcombine.high %v3749, %v3749
        %v3815 = vunpack.c.l.s4 1983009808
        %v3816 = vunpack.c.0.s8 %v3815
        %v3817 = vlaneseq
        %v3818 = vshrl.u32 %v3817, 7
        %v3819 = vsub.s32 %v3816, %v3818
        %v3820 = vrot.slane %v3749, %v3819
        %v3822 = vunpack.c.l.s4 1983009808
        %v3823 = vunpack.c.0.s8 %v3822
        %v3824 = vlaneseq
        %v3825 = vshrl.u32 %v3824, 7
        %v3826 = vsub.s32 %v3823, %v3825
        %v3827 = vrot.slane %v3813, %v3826
        %v3828 = vcombine.high %v3820, %v3820
        %v3829 = vcombine.high %v3827, %v3827
        %v3830 = vcombine.high %v3750, %v3750
        %v3832 = vunpack.c.l.s4 1983009808
        %v3833 = vunpack.c.0.s8 %v3832
        %v3834 = vlaneseq
        %v3835 = vshrl.u32 %v3834, 7
        %v3836 = vsub.s32 %v3833, %v3835
        %v3837 = vrot.slane %v3750, %v3836
        %v3839 = vunpack.c.l.s4 1983009808
        %v3840 = vunpack.c.0.s8 %v3839
        %v3841 = vlaneseq
        %v3842 = vshrl.u32 %v3841, 7
        %v3843 = vsub.s32 %v3840, %v3842
        %v3844 = vrot.slane %v3830, %v3843
        %v3845 = vcombine.high %v3837, %v3837
        %v3846 = vcombine.high %v3844, %v3844
        %v3847 = vcombine.high %v3751, %v3751
        %v3849 = vunpack.c.l.s4 1983009808
        %v3850 = vunpack.c.0.s8 %v3849
        %v3851 = vlaneseq
        %v3852 = vshrl.u32 %v3851, 7
        %v3853 = vsub.s32 %v3850, %v3852
        %v3854 = vrot.slane %v3751, %v3853
        %v3856 = vunpack.c.l.s4 1983009808
        %v3857 = vunpack.c.0.s8 %v3856
        %v3858 = vlaneseq
        %v3859 = vshrl.u32 %v3858, 7
        %v3860 = vsub.s32 %v3857, %v3859
        %v3861 = vrot.slane %v3847, %v3860
        %v3862 = vcombine.high %v3854, %v3854
        %v3863 = vcombine.high %v3861, %v3861
        %v3864 = vcombine.high %v3752, %v3752
        %v3866 = vunpack.c.l.s4 1983009808
        %v3867 = vunpack.c.0.s8 %v3866
        %v3868 = vlaneseq
        %v3869 = vshrl.u32 %v3868, 7
        %v3870 = vsub.s32 %v3867, %v3869
        %v3871 = vrot.slane %v3752, %v3870
        %v3873 = vunpack.c.l.s4 1983009808
        %v3874 = vunpack.c.0.s8 %v3873
        %v3875 = vlaneseq
        %v3876 = vshrl.u32 %v3875, 7
        %v3877 = vsub.s32 %v3874, %v3876
        %v3878 = vrot.slane %v3864, %v3877
        %v3879 = vcombine.high %v3871, %v3871
        %v3880 = vcombine.high %v3878, %v3878
        %v3881 = vcombine.high %v3753, %v3753
        %v3883 = vunpack.c.l.s4 1983009808
        %v3884 = vunpack.c.0.s8 %v3883
        %v3885 = vlaneseq
        %v3886 = vshrl.u32 %v3885, 7
        %v3887 = vsub.s32 %v3884, %v3886
        %v3888 = vrot.slane %v3753, %v3887
        %v3890 = vunpack.c.l.s4 1983009808
        %v3891 = vunpack.c.0.s8 %v3890
        %v3892 = vlaneseq
        %v3893 = vshrl.u32 %v3892, 7
        %v3894 = vsub.s32 %v3891, %v3893
        %v3895 = vrot.slane %v3881, %v3894
        %v3896 = vcombine.high %v3888, %v3888
        %v3897 = vcombine.high %v3895, %v3895
        %v3898 = vcombine.high %v3754, %v3754
        %v3900 = vunpack.c.l.s4 1983009808
        %v3901 = vunpack.c.0.s8 %v3900
        %v3902 = vlaneseq
        %v3903 = vshrl.u32 %v3902, 7
        %v3904 = vsub.s32 %v3901, %v3903
        %v3905 = vrot.slane %v3754, %v3904
        %v3907 = vunpack.c.l.s4 1983009808
        %v3908 = vunpack.c.0.s8 %v3907
        %v3909 = vlaneseq
        %v3910 = vshrl.u32 %v3909, 7
        %v3911 = vsub.s32 %v3908, %v3910
        %v3912 = vrot.slane %v3898, %v3911
        %v3913 = vcombine.high %v3905, %v3905
        %v3914 = vcombine.high %v3912, %v3912
        %v3915 = vcombine.high %v3755, %v3755
        %v3917 = vunpack.c.l.s4 1983009808
        %v3918 = vunpack.c.0.s8 %v3917
        %v3919 = vlaneseq
        %v3920 = vshrl.u32 %v3919, 7
        %v3921 = vsub.s32 %v3918, %v3920
        %v3922 = vrot.slane %v3755, %v3921
        %v3924 = vunpack.c.l.s4 1983009808
        %v3925 = vunpack.c.0.s8 %v3924
        %v3926 = vlaneseq
        %v3927 = vshrl.u32 %v3926, 7
        %v3928 = vsub.s32 %v3925, %v3927
        %v3929 = vrot.slane %v3915, %v3928
        %v3930 = vcombine.high %v3922, %v3922
        %v3931 = vcombine.high %v3929, %v3929
        %v3932 = vcombine.high %v3756, %v3756
        %v3934 = vunpack.c.l.s4 1983009808
        %v3935 = vunpack.c.0.s8 %v3934
        %v3936 = vlaneseq
        %v3937 = vshrl.u32 %v3936, 7
        %v3938 = vsub.s32 %v3935, %v3937
        %v3939 = vrot.slane %v3756, %v3938
        %v3941 = vunpack.c.l.s4 1983009808
        %v3942 = vunpack.c.0.s8 %v3941
        %v3943 = vlaneseq
        %v3944 = vshrl.u32 %v3943, 7
        %v3945 = vsub.s32 %v3942, %v3944
        %v3946 = vrot.slane %v3932, %v3945
        %v3947 = vcombine.high %v3939, %v3939
        %v3948 = vcombine.high %v3946, %v3946
        %v3949 = vcombine.high %v3757, %v3757
        %v3951 = vunpack.c.l.s4 1983009808
        %v3952 = vunpack.c.0.s8 %v3951
        %v3953 = vlaneseq
        %v3954 = vshrl.u32 %v3953, 7
        %v3955 = vsub.s32 %v3952, %v3954
        %v3956 = vrot.slane %v3757, %v3955
        %v3958 = vunpack.c.l.s4 1983009808
        %v3959 = vunpack.c.0.s8 %v3958
        %v3960 = vlaneseq
        %v3961 = vshrl.u32 %v3960, 7
        %v3962 = vsub.s32 %v3959, %v3961
        %v3963 = vrot.slane %v3949, %v3962
        %v3964 = vcombine.high %v3956, %v3956
        %v3965 = vcombine.high %v3963, %v3963
        %v3966 = vcombine.high %v3758, %v3758
        %v3968 = vunpack.c.l.s4 1983009808
        %v3969 = vunpack.c.0.s8 %v3968
        %v3970 = vlaneseq
        %v3971 = vshrl.u32 %v3970, 7
        %v3972 = vsub.s32 %v3969, %v3971
        %v3973 = vrot.slane %v3758, %v3972
        %v3975 = vunpack.c.l.s4 1983009808
        %v3976 = vunpack.c.0.s8 %v3975
        %v3977 = vlaneseq
        %v3978 = vshrl.u32 %v3977, 7
        %v3979 = vsub.s32 %v3976, %v3978
        %v3980 = vrot.slane %v3966, %v3979
        %v3981 = vcombine.high %v3973, %v3973
        %v3982 = vcombine.high %v3980, %v3980
        %v3983 = vcombine.high %v3759, %v3759
        %v3985 = vunpack.c.l.s4 1983009808
        %v3986 = vunpack.c.0.s8 %v3985
        %v3987 = vlaneseq
        %v3988 = vshrl.u32 %v3987, 7
        %v3989 = vsub.s32 %v3986, %v3988
        %v3990 = vrot.slane %v3759, %v3989
        %v3992 = vunpack.c.l.s4 1983009808
        %v3993 = vunpack.c.0.s8 %v3992
        %v3994 = vlaneseq
        %v3995 = vshrl.u32 %v3994, 7
        %v3996 = vsub.s32 %v3993, %v3995
        %v3997 = vrot.slane %v3983, %v3996
        %v3998 = vcombine.high %v3990, %v3990
        %v3999 = vcombine.high %v3997, %v3997
        %v4000 = vcombine.high %v3760, %v3760
        %v4002 = vunpack.c.l.s4 1983009808
        %v4003 = vunpack.c.0.s8 %v4002
        %v4004 = vlaneseq
        %v4005 = vshrl.u32 %v4004, 7
        %v4006 = vsub.s32 %v4003, %v4005
        %v4007 = vrot.slane %v3760, %v4006
        %v4009 = vunpack.c.l.s4 1983009808
        %v4010 = vunpack.c.0.s8 %v4009
        %v4011 = vlaneseq
        %v4012 = vshrl.u32 %v4011, 7
        %v4013 = vsub.s32 %v4010, %v4012
        %v4014 = vrot.slane %v4000, %v4013
        %v4015 = vcombine.high %v4007, %v4007
        %v4016 = vcombine.high %v4014, %v4014
        %v4017 = vcombine.high %v3761, %v3761
        %v4019 = vunpack.c.l.s4 1983009808
        %v4020 = vunpack.c.0.s8 %v4019
        %v4021 = vlaneseq
        %v4022 = vshrl.u32 %v4021, 7
        %v4023 = vsub.s32 %v4020, %v4022
        %v4024 = vrot.slane %v3761, %v4023
        %v4026 = vunpack.c.l.s4 1983009808
        %v4027 = vunpack.c.0.s8 %v4026
        %v4028 = vlaneseq
        %v4029 = vshrl.u32 %v4028, 7
        %v4030 = vsub.s32 %v4027, %v4029
        %v4031 = vrot.slane %v4017, %v4030
        %v4032 = vcombine.high %v4024, %v4024
        %v4033 = vcombine.high %v4031, %v4031
        %v4034 = vcombine.high %v3762, %v3762
        %v4036 = vunpack.c.l.s4 1983009808
        %v4037 = vunpack.c.0.s8 %v4036
        %v4038 = vlaneseq
        %v4039 = vshrl.u32 %v4038, 7
        %v4040 = vsub.s32 %v4037, %v4039
        %v4041 = vrot.slane %v3762, %v4040
        %v4043 = vunpack.c.l.s4 1983009808
        %v4044 = vunpack.c.0.s8 %v4043
        %v4045 = vlaneseq
        %v4046 = vshrl.u32 %v4045, 7
        %v4047 = vsub.s32 %v4044, %v4046
        %v4048 = vrot.slane %v4034, %v4047
        %v4049 = vcombine.high %v4041, %v4041
        %v4050 = vcombine.high %v4048, %v4048
        %vm4115 = vcmask 1041408
        %v4116 = vsel %vm4115, %v3786, -inf
        %v4117 = vrot.slane %v4116, 4
        %v4118 = vmax.f32 %v4116, %v4117
        %v4119 = vrot.slane %v4118, 2
        %v4120 = vmax.f32 %v4118, %v4119
        %v4121 = vrot.slane %v4120, 1
        %v4122 = vmax.f32 %v4120, %v4121
        %v4123 = vsel %vm4115, %v3794, -inf
        %v4124 = vrot.slane %v4123, 4
        %v4125 = vmax.f32 %v4123, %v4124
        %v4126 = vrot.slane %v4125, 2
        %v4127 = vmax.f32 %v4125, %v4126
        %v4128 = vrot.slane %v4127, 1
        %v4129 = vmax.f32 %v4127, %v4128
        %v4130 = vsel %vm4115, %v3793, -inf
        %v4131 = vrot.slane %v4130, 4
        %v4132 = vmax.f32 %v4130, %v4131
        %v4133 = vrot.slane %v4132, 2
        %v4134 = vmax.f32 %v4132, %v4133
        %v4135 = vrot.slane %v4134, 1
        %v4136 = vmax.f32 %v4134, %v4135
        %v4137 = vsel %vm4115, %v3795, -inf
        %v4138 = vrot.slane %v4137, 4
        %v4139 = vmax.f32 %v4137, %v4138
        %v4140 = vrot.slane %v4139, 2
        %v4141 = vmax.f32 %v4139, %v4140
        %v4142 = vrot.slane %v4141, 1
        %v4143 = vmax.f32 %v4141, %v4142
        %v4144 = vsel %vm4115, %v3803, -inf
        %v4145 = vrot.slane %v4144, 4
        %v4146 = vmax.f32 %v4144, %v4145
        %v4147 = vrot.slane %v4146, 2
        %v4148 = vmax.f32 %v4146, %v4147
        %v4149 = vrot.slane %v4148, 1
        %v4150 = vmax.f32 %v4148, %v4149
        %v4151 = vsel %vm4115, %v3811, -inf
        %v4152 = vrot.slane %v4151, 4
        %v4153 = vmax.f32 %v4151, %v4152
        %v4154 = vrot.slane %v4153, 2
        %v4155 = vmax.f32 %v4153, %v4154
        %v4156 = vrot.slane %v4155, 1
        %v4157 = vmax.f32 %v4155, %v4156
        %v4158 = vsel %vm4115, %v3810, -inf
        %v4159 = vrot.slane %v4158, 4
        %v4160 = vmax.f32 %v4158, %v4159
        %v4161 = vrot.slane %v4160, 2
        %v4162 = vmax.f32 %v4160, %v4161
        %v4163 = vrot.slane %v4162, 1
        %v4164 = vmax.f32 %v4162, %v4163
        %v4165 = vsel %vm4115, %v3812, -inf
        %v4166 = vrot.slane %v4165, 4
        %v4167 = vmax.f32 %v4165, %v4166
        %v4168 = vrot.slane %v4167, 2
        %v4169 = vmax.f32 %v4167, %v4168
        %v4170 = vrot.slane %v4169, 1
        %v4171 = vmax.f32 %v4169, %v4170
        %v4172 = vsel %vm4115, %v3820, -inf
        %v4173 = vrot.slane %v4172, 4
        %v4174 = vmax.f32 %v4172, %v4173
        %v4175 = vrot.slane %v4174, 2
        %v4176 = vmax.f32 %v4174, %v4175
        %v4177 = vrot.slane %v4176, 1
        %v4178 = vmax.f32 %v4176, %v4177
        %v4179 = vsel %vm4115, %v3828, -inf
        %v4180 = vrot.slane %v4179, 4
        %v4181 = vmax.f32 %v4179, %v4180
        %v4182 = vrot.slane %v4181, 2
        %v4183 = vmax.f32 %v4181, %v4182
        %v4184 = vrot.slane %v4183, 1
        %v4185 = vmax.f32 %v4183, %v4184
        %v4186 = vsel %vm4115, %v3827, -inf
        %v4187 = vrot.slane %v4186, 4
        %v4188 = vmax.f32 %v4186, %v4187
        %v4189 = vrot.slane %v4188, 2
        %v4190 = vmax.f32 %v4188, %v4189
        %v4191 = vrot.slane %v4190, 1
        %v4192 = vmax.f32 %v4190, %v4191
        %v4193 = vsel %vm4115, %v3829, -inf
        %v4194 = vrot.slane %v4193, 4
        %v4195 = vmax.f32 %v4193, %v4194
        %v4196 = vrot.slane %v4195, 2
        %v4197 = vmax.f32 %v4195, %v4196
        %v4198 = vrot.slane %v4197, 1
        %v4199 = vmax.f32 %v4197, %v4198
        %v4200 = vsel %vm4115, %v3837, -inf
        %v4201 = vrot.slane %v4200, 4
        %v4202 = vmax.f32 %v4200, %v4201
        %v4203 = vrot.slane %v4202, 2
        %v4204 = vmax.f32 %v4202, %v4203
        %v4205 = vrot.slane %v4204, 1
        %v4206 = vmax.f32 %v4204, %v4205
        %v4207 = vsel %vm4115, %v3845, -inf
        %v4208 = vrot.slane %v4207, 4
        %v4209 = vmax.f32 %v4207, %v4208
        %v4210 = vrot.slane %v4209, 2
        %v4211 = vmax.f32 %v4209, %v4210
        %v4212 = vrot.slane %v4211, 1
        %v4213 = vmax.f32 %v4211, %v4212
        %v4214 = vsel %vm4115, %v3844, -inf
        %v4215 = vrot.slane %v4214, 4
        %v4216 = vmax.f32 %v4214, %v4215
        %v4217 = vrot.slane %v4216, 2
        %v4218 = vmax.f32 %v4216, %v4217
        %v4219 = vrot.slane %v4218, 1
        %v4220 = vmax.f32 %v4218, %v4219
        %v4221 = vsel %vm4115, %v3846, -inf
        %v4222 = vrot.slane %v4221, 4
        %v4223 = vmax.f32 %v4221, %v4222
        %v4224 = vrot.slane %v4223, 2
        %v4225 = vmax.f32 %v4223, %v4224
        %v4226 = vrot.slane %v4225, 1
        %v4227 = vmax.f32 %v4225, %v4226
        %v4228 = vsel %vm4115, %v3854, -inf
        %v4229 = vrot.slane %v4228, 4
        %v4230 = vmax.f32 %v4228, %v4229
        %v4231 = vrot.slane %v4230, 2
        %v4232 = vmax.f32 %v4230, %v4231
        %v4233 = vrot.slane %v4232, 1
        %v4234 = vmax.f32 %v4232, %v4233
        %v4235 = vsel %vm4115, %v3862, -inf
        %v4236 = vrot.slane %v4235, 4
        %v4237 = vmax.f32 %v4235, %v4236
        %v4238 = vrot.slane %v4237, 2
        %v4239 = vmax.f32 %v4237, %v4238
        %v4240 = vrot.slane %v4239, 1
        %v4241 = vmax.f32 %v4239, %v4240
        %v4242 = vsel %vm4115, %v3861, -inf
        %v4243 = vrot.slane %v4242, 4
        %v4244 = vmax.f32 %v4242, %v4243
        %v4245 = vrot.slane %v4244, 2
        %v4246 = vmax.f32 %v4244, %v4245
        %v4247 = vrot.slane %v4246, 1
        %v4248 = vmax.f32 %v4246, %v4247
        %v4249 = vsel %vm4115, %v3863, -inf
        %v4250 = vrot.slane %v4249, 4
        %v4251 = vmax.f32 %v4249, %v4250
        %v4252 = vrot.slane %v4251, 2
        %v4253 = vmax.f32 %v4251, %v4252
        %v4254 = vrot.slane %v4253, 1
        %v4255 = vmax.f32 %v4253, %v4254
        %v4256 = vsel %vm4115, %v3871, -inf
        %v4257 = vrot.slane %v4256, 4
        %v4258 = vmax.f32 %v4256, %v4257
        %v4259 = vrot.slane %v4258, 2
        %v4260 = vmax.f32 %v4258, %v4259
        %v4261 = vrot.slane %v4260, 1
        %v4262 = vmax.f32 %v4260, %v4261
        %v4263 = vsel %vm4115, %v3879, -inf
        %v4264 = vrot.slane %v4263, 4
        %v4265 = vmax.f32 %v4263, %v4264
        %v4266 = vrot.slane %v4265, 2
        %v4267 = vmax.f32 %v4265, %v4266
        %v4268 = vrot.slane %v4267, 1
        %v4269 = vmax.f32 %v4267, %v4268
        %v4270 = vsel %vm4115, %v3878, -inf
        %v4271 = vrot.slane %v4270, 4
        %v4272 = vmax.f32 %v4270, %v4271
        %v4273 = vrot.slane %v4272, 2
        %v4274 = vmax.f32 %v4272, %v4273
        %v4275 = vrot.slane %v4274, 1
        %v4276 = vmax.f32 %v4274, %v4275
        %v4277 = vsel %vm4115, %v3880, -inf
        %v4278 = vrot.slane %v4277, 4
        %v4279 = vmax.f32 %v4277, %v4278
        %v4280 = vrot.slane %v4279, 2
        %v4281 = vmax.f32 %v4279, %v4280
        %v4282 = vrot.slane %v4281, 1
        %v4283 = vmax.f32 %v4281, %v4282
        %v4284 = vsel %vm4115, %v3888, -inf
        %v4285 = vrot.slane %v4284, 4
        %v4286 = vmax.f32 %v4284, %v4285
        %v4287 = vrot.slane %v4286, 2
        %v4288 = vmax.f32 %v4286, %v4287
        %v4289 = vrot.slane %v4288, 1
        %v4290 = vmax.f32 %v4288, %v4289
        %v4291 = vsel %vm4115, %v3896, -inf
        %v4292 = vrot.slane %v4291, 4
        %v4293 = vmax.f32 %v4291, %v4292
        %v4294 = vrot.slane %v4293, 2
        %v4295 = vmax.f32 %v4293, %v4294
        %v4296 = vrot.slane %v4295, 1
        %v4297 = vmax.f32 %v4295, %v4296
        %v4298 = vsel %vm4115, %v3895, -inf
        %v4299 = vrot.slane %v4298, 4
        %v4300 = vmax.f32 %v4298, %v4299
        %v4301 = vrot.slane %v4300, 2
        %v4302 = vmax.f32 %v4300, %v4301
        %v4303 = vrot.slane %v4302, 1
        %v4304 = vmax.f32 %v4302, %v4303
        %v4305 = vsel %vm4115, %v3897, -inf
        %v4306 = vrot.slane %v4305, 4
        %v4307 = vmax.f32 %v4305, %v4306
        %v4308 = vrot.slane %v4307, 2
        %v4309 = vmax.f32 %v4307, %v4308
        %v4310 = vrot.slane %v4309, 1
        %v4311 = vmax.f32 %v4309, %v4310
        %v4312 = vsel %vm4115, %v3905, -inf
        %v4313 = vrot.slane %v4312, 4
        %v4314 = vmax.f32 %v4312, %v4313
        %v4315 = vrot.slane %v4314, 2
        %v4316 = vmax.f32 %v4314, %v4315
        %v4317 = vrot.slane %v4316, 1
        %v4318 = vmax.f32 %v4316, %v4317
        %v4319 = vsel %vm4115, %v3913, -inf
        %v4320 = vrot.slane %v4319, 4
        %v4321 = vmax.f32 %v4319, %v4320
        %v4322 = vrot.slane %v4321, 2
        %v4323 = vmax.f32 %v4321, %v4322
        %v4324 = vrot.slane %v4323, 1
        %v4325 = vmax.f32 %v4323, %v4324
        %v4326 = vsel %vm4115, %v3912, -inf
        %v4327 = vrot.slane %v4326, 4
        %v4328 = vmax.f32 %v4326, %v4327
        %v4329 = vrot.slane %v4328, 2
        %v4330 = vmax.f32 %v4328, %v4329
        %v4331 = vrot.slane %v4330, 1
        %v4332 = vmax.f32 %v4330, %v4331
        %v4333 = vsel %vm4115, %v3914, -inf
        %v4334 = vrot.slane %v4333, 4
        %v4335 = vmax.f32 %v4333, %v4334
        %v4336 = vrot.slane %v4335, 2
        %v4337 = vmax.f32 %v4335, %v4336
        %v4338 = vrot.slane %v4337, 1
        %v4339 = vmax.f32 %v4337, %v4338
        %v4340 = vsel %vm4115, %v3922, -inf
        %v4341 = vrot.slane %v4340, 4
        %v4342 = vmax.f32 %v4340, %v4341
        %v4343 = vrot.slane %v4342, 2
        %v4344 = vmax.f32 %v4342, %v4343
        %v4345 = vrot.slane %v4344, 1
        %v4346 = vmax.f32 %v4344, %v4345
        %v4347 = vsel %vm4115, %v3930, -inf
        %v4348 = vrot.slane %v4347, 4
        %v4349 = vmax.f32 %v4347, %v4348
        %v4350 = vrot.slane %v4349, 2
        %v4351 = vmax.f32 %v4349, %v4350
        %v4352 = vrot.slane %v4351, 1
        %v4353 = vmax.f32 %v4351, %v4352
        %v4354 = vsel %vm4115, %v3929, -inf
        %v4355 = vrot.slane %v4354, 4
        %v4356 = vmax.f32 %v4354, %v4355
        %v4357 = vrot.slane %v4356, 2
        %v4358 = vmax.f32 %v4356, %v4357
        %v4359 = vrot.slane %v4358, 1
        %v4360 = vmax.f32 %v4358, %v4359
        %v4361 = vsel %vm4115, %v3931, -inf
        %v4362 = vrot.slane %v4361, 4
        %v4363 = vmax.f32 %v4361, %v4362
        %v4364 = vrot.slane %v4363, 2
        %v4365 = vmax.f32 %v4363, %v4364
        %v4366 = vrot.slane %v4365, 1
        %v4367 = vmax.f32 %v4365, %v4366
        %v4368 = vsel %vm4115, %v3939, -inf
        %v4369 = vrot.slane %v4368, 4
        %v4370 = vmax.f32 %v4368, %v4369
        %v4371 = vrot.slane %v4370, 2
        %v4372 = vmax.f32 %v4370, %v4371
        %v4373 = vrot.slane %v4372, 1
        %v4374 = vmax.f32 %v4372, %v4373
        %v4375 = vsel %vm4115, %v3947, -inf
        %v4376 = vrot.slane %v4375, 4
        %v4377 = vmax.f32 %v4375, %v4376
        %v4378 = vrot.slane %v4377, 2
        %v4379 = vmax.f32 %v4377, %v4378
        %v4380 = vrot.slane %v4379, 1
        %v4381 = vmax.f32 %v4379, %v4380
        %v4382 = vsel %vm4115, %v3946, -inf
        %v4383 = vrot.slane %v4382, 4
        %v4384 = vmax.f32 %v4382, %v4383
        %v4385 = vrot.slane %v4384, 2
        %v4386 = vmax.f32 %v4384, %v4385
        %v4387 = vrot.slane %v4386, 1
        %v4388 = vmax.f32 %v4386, %v4387
        %v4389 = vsel %vm4115, %v3948, -inf
        %v4390 = vrot.slane %v4389, 4
        %v4391 = vmax.f32 %v4389, %v4390
        %v4392 = vrot.slane %v4391, 2
        %v4393 = vmax.f32 %v4391, %v4392
        %v4394 = vrot.slane %v4393, 1
        %v4395 = vmax.f32 %v4393, %v4394
        %v4396 = vsel %vm4115, %v3956, -inf
        %v4397 = vrot.slane %v4396, 4
        %v4398 = vmax.f32 %v4396, %v4397
        %v4399 = vrot.slane %v4398, 2
        %v4400 = vmax.f32 %v4398, %v4399
        %v4401 = vrot.slane %v4400, 1
        %v4402 = vmax.f32 %v4400, %v4401
        %v4403 = vsel %vm4115, %v3964, -inf
        %v4404 = vrot.slane %v4403, 4
        %v4405 = vmax.f32 %v4403, %v4404
        %v4406 = vrot.slane %v4405, 2
        %v4407 = vmax.f32 %v4405, %v4406
        %v4408 = vrot.slane %v4407, 1
        %v4409 = vmax.f32 %v4407, %v4408
        %v4410 = vsel %vm4115, %v3963, -inf
        %v4411 = vrot.slane %v4410, 4
        %v4412 = vmax.f32 %v4410, %v4411
        %v4413 = vrot.slane %v4412, 2
        %v4414 = vmax.f32 %v4412, %v4413
        %v4415 = vrot.slane %v4414, 1
        %v4416 = vmax.f32 %v4414, %v4415
        %v4417 = vsel %vm4115, %v3965, -inf
        %v4418 = vrot.slane %v4417, 4
        %v4419 = vmax.f32 %v4417, %v4418
        %v4420 = vrot.slane %v4419, 2
        %v4421 = vmax.f32 %v4419, %v4420
        %v4422 = vrot.slane %v4421, 1
        %v4423 = vmax.f32 %v4421, %v4422
        %v4424 = vsel %vm4115, %v3973, -inf
        %v4425 = vrot.slane %v4424, 4
        %v4426 = vmax.f32 %v4424, %v4425
        %v4427 = vrot.slane %v4426, 2
        %v4428 = vmax.f32 %v4426, %v4427
        %v4429 = vrot.slane %v4428, 1
        %v4430 = vmax.f32 %v4428, %v4429
        %v4431 = vsel %vm4115, %v3981, -inf
        %v4432 = vrot.slane %v4431, 4
        %v4433 = vmax.f32 %v4431, %v4432
        %v4434 = vrot.slane %v4433, 2
        %v4435 = vmax.f32 %v4433, %v4434
        %v4436 = vrot.slane %v4435, 1
        %v4437 = vmax.f32 %v4435, %v4436
        %v4438 = vsel %vm4115, %v3980, -inf
        %v4439 = vrot.slane %v4438, 4
        %v4440 = vmax.f32 %v4438, %v4439
        %v4441 = vrot.slane %v4440, 2
        %v4442 = vmax.f32 %v4440, %v4441
        %v4443 = vrot.slane %v4442, 1
        %v4444 = vmax.f32 %v4442, %v4443
        %v4445 = vsel %vm4115, %v3982, -inf
        %v4446 = vrot.slane %v4445, 4
        %v4447 = vmax.f32 %v4445, %v4446
        %v4448 = vrot.slane %v4447, 2
        %v4449 = vmax.f32 %v4447, %v4448
        %v4450 = vrot.slane %v4449, 1
        %v4451 = vmax.f32 %v4449, %v4450
        %v4452 = vsel %vm4115, %v3990, -inf
        %v4453 = vrot.slane %v4452, 4
        %v4454 = vmax.f32 %v4452, %v4453
        %v4455 = vrot.slane %v4454, 2
        %v4456 = vmax.f32 %v4454, %v4455
        %v4457 = vrot.slane %v4456, 1
        %v4458 = vmax.f32 %v4456, %v4457
        %v4459 = vsel %vm4115, %v3998, -inf
        %v4460 = vrot.slane %v4459, 4
        %v4461 = vmax.f32 %v4459, %v4460
        %v4462 = vrot.slane %v4461, 2
        %v4463 = vmax.f32 %v4461, %v4462
        %v4464 = vrot.slane %v4463, 1
        %v4465 = vmax.f32 %v4463, %v4464
        %v4466 = vsel %vm4115, %v3997, -inf
        %v4467 = vrot.slane %v4466, 4
        %v4468 = vmax.f32 %v4466, %v4467
        %v4469 = vrot.slane %v4468, 2
        %v4470 = vmax.f32 %v4468, %v4469
        %v4471 = vrot.slane %v4470, 1
        %v4472 = vmax.f32 %v4470, %v4471
        %v4473 = vsel %vm4115, %v3999, -inf
        %v4474 = vrot.slane %v4473, 4
        %v4475 = vmax.f32 %v4473, %v4474
        %v4476 = vrot.slane %v4475, 2
        %v4477 = vmax.f32 %v4475, %v4476
        %v4478 = vrot.slane %v4477, 1
        %v4479 = vmax.f32 %v4477, %v4478
        %v4480 = vsel %vm4115, %v4007, -inf
        %v4481 = vrot.slane %v4480, 4
        %v4482 = vmax.f32 %v4480, %v4481
        %v4483 = vrot.slane %v4482, 2
        %v4484 = vmax.f32 %v4482, %v4483
        %v4485 = vrot.slane %v4484, 1
        %v4486 = vmax.f32 %v4484, %v4485
        %v4487 = vsel %vm4115, %v4015, -inf
        %v4488 = vrot.slane %v4487, 4
        %v4489 = vmax.f32 %v4487, %v4488
        %v4490 = vrot.slane %v4489, 2
        %v4491 = vmax.f32 %v4489, %v4490
        %v4492 = vrot.slane %v4491, 1
        %v4493 = vmax.f32 %v4491, %v4492
        %v4494 = vsel %vm4115, %v4014, -inf
        %v4495 = vrot.slane %v4494, 4
        %v4496 = vmax.f32 %v4494, %v4495
        %v4497 = vrot.slane %v4496, 2
        %v4498 = vmax.f32 %v4496, %v4497
        %v4499 = vrot.slane %v4498, 1
        %v4500 = vmax.f32 %v4498, %v4499
        %v4501 = vsel %vm4115, %v4016, -inf
        %v4502 = vrot.slane %v4501, 4
        %v4503 = vmax.f32 %v4501, %v4502
        %v4504 = vrot.slane %v4503, 2
        %v4505 = vmax.f32 %v4503, %v4504
        %v4506 = vrot.slane %v4505, 1
        %v4507 = vmax.f32 %v4505, %v4506
        %v4508 = vsel %vm4115, %v4024, -inf
        %v4509 = vrot.slane %v4508, 4
        %v4510 = vmax.f32 %v4508, %v4509
        %v4511 = vrot.slane %v4510, 2
        %v4512 = vmax.f32 %v4510, %v4511
        %v4513 = vrot.slane %v4512, 1
        %v4514 = vmax.f32 %v4512, %v4513
        %v4515 = vsel %vm4115, %v4032, -inf
        %v4516 = vrot.slane %v4515, 4
        %v4517 = vmax.f32 %v4515, %v4516
        %v4518 = vrot.slane %v4517, 2
        %v4519 = vmax.f32 %v4517, %v4518
        %v4520 = vrot.slane %v4519, 1
        %v4521 = vmax.f32 %v4519, %v4520
        %v4522 = vsel %vm4115, %v4031, -inf
        %v4523 = vrot.slane %v4522, 4
        %v4524 = vmax.f32 %v4522, %v4523
        %v4525 = vrot.slane %v4524, 2
        %v4526 = vmax.f32 %v4524, %v4525
        %v4527 = vrot.slane %v4526, 1
        %v4528 = vmax.f32 %v4526, %v4527
        %v4529 = vsel %vm4115, %v4033, -inf
        %v4530 = vrot.slane %v4529, 4
        %v4531 = vmax.f32 %v4529, %v4530
        %v4532 = vrot.slane %v4531, 2
        %v4533 = vmax.f32 %v4531, %v4532
        %v4534 = vrot.slane %v4533, 1
        %v4535 = vmax.f32 %v4533, %v4534
        %v4536 = vsel %vm4115, %v4041, -inf
        %v4537 = vrot.slane %v4536, 4
        %v4538 = vmax.f32 %v4536, %v4537
        %v4539 = vrot.slane %v4538, 2
        %v4540 = vmax.f32 %v4538, %v4539
        %v4541 = vrot.slane %v4540, 1
        %v4542 = vmax.f32 %v4540, %v4541
        %v4543 = vsel %vm4115, %v4049, -inf
        %v4544 = vrot.slane %v4543, 4
        %v4545 = vmax.f32 %v4543, %v4544
        %v4546 = vrot.slane %v4545, 2
        %v4547 = vmax.f32 %v4545, %v4546
        %v4548 = vrot.slane %v4547, 1
        %v4549 = vmax.f32 %v4547, %v4548
        %v4550 = vsel %vm4115, %v4048, -inf
        %v4551 = vrot.slane %v4550, 4
        %v4552 = vmax.f32 %v4550, %v4551
        %v4553 = vrot.slane %v4552, 2
        %v4554 = vmax.f32 %v4552, %v4553
        %v4555 = vrot.slane %v4554, 1
        %v4556 = vmax.f32 %v4554, %v4555
        %v4557 = vsel %vm4115, %v4050, -inf
        %v4558 = vrot.slane %v4557, 4
        %v4559 = vmax.f32 %v4557, %v4558
        %v4560 = vrot.slane %v4559, 2
        %v4561 = vmax.f32 %v4559, %v4560
        %v4562 = vrot.slane %v4561, 1
        %v4563 = vmax.f32 %v4561, %v4562
        %v4564 = vmax.f32 %v4122, %v4178
        %v4565 = vmax.f32 %v4129, %v4185
        %v4566 = vmax.f32 %v4136, %v4192
        %v4567 = vmax.f32 %v4143, %v4199
        %v4568 = vmax.f32 %v4150, %v4206
        %v4569 = vmax.f32 %v4157, %v4213
        %v4570 = vmax.f32 %v4164, %v4220
        %v4571 = vmax.f32 %v4171, %v4227
        %v4572 = vmax.f32 %v4234, %v4290
        %v4573 = vmax.f32 %v4241, %v4297
        %v4574 = vmax.f32 %v4248, %v4304
        %v4575 = vmax.f32 %v4255, %v4311
        %v4576 = vmax.f32 %v4262, %v4318
        %v4577 = vmax.f32 %v4269, %v4325
        %v4578 = vmax.f32 %v4276, %v4332
        %v4579 = vmax.f32 %v4283, %v4339
        %v4580 = vmax.f32 %v4346, %v4402
        %v4581 = vmax.f32 %v4353, %v4409
        %v4582 = vmax.f32 %v4360, %v4416
        %v4583 = vmax.f32 %v4367, %v4423
        %v4584 = vmax.f32 %v4374, %v4430
        %v4585 = vmax.f32 %v4381, %v4437
        %v4586 = vmax.f32 %v4388, %v4444
        %v4587 = vmax.f32 %v4395, %v4451
        %v4588 = vmax.f32 %v4458, %v4514
        %v4589 = vmax.f32 %v4465, %v4521
        %v4590 = vmax.f32 %v4472, %v4528
        %v4591 = vmax.f32 %v4479, %v4535
        %v4592 = vmax.f32 %v4486, %v4542
        %v4593 = vmax.f32 %v4493, %v4549
        %v4594 = vmax.f32 %v4500, %v4556
        %v4595 = vmax.f32 %v4507, %v4563
        %v4596 = vpack.c.bf16 %v4564, %v4564
        %v4597 = vpack.c.bf16 %v4565, %v4565
        %v4598 = vpack.c.bf16 %v4566, %v4566
        %v4599 = vpack.c.bf16 %v4567, %v4567
        %v4600 = vpack.c.bf16 %v4568, %v4568
        %v4601 = vpack.c.bf16 %v4569, %v4569
        %v4602 = vpack.c.bf16 %v4570, %v4570
        %v4603 = vpack.c.bf16 %v4571, %v4571
        %v4604 = vpack.c.bf16 %v4572, %v4572
        %v4605 = vpack.c.bf16 %v4573, %v4573
        %v4606 = vpack.c.bf16 %v4574, %v4574
        %v4607 = vpack.c.bf16 %v4575, %v4575
        %v4608 = vpack.c.bf16 %v4576, %v4576
        %v4609 = vpack.c.bf16 %v4577, %v4577
        %v4610 = vpack.c.bf16 %v4578, %v4578
        %v4611 = vpack.c.bf16 %v4579, %v4579
        %v4612 = vpack.c.bf16 %v4580, %v4580
        %v4613 = vpack.c.bf16 %v4581, %v4581
        %v4614 = vpack.c.bf16 %v4582, %v4582
        %v4615 = vpack.c.bf16 %v4583, %v4583
        %v4616 = vpack.c.bf16 %v4584, %v4584
        %v4617 = vpack.c.bf16 %v4585, %v4585
        %v4618 = vpack.c.bf16 %v4586, %v4586
        %v4619 = vpack.c.bf16 %v4587, %v4587
        %v4620 = vpack.c.bf16 %v4588, %v4588
        %v4621 = vpack.c.bf16 %v4589, %v4589
        %v4622 = vpack.c.bf16 %v4590, %v4590
        %v4623 = vpack.c.bf16 %v4591, %v4591
        %v4624 = vpack.c.bf16 %v4592, %v4592
        %v4625 = vpack.c.bf16 %v4593, %v4593
        %v4626 = vpack.c.bf16 %v4594, %v4594
        %v4627 = vpack.c.bf16 %v4595, %v4595
        %s4628 = smul.u32 %s2773, 32
        %v4661 = vunpack.c.l.b16 %v4596
        %v4662 = vunpack.c.l.b16 %v4597
        %v4663 = vunpack.c.l.b16 %v4598
        %v4664 = vunpack.c.l.b16 %v4599
        %v4665 = vunpack.c.l.b16 %v4600
        %v4666 = vunpack.c.l.b16 %v4601
        %v4667 = vunpack.c.l.b16 %v4602
        %v4668 = vunpack.c.l.b16 %v4603
        %v4669 = vunpack.c.l.b16 %v4604
        %v4670 = vunpack.c.l.b16 %v4605
        %v4671 = vunpack.c.l.b16 %v4606
        %v4672 = vunpack.c.l.b16 %v4607
        %v4673 = vunpack.c.l.b16 %v4608
        %v4674 = vunpack.c.l.b16 %v4609
        %v4675 = vunpack.c.l.b16 %v4610
        %v4676 = vunpack.c.l.b16 %v4611
        %v4677 = vunpack.c.l.b16 %v4612
        %v4678 = vunpack.c.l.b16 %v4613
        %v4679 = vunpack.c.l.b16 %v4614
        %v4680 = vunpack.c.l.b16 %v4615
        %v4681 = vunpack.c.l.b16 %v4616
        %v4682 = vunpack.c.l.b16 %v4617
        %v4683 = vunpack.c.l.b16 %v4618
        %v4684 = vunpack.c.l.b16 %v4619
        %v4685 = vunpack.c.l.b16 %v4620
        %v4686 = vunpack.c.l.b16 %v4621
        %v4687 = vunpack.c.l.b16 %v4622
        %v4688 = vunpack.c.l.b16 %v4623
        %v4689 = vunpack.c.l.b16 %v4624
        %v4690 = vunpack.c.l.b16 %v4625
        %v4691 = vunpack.c.l.b16 %v4626
        %v4692 = vunpack.c.l.b16 %v4627
        %v4693 = vpack.c.b16 %v4661, %v4661
        %v4694 = vpack.c.b16 %v4662, %v4662
        %v4695 = vpack.c.b16 %v4663, %v4663
        %v4696 = vpack.c.b16 %v4664, %v4664
        %v4697 = vpack.c.b16 %v4665, %v4665
        %v4698 = vpack.c.b16 %v4666, %v4666
        %v4699 = vpack.c.b16 %v4667, %v4667
        %v4700 = vpack.c.b16 %v4668, %v4668
        %v4701 = vpack.c.b16 %v4669, %v4669
        %v4702 = vpack.c.b16 %v4670, %v4670
        %v4703 = vpack.c.b16 %v4671, %v4671
        %v4704 = vpack.c.b16 %v4672, %v4672
        %v4705 = vpack.c.b16 %v4673, %v4673
        %v4706 = vpack.c.b16 %v4674, %v4674
        %v4707 = vpack.c.b16 %v4675, %v4675
        %v4708 = vpack.c.b16 %v4676, %v4676
        %v4709 = vpack.c.b16 %v4677, %v4677
        %v4710 = vpack.c.b16 %v4678, %v4678
        %v4711 = vpack.c.b16 %v4679, %v4679
        %v4712 = vpack.c.b16 %v4680, %v4680
        %v4713 = vpack.c.b16 %v4681, %v4681
        %v4714 = vpack.c.b16 %v4682, %v4682
        %v4715 = vpack.c.b16 %v4683, %v4683
        %v4716 = vpack.c.b16 %v4684, %v4684
        %v4717 = vpack.c.b16 %v4685, %v4685
        %v4718 = vpack.c.b16 %v4686, %v4686
        %v4719 = vpack.c.b16 %v4687, %v4687
        %v4720 = vpack.c.b16 %v4688, %v4688
        %v4721 = vpack.c.b16 %v4689, %v4689
        %v4722 = vpack.c.b16 %v4690, %v4690
        %v4723 = vpack.c.b16 %v4691, %v4691
        %v4724 = vpack.c.b16 %v4692, %v4692
        %v4725 = vunpack.c.l.b16 %v4693
        %v4726 = vunpack.c.l.b16 %v4694
        %v4727 = vunpack.c.l.b16 %v4695
        %v4728 = vunpack.c.l.b16 %v4696
        %v4729 = vunpack.c.l.b16 %v4697
        %v4730 = vunpack.c.l.b16 %v4698
        %v4731 = vunpack.c.l.b16 %v4699
        %v4732 = vunpack.c.l.b16 %v4700
        %v4733 = vunpack.c.l.b16 %v4701
        %v4734 = vunpack.c.l.b16 %v4702
        %v4735 = vunpack.c.l.b16 %v4703
        %v4736 = vunpack.c.l.b16 %v4704
        %v4737 = vunpack.c.l.b16 %v4705
        %v4738 = vunpack.c.l.b16 %v4706
        %v4739 = vunpack.c.l.b16 %v4707
        %v4740 = vunpack.c.l.b16 %v4708
        %v4741 = vunpack.c.l.b16 %v4709
        %v4742 = vunpack.c.l.b16 %v4710
        %v4743 = vunpack.c.l.b16 %v4711
        %v4744 = vunpack.c.l.b16 %v4712
        %v4745 = vunpack.c.l.b16 %v4713
        %v4746 = vunpack.c.l.b16 %v4714
        %v4747 = vunpack.c.l.b16 %v4715
        %v4748 = vunpack.c.l.b16 %v4716
        %v4749 = vunpack.c.l.b16 %v4717
        %v4750 = vunpack.c.l.b16 %v4718
        %v4751 = vunpack.c.l.b16 %v4719
        %v4752 = vunpack.c.l.b16 %v4720
        %v4753 = vunpack.c.l.b16 %v4721
        %v4754 = vunpack.c.l.b16 %v4722
        %v4755 = vunpack.c.l.b16 %v4723
        %v4756 = vunpack.c.l.b16 %v4724
        %vm4757 = vcmask 1041409
        %v4758 = vsel %vm4757, %v4726, %v4725
        %vm4759 = vcmask 1042434
        %v4760 = vsel %vm4759, %v4727, %v4758
        %vm4761 = vcmask 1043459
        %v4762 = vsel %vm4761, %v4728, %v4760
        %vm4763 = vcmask 1044484
        %v4764 = vsel %vm4763, %v4729, %v4762
        %vm4765 = vcmask 1045509
        %v4766 = vsel %vm4765, %v4730, %v4764
        %vm4767 = vcmask 1046534
        %v4768 = vsel %vm4767, %v4731, %v4766
        %vm4769 = vcmask 1047559
        %v4770 = vsel %vm4769, %v4732, %v4768
        %v4771 = vsel %vm4757, %v4734, %v4733
        %v4772 = vsel %vm4759, %v4735, %v4771
        %v4773 = vsel %vm4761, %v4736, %v4772
        %v4774 = vsel %vm4763, %v4737, %v4773
        %v4775 = vsel %vm4765, %v4738, %v4774
        %v4776 = vsel %vm4767, %v4739, %v4775
        %v4777 = vsel %vm4769, %v4740, %v4776
        %v4778 = vsel %vm4757, %v4742, %v4741
        %v4779 = vsel %vm4759, %v4743, %v4778
        %v4780 = vsel %vm4761, %v4744, %v4779
        %v4781 = vsel %vm4763, %v4745, %v4780
        %v4782 = vsel %vm4765, %v4746, %v4781
        %v4783 = vsel %vm4767, %v4747, %v4782
        %v4784 = vsel %vm4769, %v4748, %v4783
        %v4785 = vsel %vm4757, %v4750, %v4749
        %v4786 = vsel %vm4759, %v4751, %v4785
        %v4787 = vsel %vm4761, %v4752, %v4786
        %v4788 = vsel %vm4763, %v4753, %v4787
        %v4789 = vsel %vm4765, %v4754, %v4788
        %v4790 = vsel %vm4767, %v4755, %v4789
        %v4791 = vsel %vm4769, %v4756, %v4790
        %v4792 = vpack.c.b16 %v4770, %v4770
        %v4793 = vpack.c.b16 %v4777, %v4777
        %v4794 = vpack.c.b16 %v4784, %v4784
        %v4795 = vpack.c.b16 %v4791, %v4791
        %s4800 = sshra.s32 %s4628, 3
        %s4801 = sand.u32 %s4628, 7
        %s4802 = smul.addr %s4800, 4
        %s4803 = scalar_lea.vmem %s224, %s4802
        %4804 = vst [vmem:[%s4803] sm:$0xf] %v4792
        %4805 = vst [vmem:[%s4803 + $0x4] sm:$0xf] %v4793
        %4806 = vst [vmem:[%s4803 + $0x8] sm:$0xf] %v4794
        %4807 = vst [vmem:[%s4803 + $0xc] sm:$0xf] %v4795
      $region52: #{cnn_forward.1} parent=39 // loop_footer
        %s2777 = sadd.s32 1, %s2773
      $region53: #{cnn_forward.1} parent=39 // loop_footer_branch
        %2772 = sbr.rel target = $region49
      $region54: #{cnn_forward.1} parent=39 // loop_exit
        _
      %p4808 = scmp.lt.s32.totalorder %s16, 1
      %s4809 = scalar_select %p4808, %s16, 1
      %s4810 = smul.addr %s4809, 8
      %s4811 = smul.addr %s4810, 4
      %s4812 = scalar_lea.vmem %s5, %s4811
      // Predicated region
      $region55: #{cnn_forward.1} parent=39 // pred_check
        %p4813 = pneg %p144
      $region56: #{cnn_forward.1} parent=39 // pred_check_branch
        %4815 = sbr.rel (%p4813) target = $region58
      $region57: #{cnn_forward.1} parent=39 // pred_region
        _
      $region58: #{cnn_forward.1} parent=39 // pred_fallthru
        _
    $region40: #{cnn_forward.1} parent=5 // pred_fallthru
      _
    %p4816 = scmp.le.s32.totalorder 2, %s11
    // Predicated region
    $region59: #{cnn_forward.1} parent=5 // pred_check
      %p4817 = pneg %p4816
    $region60: #{cnn_forward.1} parent=5 // pred_check_branch
      %4819 = sbr.rel (%p4817) target = $region62
    $region61: #{cnn_forward.1} parent=5 // pred_region
      %s4820 = ssub.s32 %s11, 2
      // Predicated region
      $region63: #{cnn_forward.1} parent=61 // pred_check
        %p4821 = pneg %p150
      $region64: #{cnn_forward.1} parent=61 // pred_check_branch
        %4823 = sbr.rel (%p4821) target = $region66
      $region65: #{cnn_forward.1} parent=61 // pred_region
        %p4824 = scmp.lt.s32.totalorder %s17, 1
        %s4825 = scalar_select %p4824, %s17, 1
        %s4826 = smul.addr %s4825, 8
        %s4827 = smul.addr %s4826, 4
        %s4828 = scalar_lea.vmem %s5, %s4827
      $region66: #{cnn_forward.1} parent=61 // pred_fallthru
        _
    $region62: #{cnn_forward.1} parent=5 // pred_fallthru
      _
  $region6: #{cnn_forward.1} parent=0 // loop_footer
    %s15 = sadd.s32 1, %s11
  $region7: #{cnn_forward.1} parent=0 // loop_footer_branch
    %10 = sbr.rel target = $region3
  $region8: #{cnn_forward.1} parent=0 // loop_exit
    _

</llo_original>
